<compile_context>
chip_gen: v7x
topology: tpu7x:2x2x1
jax: 0.10.0
libtpu: 0.0.40
codegen_flags: <defaults>
</compile_context>

<pallas_src>
import math
import functools

import jax
import jax.numpy as jnp
from jax.experimental import pallas as pl
from jax.experimental.pallas import tpu as pltpu


# ------------------------------ tile helpers ------------------------------- #

def _tile_rows(dim, target=256):
    """Sublane-dim tile: full dim if small, else a multiple of 8 dividing dim."""
    if dim <= target:
        return dim
    for t in range(target, 7, -8):
        if dim % t == 0:
            return t
    return dim


def _tile_lanes(dim, target=512):
    """Lane-dim tile: full dim if small, else a multiple of 128 dividing dim."""
    if dim <= target:
        return dim
    for t in range(target, 127, -128):
        if dim % t == 0:
            return t
    return dim


def _torch_norm(x, alpha, bias, eps=1e-6):
    """Torch-tutorial Norm: alpha*(x-mean)/(std+eps)+bias, unbiased std (ddof=1). f32 math."""
    d = x.shape[-1]
    mean = jnp.mean(x, axis=-1, keepdims=True)
    c = x - mean
    var = jnp.sum(c * c, axis=-1, keepdims=True) / (d - 1)
    return alpha * c / (jnp.sqrt(var) + eps) + bias


# ------------------------------ Pallas kernels ----------------------------- #

def norm_qkv_kernel(x_ref, a_ref, nb_ref, w_ref, b_ref, o_ref):
    """Fused pre-norm + QKV projection:  out = Norm(x) @ W_qkv[:, tile] + b_qkv[tile]."""
    x = x_ref[...].astype(jnp.float32)                      # (tm, D) resident across n-tiles
    xn = _torch_norm(x, a_ref[...], nb_ref[...])            # cheap VPU work, hides under MXU
    y = jnp.dot(xn.astype(jnp.bfloat16), w_ref[...].astype(jnp.bfloat16),
                preferred_element_type=jnp.float32) + b_ref[...]
    o_ref[...] = y.astype(o_ref.dtype)


def attn_core_kernel(qkv_ref, mask_ref, o_ref, *, heads, d_model):
    """All heads of one batch element: softmax(q k^T / sqrt(dk) + mask) @ v, head-concat."""
    dk = d_model // heads
    qkv = qkv_ref[0].astype(jnp.float32)                    # (S, 3*D)
    q_all = qkv[:, :d_model] * jnp.float32(1.0 / math.sqrt(dk))   # scale folded into q once
    k_all = qkv[:, d_model:2 * d_model]
    v_all = qkv[:, 2 * d_model:]
    m = mask_ref[0]                                         # (1, S) key-padding mask

    outs = []
    for h in range(heads):                                  # static unroll over heads
        qh = q_all[:, h * dk:(h + 1) * dk]
        kh = k_all[:, h * dk:(h + 1) * dk]
        vh = v_all[:, h * dk:(h + 1) * dk]
        # q @ k^T via dot_general (contract last dims) -> no explicit transpose
        s = jax.lax.dot_general(
            qh.astype(jnp.bfloat16), kh.astype(jnp.bfloat16),
            (((1,), (1,)), ((), ())), preferred_element_type=jnp.float32)      # (S, S)
        s = jnp.where(m == 0, jnp.float32(-1e9), s)
        s = s - jnp.max(s, axis=-1, keepdims=True)
        p = jnp.exp(s)
        p = p * pl.reciprocal(jnp.sum(p, axis=-1, keepdims=True), approx=True)
        outs.append(jnp.dot(p.astype(jnp.bfloat16), vh.astype(jnp.bfloat16),
                            preferred_element_type=jnp.float32))               # (S, dk)
    o_ref[0] = jnp.concatenate(outs, axis=-1).astype(o_ref.dtype)              # lane-dense store


def proj_residual_kernel(h_ref, w_ref, b_ref, res_ref, o_ref):
    """Attention output projection with the residual add fused into the epilogue."""
    y = jnp.dot(h_ref[...].astype(jnp.bfloat16), w_ref[...].astype(jnp.bfloat16),
                preferred_element_type=jnp.float32) + b_ref[...]
    o_ref[...] = (y + res_ref[...].astype(jnp.float32)).astype(o_ref.dtype)


def ffn_kernel(x_ref, a_ref, nb_ref, w1_ref, b1_ref, w2_ref, b2_ref, o_ref,
               xn_ref, acc_ref):
    """Fused pre-norm + FFN (W1+ReLU, W2) + residual.

    Grid axis 1 tiles d_ff ("arbitrary"): the (tm, tf) hidden activation lives only in
    registers/VMEM, the (tm, D) partial product accumulates in a VMEM f32 scratch.
    """
    f = pl.program_id(1)

    @pl.when(f == 0)
    def _():
        x = x_ref[...].astype(jnp.float32)
        xn_ref[...] = _torch_norm(x, a_ref[...], nb_ref[...])
        acc_ref[...] = jnp.zeros_like(acc_ref)

    xn = xn_ref[...]
    h = jnp.dot(xn.astype(jnp.bfloat16), w1_ref[...].astype(jnp.bfloat16),
                preferred_element_type=jnp.float32) + b1_ref[...]
    h = jnp.maximum(h, 0.0)
    acc_ref[...] += jnp.dot(h.astype(jnp.bfloat16), w2_ref[...].astype(jnp.bfloat16),
                            preferred_element_type=jnp.float32)

    @pl.when(f == pl.num_programs(1) - 1)
    def _():
        out = x_ref[...].astype(jnp.float32) + acc_ref[...] + b2_ref[...]
        o_ref[...] = out.astype(o_ref.dtype)


def norm_kernel(x_ref, a_ref, nb_ref, o_ref):
    """Standalone Norm (final encoder norm)."""
    x = x_ref[...].astype(jnp.float32)
    o_ref[...] = _torch_norm(x, a_ref[...], nb_ref[...]).astype(o_ref.dtype)


# ----------------------------- kernel wrappers ------------------------------ #

def norm_qkv(x2d, alpha, nbias, w_qkv, b_qkv):
    M, D = x2d.shape
    N = w_qkv.shape[1]
    tm = _tile_rows(M, 256)
    tn = _tile_lanes(N, 256)
    return pl.pallas_call(
        norm_qkv_kernel,
        out_shape=jax.ShapeDtypeStruct((M, N), x2d.dtype),
        grid=(M // tm, N // tn),
        in_specs=[
            pl.BlockSpec((tm, D), lambda i, j: (i, 0)),
            pl.BlockSpec((1, D), lambda i, j: (0, 0)),
            pl.BlockSpec((1, D), lambda i, j: (0, 0)),
            pl.BlockSpec((D, tn), lambda i, j: (0, j)),
            pl.BlockSpec((1, tn), lambda i, j: (0, j)),
        ],
        out_specs=pl.BlockSpec((tm, tn), lambda i, j: (i, j)),
        compiler_params=pltpu.CompilerParams(
            dimension_semantics=("parallel", "parallel")),
    )(x2d, alpha, nbias, w_qkv, b_qkv)


def attention_core(qkv_bsd, mask, heads, d_model):
    """qkv_bsd: (B, S, 3*d_model), mask: (B, 1, S) int32 key-padding mask."""
    B, S, N3 = qkv_bsd.shape
    kern = functools.partial(attn_core_kernel, heads=heads, d_model=d_model)
    return pl.pallas_call(
        kern,
        out_shape=jax.ShapeDtypeStruct((B, S, d_model), qkv_bsd.dtype),
        grid=(B,),
        in_specs=[
            pl.BlockSpec((1, S, N3), lambda b: (b, 0, 0)),
            pl.BlockSpec((1, 1, S), lambda b: (b, 0, 0)),
        ],
        out_specs=pl.BlockSpec((1, S, d_model), lambda b: (b, 0, 0)),
        compiler_params=pltpu.CompilerParams(dimension_semantics=("parallel",)),
    )(qkv_bsd, mask)


def proj_residual(h2d, w_o, b_o, res2d):
    M, D = h2d.shape
    N = w_o.shape[1]
    tm = _tile_rows(M, 256)
    tn = _tile_lanes(N, 256)
    return pl.pallas_call(
        proj_residual_kernel,
        out_shape=jax.ShapeDtypeStruct((M, N), h2d.dtype),
        grid=(M // tm, N // tn),
        in_specs=[
            pl.BlockSpec((tm, D), lambda i, j: (i, 0)),
            pl.BlockSpec((D, tn), lambda i, j: (0, j)),
            pl.BlockSpec((1, tn), lambda i, j: (0, j)),
            pl.BlockSpec((tm, tn), lambda i, j: (i, j)),
        ],
        out_specs=pl.BlockSpec((tm, tn), lambda i, j: (i, j)),
        compiler_params=pltpu.CompilerParams(
            dimension_semantics=("parallel", "parallel")),
    )(h2d, w_o, b_o, res2d)


def ffn_residual(x2d, alpha, nbias, w1, b1, w2, b2):
    M, D = x2d.shape
    F = w1.shape[1]
    tm = _tile_rows(M, 256)
    tf = _tile_lanes(F, 512)
    return pl.pallas_call(
        ffn_kernel,
        out_shape=jax.ShapeDtypeStruct((M, D), x2d.dtype),
        grid=(M // tm, F // tf),
        in_specs=[
            pl.BlockSpec((tm, D), lambda i, f: (i, 0)),
            pl.BlockSpec((1, D), lambda i, f: (0, 0)),
            pl.BlockSpec((1, D), lambda i, f: (0, 0)),
            pl.BlockSpec((D, tf), lambda i, f: (0, f)),
            pl.BlockSpec((1, tf), lambda i, f: (0, f)),
            pl.BlockSpec((tf, D), lambda i, f: (f, 0)),
            pl.BlockSpec((1, D), lambda i, f: (0, 0)),
        ],
        out_specs=pl.BlockSpec((tm, D), lambda i, f: (i, 0)),
        scratch_shapes=[pltpu.VMEM((tm, D), jnp.float32),   # normalized x
                        pltpu.VMEM((tm, D), jnp.float32)],  # f32 accumulator
        compiler_params=pltpu.CompilerParams(
            dimension_semantics=("parallel", "arbitrary")),
    )(x2d, alpha, nbias, w1, b1, w2, b2)


def layer_norm(x2d, alpha, nbias):
    M, D = x2d.shape
    tm = _tile_rows(M, 256)
    return pl.pallas_call(
        norm_kernel,
        out_shape=jax.ShapeDtypeStruct((M, D), x2d.dtype),
        grid=(M // tm,),
        in_specs=[
            pl.BlockSpec((tm, D), lambda i: (i, 0)),
            pl.BlockSpec((1, D), lambda i: (0, 0)),
            pl.BlockSpec((1, D), lambda i: (0, 0)),
        ],
        out_specs=pl.BlockSpec((tm, D), lambda i: (i, 0)),
        compiler_params=pltpu.CompilerParams(dimension_semantics=("parallel",)),
    )(x2d, alpha, nbias)


# ------------------------------ encoder forward ----------------------------- #

def encoder_layer(p, x, mask, heads, d_model):
    B, S, D = x.shape
    M = B * S
    x2d = x.reshape(M, D)
    # norm_1 fused with the QKV projection (one matmul over the fused (D, 3D) weight)
    qkv = norm_qkv(x2d, p["n1_a"], p["n1_b"], p["w_qkv"], p["b_qkv"])            # (M, 3D)
    attn = attention_core(qkv.reshape(B, S, 3 * D), mask, heads, d_model)        # (B, S, D)
    # output projection + residual add (dropout_1 = identity)
    x2d = proj_residual(attn.reshape(M, D), p["w_o"], p["b_o"], x2d)
    # norm_2 + FFN + residual in one kernel (dropout_2 / FFN dropout = identity)
    x2d = ffn_residual(x2d, p["n2_a"], p["n2_b"], p["w1"], p["b1"], p["w2"], p["b2"])
    return x2d.reshape(B, S, D)


def encoder_forward(params, src, mask, heads, d_model):
    B, S = src.shape
    # Embedding gather + positional encoding (plain-JAX glue; x = embed(src)*sqrt(d)+pe).
    # TODO(synk): the data-dependent embedding gather is left to XLA (no clean tiled BlockSpec).
    x = params["embed"][src] * math.sqrt(d_model) + params["pe"][:S][None, :, :]
    mask_i = mask.astype(jnp.int32)
    for lp in params["layers"]:
        x = encoder_layer(lp, x, mask_i, heads, d_model)
    out2d = layer_norm(x.reshape(B * S, d_model), params["nf_a"], params["nf_b"])
    return out2d.reshape(B, S, d_model)


# ------------------------------ parameter init ------------------------------ #

def _linear_wt(key, d_in, d_out):
    """nn.Linear-style init, stored pre-transposed as (in, out); bias as (1, out)."""
    kw, kb = jax.random.split(key)
    bound = 1.0 / math.sqrt(d_in)
    w_t = jax.random.uniform(kw, (d_in, d_out), jnp.float32, -bound, bound)
    b = jax.random.uniform(kb, (1, d_out), jnp.float32, -bound, bound)
    return w_t, b


def init_layer_params(key, d_model, d_ff):
    kq, kk, kv, ko, k1, k2 = jax.random.split(key, 6)
    wq, bq = _linear_wt(kq, d_model, d_model)
    wk, bk = _linear_wt(kk, d_model, d_model)
    wv, bv = _linear_wt(kv, d_model, d_model)
    wo, bo = _linear_wt(ko, d_model, d_model)
    w1, b1 = _linear_wt(k1, d_model, d_ff)
    w2, b2 = _linear_wt(k2, d_ff, d_model)
    ones = jnp.ones((1, d_model), jnp.float32)
    zeros = jnp.zeros((1, d_model), jnp.float32)
    return {
        "n1_a": ones, "n1_b": zeros,
        "n2_a": ones, "n2_b": zeros,
        "w_qkv": jnp.concatenate([wq, wk, wv], axis=1),   # (D, 3D), q|k|v order
        "b_qkv": jnp.concatenate([bq, bk, bv], axis=1),   # (1, 3D)
        "w_o": wo, "b_o": bo,
        "w1": w1, "b1": b1, "w2": w2, "b2": b2,
    }


def make_pe(max_len, d_model):
    """Reproduce the tutorial PE: index k -> sin/cos(pos / 10000**(2k/d_model))."""
    pos = jnp.arange(max_len, dtype=jnp.float32)[:, None]
    idx = jnp.arange(d_model, dtype=jnp.float32)[None, :]
    angle = pos / jnp.power(10000.0, 2.0 * idx / d_model)
    even = (jnp.arange(d_model) % 2 == 0)[None, :]
    return jnp.where(even, jnp.sin(angle), jnp.cos(angle))


def init_encoder_params(key, vocab, d_model, n_layers, d_ff, max_len):
    k_emb, k_layers = jax.random.split(key)
    layer_keys = jax.random.split(k_layers, n_layers)
    return {
        "embed": jax.random.normal(k_emb, (vocab, d_model), jnp.float32),
        "pe": make_pe(max_len, d_model),
        "layers": [init_layer_params(k, d_model, d_ff) for k in layer_keys],
        "nf_a": jnp.ones((1, d_model), jnp.float32),
        "nf_b": jnp.zeros((1, d_model), jnp.float32),
    }


# ---------------------------------- main ------------------------------------ #

if __name__ == "__main__":
    B, S = 2, 8
    d_model, heads, n_layers, d_ff = 32, 4, 2, 2048
    vocab, max_len = 64, 64

    root = jax.random.PRNGKey(0)
    k_params, k_src = jax.random.split(root)

    params = init_encoder_params(k_params, vocab, d_model, n_layers, d_ff, max_len)
    src = jax.random.randint(k_src, (B, S), 0, vocab)
    # key-padding mask (B, 1, S): batch 1 has its last two tokens padded
    mask = jnp.ones((B, 1, S), jnp.int32).at[1, 0, 6:].set(0)

    fwd = jax.jit(functools.partial(encoder_forward, heads=heads, d_model=d_model))
    out = jax.block_until_ready(fwd(params, src, mask))

    assert out.shape == (B, S, d_model)
    assert bool(jnp.all(jnp.isfinite(out)))
    print("KERNEL_OK")
</pallas_src>

<mosaic_0001>
module attributes {stable_mosaic.version = 11 : i64} {
  func.func @attn_core_kernel(%arg0: i32, %arg1: memref<1x8x96xf32, #tpu.memory_space<vmem>>, %arg2: memref<1x1x8xi32, #tpu.memory_space<vmem>>, %arg3: memref<1x8x32xf32, #tpu.memory_space<vmem>>) attributes {dimension_semantics = [#tpu.dimension_semantics<parallel>], iteration_bounds = array<i64: 2>, scalar_prefetch = 0 : i64, scratch_operands = 0 : i64, tpu.core_type = #tpu.core_type<tc>, window_params = [{transform_indices = @transform_0, window_bounds = array<i64: 1, 8, 96>}, {transform_indices = @transform_1, window_bounds = array<i64: 1, 1, 8>}, {transform_indices = @transform_2, window_bounds = array<i64: 1, 8, 32>}]} {
    %c0 = arith.constant 0 : index
    %c0_0 = arith.constant 0 : index
    %c0_1 = arith.constant 0 : index
    %0 = vector.load %arg1[%c0, %c0_0, %c0_1] : memref<1x8x96xf32, #tpu.memory_space<vmem>>, vector<1x8x96xf32>
    %1 = vector.shape_cast %0 : vector<1x8x96xf32> to vector<8x96xf32>
    %2 = vector.extract_strided_slice %1 {offsets = [0, 0], sizes = [8, 32], strides = [1, 1]} : vector<8x96xf32> to vector<8x32xf32>
    %cst = arith.constant 0.353553385 : f32
    %3 = vector.broadcast %cst : f32 to vector<8x32xf32>
    %4 = arith.mulf %2, %3 : vector<8x32xf32>
    %5 = vector.extract_strided_slice %1 {offsets = [0, 32], sizes = [8, 32], strides = [1, 1]} : vector<8x96xf32> to vector<8x32xf32>
    %6 = vector.extract_strided_slice %1 {offsets = [0, 64], sizes = [8, 32], strides = [1, 1]} : vector<8x96xf32> to vector<8x32xf32>
    %c0_2 = arith.constant 0 : index
    %c0_3 = arith.constant 0 : index
    %c0_4 = arith.constant 0 : index
    %7 = vector.load %arg2[%c0_2, %c0_3, %c0_4] : memref<1x1x8xi32, #tpu.memory_space<vmem>>, vector<1x1x8xi32>
    %8 = vector.shape_cast %7 : vector<1x1x8xi32> to vector<1x8xi32>
    %9 = vector.extract_strided_slice %4 {offsets = [0, 0], sizes = [8, 8], strides = [1, 1]} : vector<8x32xf32> to vector<8x8xf32>
    %10 = vector.extract_strided_slice %5 {offsets = [0, 0], sizes = [8, 8], strides = [1, 1]} : vector<8x32xf32> to vector<8x8xf32>
    %11 = vector.extract_strided_slice %6 {offsets = [0, 0], sizes = [8, 8], strides = [1, 1]} : vector<8x32xf32> to vector<8x8xf32>
    %12 = arith.truncf %9 : vector<8x8xf32> to vector<8x8xbf16>
    %13 = arith.truncf %10 : vector<8x8xf32> to vector<8x8xbf16>
    %cst_5 = arith.constant dense<0.000000e+00> : vector<8x8xf32>
    %14 = tpu.matmul %12, %13, %cst_5 {dimension_numbers = #tpu.dot_dimension_numbers<[1], [1], [0], [0], [0, 0, 1, 0], [], []>} : vector<8x8xbf16>, vector<8x8xbf16>, vector<8x8xf32> -> vector<8x8xf32>
    %c0_i32 = arith.constant 0 : i32
    %15 = vector.broadcast %c0_i32 : i32 to vector<1x8xi32>
    %16 = arith.cmpi eq, %8, %15 : vector<1x8xi32>
    %cst_6 = arith.constant -1.000000e+09 : f32
    %17 = vector.shape_cast %16 : vector<1x8xi1> to vector<1x8xi1>
    %18 = vector.broadcast %17 : vector<1x8xi1> to vector<8x8xi1>
    %19 = vector.broadcast %cst_6 : f32 to vector<8x8xf32>
    %20 = arith.select %18, %19, %14 : vector<8x8xi1>, vector<8x8xf32>
    %cst_7 = arith.constant dense<0xFF800000> : vector<8xf32>
    %21 = vector.multi_reduction <maximumf>, %20, %cst_7 [1] : vector<8x8xf32> to vector<8xf32>
    %22 = vector.shape_cast %21 : vector<8xf32> to vector<8x1xf32>
    %23 = vector.broadcast %22 : vector<8x1xf32> to vector<8x8xf32>
    %24 = arith.subf %20, %23 : vector<8x8xf32>
    %25 = math.exp %24 : vector<8x8xf32>
    %cst_8 = arith.constant dense<0.000000e+00> : vector<8xf32>
    %26 = vector.multi_reduction <add>, %25, %cst_8 [1] : vector<8x8xf32> to vector<8xf32>
    %27 = vector.shape_cast %26 : vector<8xf32> to vector<8x1xf32>
    %28 = tpu.reciprocal %27 {approx = true} : vector<8x1xf32> -> vector<8x1xf32>
    %29 = vector.broadcast %28 : vector<8x1xf32> to vector<8x8xf32>
    %30 = arith.mulf %25, %29 : vector<8x8xf32>
    %31 = arith.truncf %30 : vector<8x8xf32> to vector<8x8xbf16>
    %32 = arith.truncf %11 : vector<8x8xf32> to vector<8x8xbf16>
    %cst_9 = arith.constant dense<0.000000e+00> : vector<8x8xf32>
    %33 = tpu.matmul %31, %32, %cst_9 {dimension_numbers = #tpu.dot_dimension_numbers<[1], [0], [0], [1], [0, 0, 1, 1], [], []>} : vector<8x8xbf16>, vector<8x8xbf16>, vector<8x8xf32> -> vector<8x8xf32>
    %34 = vector.extract_strided_slice %4 {offsets = [0, 8], sizes = [8, 8], strides = [1, 1]} : vector<8x32xf32> to vector<8x8xf32>
    %35 = vector.extract_strided_slice %5 {offsets = [0, 8], sizes = [8, 8], strides = [1, 1]} : vector<8x32xf32> to vector<8x8xf32>
    %36 = vector.extract_strided_slice %6 {offsets = [0, 8], sizes = [8, 8], strides = [1, 1]} : vector<8x32xf32> to vector<8x8xf32>
    %37 = arith.truncf %34 : vector<8x8xf32> to vector<8x8xbf16>
    %38 = arith.truncf %35 : vector<8x8xf32> to vector<8x8xbf16>
    %cst_10 = arith.constant dense<0.000000e+00> : vector<8x8xf32>
    %39 = tpu.matmul %37, %38, %cst_10 {dimension_numbers = #tpu.dot_dimension_numbers<[1], [1], [0], [0], [0, 0, 1, 0], [], []>} : vector<8x8xbf16>, vector<8x8xbf16>, vector<8x8xf32> -> vector<8x8xf32>
    %c0_i32_11 = arith.constant 0 : i32
    %40 = vector.broadcast %c0_i32_11 : i32 to vector<1x8xi32>
    %41 = arith.cmpi eq, %8, %40 : vector<1x8xi32>
    %cst_12 = arith.constant -1.000000e+09 : f32
    %42 = vector.shape_cast %41 : vector<1x8xi1> to vector<1x8xi1>
    %43 = vector.broadcast %42 : vector<1x8xi1> to vector<8x8xi1>
    %44 = vector.broadcast %cst_12 : f32 to vector<8x8xf32>
    %45 = arith.select %43, %44, %39 : vector<8x8xi1>, vector<8x8xf32>
    %cst_13 = arith.constant dense<0xFF800000> : vector<8xf32>
    %46 = vector.multi_reduction <maximumf>, %45, %cst_13 [1] : vector<8x8xf32> to vector<8xf32>
    %47 = vector.shape_cast %46 : vector<8xf32> to vector<8x1xf32>
    %48 = vector.broadcast %47 : vector<8x1xf32> to vector<8x8xf32>
    %49 = arith.subf %45, %48 : vector<8x8xf32>
    %50 = math.exp %49 : vector<8x8xf32>
    %cst_14 = arith.constant dense<0.000000e+00> : vector<8xf32>
    %51 = vector.multi_reduction <add>, %50, %cst_14 [1] : vector<8x8xf32> to vector<8xf32>
    %52 = vector.shape_cast %51 : vector<8xf32> to vector<8x1xf32>
    %53 = tpu.reciprocal %52 {approx = true} : vector<8x1xf32> -> vector<8x1xf32>
    %54 = vector.broadcast %53 : vector<8x1xf32> to vector<8x8xf32>
    %55 = arith.mulf %50, %54 : vector<8x8xf32>
    %56 = arith.truncf %55 : vector<8x8xf32> to vector<8x8xbf16>
    %57 = arith.truncf %36 : vector<8x8xf32> to vector<8x8xbf16>
    %cst_15 = arith.constant dense<0.000000e+00> : vector<8x8xf32>
    %58 = tpu.matmul %56, %57, %cst_15 {dimension_numbers = #tpu.dot_dimension_numbers<[1], [0], [0], [1], [0, 0, 1, 1], [], []>} : vector<8x8xbf16>, vector<8x8xbf16>, vector<8x8xf32> -> vector<8x8xf32>
    %59 = vector.extract_strided_slice %4 {offsets = [0, 16], sizes = [8, 8], strides = [1, 1]} : vector<8x32xf32> to vector<8x8xf32>
    %60 = vector.extract_strided_slice %5 {offsets = [0, 16], sizes = [8, 8], strides = [1, 1]} : vector<8x32xf32> to vector<8x8xf32>
    %61 = vector.extract_strided_slice %6 {offsets = [0, 16], sizes = [8, 8], strides = [1, 1]} : vector<8x32xf32> to vector<8x8xf32>
    %62 = arith.truncf %59 : vector<8x8xf32> to vector<8x8xbf16>
    %63 = arith.truncf %60 : vector<8x8xf32> to vector<8x8xbf16>
    %cst_16 = arith.constant dense<0.000000e+00> : vector<8x8xf32>
    %64 = tpu.matmul %62, %63, %cst_16 {dimension_numbers = #tpu.dot_dimension_numbers<[1], [1], [0], [0], [0, 0, 1, 0], [], []>} : vector<8x8xbf16>, vector<8x8xbf16>, vector<8x8xf32> -> vector<8x8xf32>
    %c0_i32_17 = arith.constant 0 : i32
    %65 = vector.broadcast %c0_i32_17 : i32 to vector<1x8xi32>
    %66 = arith.cmpi eq, %8, %65 : vector<1x8xi32>
    %cst_18 = arith.constant -1.000000e+09 : f32
    %67 = vector.shape_cast %66 : vector<1x8xi1> to vector<1x8xi1>
    %68 = vector.broadcast %67 : vector<1x8xi1> to vector<8x8xi1>
    %69 = vector.broadcast %cst_18 : f32 to vector<8x8xf32>
    %70 = arith.select %68, %69, %64 : vector<8x8xi1>, vector<8x8xf32>
    %cst_19 = arith.constant dense<0xFF800000> : vector<8xf32>
    %71 = vector.multi_reduction <maximumf>, %70, %cst_19 [1] : vector<8x8xf32> to vector<8xf32>
    %72 = vector.shape_cast %71 : vector<8xf32> to vector<8x1xf32>
    %73 = vector.broadcast %72 : vector<8x1xf32> to vector<8x8xf32>
    %74 = arith.subf %70, %73 : vector<8x8xf32>
    %75 = math.exp %74 : vector<8x8xf32>
    %cst_20 = arith.constant dense<0.000000e+00> : vector<8xf32>
    %76 = vector.multi_reduction <add>, %75, %cst_20 [1] : vector<8x8xf32> to vector<8xf32>
    %77 = vector.shape_cast %76 : vector<8xf32> to vector<8x1xf32>
    %78 = tpu.reciprocal %77 {approx = true} : vector<8x1xf32> -> vector<8x1xf32>
    %79 = vector.broadcast %78 : vector<8x1xf32> to vector<8x8xf32>
    %80 = arith.mulf %75, %79 : vector<8x8xf32>
    %81 = arith.truncf %80 : vector<8x8xf32> to vector<8x8xbf16>
    %82 = arith.truncf %61 : vector<8x8xf32> to vector<8x8xbf16>
    %cst_21 = arith.constant dense<0.000000e+00> : vector<8x8xf32>
    %83 = tpu.matmul %81, %82, %cst_21 {dimension_numbers = #tpu.dot_dimension_numbers<[1], [0], [0], [1], [0, 0, 1, 1], [], []>} : vector<8x8xbf16>, vector<8x8xbf16>, vector<8x8xf32> -> vector<8x8xf32>
    %84 = vector.extract_strided_slice %4 {offsets = [0, 24], sizes = [8, 8], strides = [1, 1]} : vector<8x32xf32> to vector<8x8xf32>
    %85 = vector.extract_strided_slice %5 {offsets = [0, 24], sizes = [8, 8], strides = [1, 1]} : vector<8x32xf32> to vector<8x8xf32>
    %86 = vector.extract_strided_slice %6 {offsets = [0, 24], sizes = [8, 8], strides = [1, 1]} : vector<8x32xf32> to vector<8x8xf32>
    %87 = arith.truncf %84 : vector<8x8xf32> to vector<8x8xbf16>
    %88 = arith.truncf %85 : vector<8x8xf32> to vector<8x8xbf16>
    %cst_22 = arith.constant dense<0.000000e+00> : vector<8x8xf32>
    %89 = tpu.matmul %87, %88, %cst_22 {dimension_numbers = #tpu.dot_dimension_numbers<[1], [1], [0], [0], [0, 0, 1, 0], [], []>} : vector<8x8xbf16>, vector<8x8xbf16>, vector<8x8xf32> -> vector<8x8xf32>
    %c0_i32_23 = arith.constant 0 : i32
    %90 = vector.broadcast %c0_i32_23 : i32 to vector<1x8xi32>
    %91 = arith.cmpi eq, %8, %90 : vector<1x8xi32>
    %cst_24 = arith.constant -1.000000e+09 : f32
    %92 = vector.shape_cast %91 : vector<1x8xi1> to vector<1x8xi1>
    %93 = vector.broadcast %92 : vector<1x8xi1> to vector<8x8xi1>
    %94 = vector.broadcast %cst_24 : f32 to vector<8x8xf32>
    %95 = arith.select %93, %94, %89 : vector<8x8xi1>, vector<8x8xf32>
    %cst_25 = arith.constant dense<0xFF800000> : vector<8xf32>
    %96 = vector.multi_reduction <maximumf>, %95, %cst_25 [1] : vector<8x8xf32> to vector<8xf32>
    %97 = vector.shape_cast %96 : vector<8xf32> to vector<8x1xf32>
    %98 = vector.broadcast %97 : vector<8x1xf32> to vector<8x8xf32>
    %99 = arith.subf %95, %98 : vector<8x8xf32>
    %100 = math.exp %99 : vector<8x8xf32>
    %cst_26 = arith.constant dense<0.000000e+00> : vector<8xf32>
    %101 = vector.multi_reduction <add>, %100, %cst_26 [1] : vector<8x8xf32> to vector<8xf32>
    %102 = vector.shape_cast %101 : vector<8xf32> to vector<8x1xf32>
    %103 = tpu.reciprocal %102 {approx = true} : vector<8x1xf32> -> vector<8x1xf32>
    %104 = vector.broadcast %103 : vector<8x1xf32> to vector<8x8xf32>
    %105 = arith.mulf %100, %104 : vector<8x8xf32>
    %106 = arith.truncf %105 : vector<8x8xf32> to vector<8x8xbf16>
    %107 = arith.truncf %86 : vector<8x8xf32> to vector<8x8xbf16>
    %cst_27 = arith.constant dense<0.000000e+00> : vector<8x8xf32>
    %108 = tpu.matmul %106, %107, %cst_27 {dimension_numbers = #tpu.dot_dimension_numbers<[1], [0], [0], [1], [0, 0, 1, 1], [], []>} : vector<8x8xbf16>, vector<8x8xbf16>, vector<8x8xf32> -> vector<8x8xf32>
    %109 = tpu.concatenate %33, %58, %83, %108 in 1 : vector<8x8xf32>, vector<8x8xf32>, vector<8x8xf32>, vector<8x8xf32> -> vector<8x32xf32>
    %c0_28 = arith.constant 0 : index
    %c0_29 = arith.constant 0 : index
    %c0_30 = arith.constant 0 : index
    %110 = vector.load %arg3[%c0_28, %c0_29, %c0_30] : memref<1x8x32xf32, #tpu.memory_space<vmem>>, vector<1x8x32xf32>
    %111 = vector.shape_cast %110 : vector<1x8x32xf32> to vector<8x32xf32>
    %112 = vector.shape_cast %109 : vector<8x32xf32> to vector<1x8x32xf32>
    tpu.vector_store %arg3[%c0_28, %c0_29, %c0_30], %112 {strides = array<i32>} : memref<1x8x32xf32, #tpu.memory_space<vmem>>, vector<1x8x32xf32>,
    return
  }
  func.func @transform_0(%arg0: i32) -> (i32, i32, i32) {
    %c0_i32 = arith.constant 0 : i32
    %c0_i32_0 = arith.constant 0 : i32
    %c0_i32_1 = arith.constant 0 : i32
    return %arg0, %c0_i32, %c0_i32_0 : i32, i32, i32
  }
  func.func @transform_1(%arg0: i32) -> (i32, i32, i32) {
    %c0_i32 = arith.constant 0 : i32
    %c0_i32_0 = arith.constant 0 : i32
    %c0_i32_1 = arith.constant 0 : i32
    return %arg0, %c0_i32, %c0_i32_0 : i32, i32, i32
  }
  func.func @transform_2(%arg0: i32) -> (i32, i32, i32) {
    %c0_i32 = arith.constant 0 : i32
    %c0_i32_0 = arith.constant 0 : i32
    %c0_i32_1 = arith.constant 0 : i32
    return %arg0, %c0_i32, %c0_i32_0 : i32, i32, i32
  }
}

module attributes {stable_mosaic.version = 11 : i64} {
  func.func @norm_qkv_kernel(%arg0: i32, %arg1: i32, %arg2: memref<16x32xf32, #tpu.memory_space<vmem>>, %arg3: memref<1x32xf32, #tpu.memory_space<vmem>>, %arg4: memref<1x32xf32, #tpu.memory_space<vmem>>, %arg5: memref<32x96xf32, #tpu.memory_space<vmem>>, %arg6: memref<1x96xf32, #tpu.memory_space<vmem>>, %arg7: memref<16x96xf32, #tpu.memory_space<vmem>>) attributes {dimension_semantics = [#tpu.dimension_semantics<parallel>, #tpu.dimension_semantics<parallel>], iteration_bounds = array<i64: 1, 1>, scalar_prefetch = 0 : i64, scratch_operands = 0 : i64, tpu.core_type = #tpu.core_type<tc>, window_params = [{transform_indices = @transform_0, window_bounds = array<i64: 16, 32>}, {pipeline_mode = #tpu.pipeline_mode<synchronous>, transform_indices = @transform_1, window_bounds = array<i64: 1, 32>}, {pipeline_mode = #tpu.pipeline_mode<synchronous>, transform_indices = @transform_2, window_bounds = array<i64: 1, 32>}, {transform_indices = @transform_3, window_bounds = array<i64: 32, 96>}, {transform_indices = @transform_4, window_bounds = array<i64: 1, 96>}, {transform_indices = @transform_5, window_bounds = array<i64: 16, 96>}]} {
    %c0 = arith.constant 0 : index
    %c0_0 = arith.constant 0 : index
    %0 = vector.load %arg2[%c0, %c0_0] : memref<16x32xf32, #tpu.memory_space<vmem>>, vector<16x32xf32>
    %c0_1 = arith.constant 0 : index
    %c0_2 = arith.constant 0 : index
    %1 = vector.load %arg3[%c0_1, %c0_2] : memref<1x32xf32, #tpu.memory_space<vmem>>, vector<1x32xf32>
    %c0_3 = arith.constant 0 : index
    %c0_4 = arith.constant 0 : index
    %2 = vector.load %arg4[%c0_3, %c0_4] : memref<1x32xf32, #tpu.memory_space<vmem>>, vector<1x32xf32>
    %cst = arith.constant dense<0.000000e+00> : vector<16xf32>
    %3 = vector.multi_reduction <add>, %0, %cst [1] : vector<16x32xf32> to vector<16xf32>
    %4 = vector.shape_cast %3 : vector<16xf32> to vector<16x1xf32>
    %cst_5 = arith.constant 3.200000e+01 : f32
    %5 = vector.broadcast %cst_5 : f32 to vector<16x1xf32>
    %6 = arith.divf %4, %5 : vector<16x1xf32>
    %7 = vector.broadcast %6 : vector<16x1xf32> to vector<16x32xf32>
    %8 = arith.subf %0, %7 : vector<16x32xf32>
    %9 = arith.mulf %8, %8 : vector<16x32xf32>
    %cst_6 = arith.constant dense<0.000000e+00> : vector<16xf32>
    %10 = vector.multi_reduction <add>, %9, %cst_6 [1] : vector<16x32xf32> to vector<16xf32>
    %11 = vector.shape_cast %10 : vector<16xf32> to vector<16x1xf32>
    %cst_7 = arith.constant 3.100000e+01 : f32
    %12 = vector.broadcast %cst_7 : f32 to vector<16x1xf32>
    %13 = arith.divf %11, %12 : vector<16x1xf32>
    %14 = vector.broadcast %1 : vector<1x32xf32> to vector<16x32xf32>
    %15 = arith.mulf %14, %8 : vector<16x32xf32>
    %16 = math.sqrt %13 : vector<16x1xf32>
    %cst_8 = arith.constant 9.99999997E-7 : f32
    %17 = vector.broadcast %cst_8 : f32 to vector<16x1xf32>
    %18 = arith.addf %16, %17 : vector<16x1xf32>
    %19 = vector.broadcast %18 : vector<16x1xf32> to vector<16x32xf32>
    %20 = arith.divf %15, %19 : vector<16x32xf32>
    %21 = vector.broadcast %2 : vector<1x32xf32> to vector<16x32xf32>
    %22 = arith.addf %20, %21 : vector<16x32xf32>
    %23 = arith.truncf %22 : vector<16x32xf32> to vector<16x32xbf16>
    %c0_9 = arith.constant 0 : index
    %c0_10 = arith.constant 0 : index
    %24 = vector.load %arg5[%c0_9, %c0_10] : memref<32x96xf32, #tpu.memory_space<vmem>>, vector<32x96xf32>
    %25 = arith.truncf %24 : vector<32x96xf32> to vector<32x96xbf16>
    %cst_11 = arith.constant dense<0.000000e+00> : vector<16x96xf32>
    %26 = tpu.matmul %23, %25, %cst_11 {dimension_numbers = #tpu.dot_dimension_numbers<[1], [0], [0], [1], [0, 0, 1, 1], [], []>} : vector<16x32xbf16>, vector<32x96xbf16>, vector<16x96xf32> -> vector<16x96xf32>
    %c0_12 = arith.constant 0 : index
    %c0_13 = arith.constant 0 : index
    %27 = vector.load %arg6[%c0_12, %c0_13] : memref<1x96xf32, #tpu.memory_space<vmem>>, vector<1x96xf32>
    %28 = vector.broadcast %27 : vector<1x96xf32> to vector<16x96xf32>
    %29 = arith.addf %26, %28 : vector<16x96xf32>
    %c0_14 = arith.constant 0 : index
    %c0_15 = arith.constant 0 : index
    %30 = vector.load %arg7[%c0_14, %c0_15] : memref<16x96xf32, #tpu.memory_space<vmem>>, vector<16x96xf32>
    tpu.vector_store %arg7[%c0_14, %c0_15], %29 {strides = array<i32>} : memref<16x96xf32, #tpu.memory_space<vmem>>, vector<16x96xf32>,
    return
  }
  func.func @transform_0(%arg0: i32, %arg1: i32) -> (i32, i32) {
    %c0_i32 = arith.constant 0 : i32
    %c0_i32_0 = arith.constant 0 : i32
    return %arg0, %c0_i32 : i32, i32
  }
  func.func @transform_1(%arg0: i32, %arg1: i32) -> (i32, i32) {
    %c0_i32 = arith.constant 0 : i32
    %c0_i32_0 = arith.constant 0 : i32
    %c0_i32_1 = arith.constant 0 : i32
    return %c0_i32, %c0_i32_0 : i32, i32
  }
  func.func @transform_2(%arg0: i32, %arg1: i32) -> (i32, i32) {
    %c0_i32 = arith.constant 0 : i32
    %c0_i32_0 = arith.constant 0 : i32
    %c0_i32_1 = arith.constant 0 : i32
    return %c0_i32, %c0_i32_0 : i32, i32
  }
  func.func @transform_3(%arg0: i32, %arg1: i32) -> (i32, i32) {
    %c0_i32 = arith.constant 0 : i32
    %c0_i32_0 = arith.constant 0 : i32
    return %c0_i32, %arg1 : i32, i32
  }
  func.func @transform_4(%arg0: i32, %arg1: i32) -> (i32, i32) {
    %c0_i32 = arith.constant 0 : i32
    %c0_i32_0 = arith.constant 0 : i32
    return %c0_i32, %arg1 : i32, i32
  }
  func.func @transform_5(%arg0: i32, %arg1: i32) -> (i32, i32) {
    %c0_i32 = arith.constant 0 : i32
    return %arg0, %arg1 : i32, i32
  }
}

module attributes {stable_mosaic.version = 11 : i64} {
  func.func @proj_residual_kernel(%arg0: i32, %arg1: i32, %arg2: memref<16x32xf32, #tpu.memory_space<vmem>>, %arg3: memref<32x32xf32, #tpu.memory_space<vmem>>, %arg4: memref<1x32xf32, #tpu.memory_space<vmem>>, %arg5: memref<16x32xf32, #tpu.memory_space<vmem>>, %arg6: memref<16x32xf32, #tpu.memory_space<vmem>>) attributes {dimension_semantics = [#tpu.dimension_semantics<parallel>, #tpu.dimension_semantics<parallel>], iteration_bounds = array<i64: 1, 1>, scalar_prefetch = 0 : i64, scratch_operands = 0 : i64, tpu.core_type = #tpu.core_type<tc>, window_params = [{transform_indices = @transform_0, window_bounds = array<i64: 16, 32>}, {transform_indices = @transform_1, window_bounds = array<i64: 32, 32>}, {transform_indices = @transform_2, window_bounds = array<i64: 1, 32>}, {transform_indices = @transform_3, window_bounds = array<i64: 16, 32>}, {transform_indices = @transform_4, window_bounds = array<i64: 16, 32>}]} {
    %c0 = arith.constant 0 : index
    %c0_0 = arith.constant 0 : index
    %0 = vector.load %arg2[%c0, %c0_0] : memref<16x32xf32, #tpu.memory_space<vmem>>, vector<16x32xf32>
    %1 = arith.truncf %0 : vector<16x32xf32> to vector<16x32xbf16>
    %c0_1 = arith.constant 0 : index
    %c0_2 = arith.constant 0 : index
    %2 = vector.load %arg3[%c0_1, %c0_2] : memref<32x32xf32, #tpu.memory_space<vmem>>, vector<32x32xf32>
    %3 = arith.truncf %2 : vector<32x32xf32> to vector<32x32xbf16>
    %cst = arith.constant dense<0.000000e+00> : vector<16x32xf32>
    %4 = tpu.matmul %1, %3, %cst {dimension_numbers = #tpu.dot_dimension_numbers<[1], [0], [0], [1], [0, 0, 1, 1], [], []>} : vector<16x32xbf16>, vector<32x32xbf16>, vector<16x32xf32> -> vector<16x32xf32>
    %c0_3 = arith.constant 0 : index
    %c0_4 = arith.constant 0 : index
    %5 = vector.load %arg4[%c0_3, %c0_4] : memref<1x32xf32, #tpu.memory_space<vmem>>, vector<1x32xf32>
    %6 = vector.broadcast %5 : vector<1x32xf32> to vector<16x32xf32>
    %7 = arith.addf %4, %6 : vector<16x32xf32>
    %c0_5 = arith.constant 0 : index
    %c0_6 = arith.constant 0 : index
    %8 = vector.load %arg5[%c0_5, %c0_6] : memref<16x32xf32, #tpu.memory_space<vmem>>, vector<16x32xf32>
    %9 = arith.addf %7, %8 : vector<16x32xf32>
    %c0_7 = arith.constant 0 : index
    %c0_8 = arith.constant 0 : index
    %10 = vector.load %arg6[%c0_7, %c0_8] : memref<16x32xf32, #tpu.memory_space<vmem>>, vector<16x32xf32>
    tpu.vector_store %arg6[%c0_7, %c0_8], %9 {strides = array<i32>} : memref<16x32xf32, #tpu.memory_space<vmem>>, vector<16x32xf32>,
    return
  }
  func.func @transform_0(%arg0: i32, %arg1: i32) -> (i32, i32) {
    %c0_i32 = arith.constant 0 : i32
    %c0_i32_0 = arith.constant 0 : i32
    return %arg0, %c0_i32 : i32, i32
  }
  func.func @transform_1(%arg0: i32, %arg1: i32) -> (i32, i32) {
    %c0_i32 = arith.constant 0 : i32
    %c0_i32_0 = arith.constant 0 : i32
    return %c0_i32, %arg1 : i32, i32
  }
  func.func @transform_2(%arg0: i32, %arg1: i32) -> (i32, i32) {
    %c0_i32 = arith.constant 0 : i32
    %c0_i32_0 = arith.constant 0 : i32
    return %c0_i32, %arg1 : i32, i32
  }
  func.func @transform_3(%arg0: i32, %arg1: i32) -> (i32, i32) {
    %c0_i32 = arith.constant 0 : i32
    return %arg0, %arg1 : i32, i32
  }
  func.func @transform_4(%arg0: i32, %arg1: i32) -> (i32, i32) {
    %c0_i32 = arith.constant 0 : i32
    return %arg0, %arg1 : i32, i32
  }
}

module attributes {stable_mosaic.version = 11 : i64} {
  func.func @ffn_kernel(%arg0: i32, %arg1: i32, %arg2: memref<16x32xf32, #tpu.memory_space<vmem>>, %arg3: memref<1x32xf32, #tpu.memory_space<vmem>>, %arg4: memref<1x32xf32, #tpu.memory_space<vmem>>, %arg5: memref<32x512xf32, #tpu.memory_space<vmem>>, %arg6: memref<1x512xf32, #tpu.memory_space<vmem>>, %arg7: memref<512x32xf32, #tpu.memory_space<vmem>>, %arg8: memref<1x32xf32, #tpu.memory_space<vmem>>, %arg9: memref<16x32xf32, #tpu.memory_space<vmem>>, %arg10: memref<16x32xf32, #tpu.memory_space<vmem>>, %arg11: memref<16x32xf32, #tpu.memory_space<vmem>>) attributes {dimension_semantics = [#tpu.dimension_semantics<parallel>, #tpu.dimension_semantics<arbitrary>], iteration_bounds = array<i64: 1, 4>, scalar_prefetch = 0 : i64, scratch_operands = 2 : i64, tpu.core_type = #tpu.core_type<tc>, window_params = [{transform_indices = @transform_0, window_bounds = array<i64: 16, 32>}, {pipeline_mode = #tpu.pipeline_mode<synchronous>, transform_indices = @transform_1, window_bounds = array<i64: 1, 32>}, {pipeline_mode = #tpu.pipeline_mode<synchronous>, transform_indices = @transform_2, window_bounds = array<i64: 1, 32>}, {transform_indices = @transform_3, window_bounds = array<i64: 32, 512>}, {transform_indices = @transform_4, window_bounds = array<i64: 1, 512>}, {transform_indices = @transform_5, window_bounds = array<i64: 512, 32>}, {pipeline_mode = #tpu.pipeline_mode<synchronous>, transform_indices = @transform_6, window_bounds = array<i64: 1, 32>}, {transform_indices = @transform_7, window_bounds = array<i64: 16, 32>}]} {
    %c0_i32 = arith.constant 0 : i32
    %0 = arith.cmpi eq, %arg1, %c0_i32 : i32
    %1 = arith.extui %0 : i1 to i32
    %c0_i32_0 = arith.constant 0 : i32
    %2 = arith.cmpi ne, %1, %c0_i32_0 : i32
    scf.if %2 {
      %c0_15 = arith.constant 0 : index
      %c0_16 = arith.constant 0 : index
      %23 = vector.load %arg2[%c0_15, %c0_16] : memref<16x32xf32, #tpu.memory_space<vmem>>, vector<16x32xf32>
      %c0_17 = arith.constant 0 : index
      %c0_18 = arith.constant 0 : index
      %24 = vector.load %arg3[%c0_17, %c0_18] : memref<1x32xf32, #tpu.memory_space<vmem>>, vector<1x32xf32>
      %c0_19 = arith.constant 0 : index
      %c0_20 = arith.constant 0 : index
      %25 = vector.load %arg4[%c0_19, %c0_20] : memref<1x32xf32, #tpu.memory_space<vmem>>, vector<1x32xf32>
      %cst_21 = arith.constant dense<0.000000e+00> : vector<16xf32>
      %26 = vector.multi_reduction <add>, %23, %cst_21 [1] : vector<16x32xf32> to vector<16xf32>
      %27 = vector.shape_cast %26 : vector<16xf32> to vector<16x1xf32>
      %cst_22 = arith.constant 3.200000e+01 : f32
      %28 = vector.broadcast %cst_22 : f32 to vector<16x1xf32>
      %29 = arith.divf %27, %28 : vector<16x1xf32>
      %30 = vector.broadcast %29 : vector<16x1xf32> to vector<16x32xf32>
      %31 = arith.subf %23, %30 : vector<16x32xf32>
      %32 = arith.mulf %31, %31 : vector<16x32xf32>
      %cst_23 = arith.constant dense<0.000000e+00> : vector<16xf32>
      %33 = vector.multi_reduction <add>, %32, %cst_23 [1] : vector<16x32xf32> to vector<16xf32>
      %34 = vector.shape_cast %33 : vector<16xf32> to vector<16x1xf32>
      %cst_24 = arith.constant 3.100000e+01 : f32
      %35 = vector.broadcast %cst_24 : f32 to vector<16x1xf32>
      %36 = arith.divf %34, %35 : vector<16x1xf32>
      %37 = vector.broadcast %24 : vector<1x32xf32> to vector<16x32xf32>
      %38 = arith.mulf %37, %31 : vector<16x32xf32>
      %39 = math.sqrt %36 : vector<16x1xf32>
      %cst_25 = arith.constant 9.99999997E-7 : f32
      %40 = vector.broadcast %cst_25 : f32 to vector<16x1xf32>
      %41 = arith.addf %39, %40 : vector<16x1xf32>
      %42 = vector.broadcast %41 : vector<16x1xf32> to vector<16x32xf32>
      %43 = arith.divf %38, %42 : vector<16x32xf32>
      %44 = vector.broadcast %25 : vector<1x32xf32> to vector<16x32xf32>
      %45 = arith.addf %43, %44 : vector<16x32xf32>
      %c0_26 = arith.constant 0 : index
      %c0_27 = arith.constant 0 : index
      %46 = vector.load %arg10[%c0_26, %c0_27] : memref<16x32xf32, #tpu.memory_space<vmem>>, vector<16x32xf32>
      tpu.vector_store %arg10[%c0_26, %c0_27], %45 {strides = array<i32>} : memref<16x32xf32, #tpu.memory_space<vmem>>, vector<16x32xf32>,
      %cst_28 = arith.constant 0.000000e+00 : f32
      %47 = vector.broadcast %cst_28 : f32 to vector<16x32xf32>
      %c0_29 = arith.constant 0 : index
      %c0_30 = arith.constant 0 : index
      %48 = vector.load %arg11[%c0_29, %c0_30] : memref<16x32xf32, #tpu.memory_space<vmem>>, vector<16x32xf32>
      tpu.vector_store %arg11[%c0_29, %c0_30], %47 {strides = array<i32>} : memref<16x32xf32, #tpu.memory_space<vmem>>, vector<16x32xf32>,
    } else {
    }
    %c0 = arith.constant 0 : index
    %c0_1 = arith.constant 0 : index
    %3 = vector.load %arg10[%c0, %c0_1] : memref<16x32xf32, #tpu.memory_space<vmem>>, vector<16x32xf32>
    %4 = arith.truncf %3 : vector<16x32xf32> to vector<16x32xbf16>
    %c0_2 = arith.constant 0 : index
    %c0_3 = arith.constant 0 : index
    %5 = vector.load %arg5[%c0_2, %c0_3] : memref<32x512xf32, #tpu.memory_space<vmem>>, vector<32x512xf32>
    %6 = arith.truncf %5 : vector<32x512xf32> to vector<32x512xbf16>
    %cst = arith.constant dense<0.000000e+00> : vector<16x512xf32>
    %7 = tpu.matmul %4, %6, %cst {dimension_numbers = #tpu.dot_dimension_numbers<[1], [0], [0], [1], [0, 0, 1, 1], [], []>} : vector<16x32xbf16>, vector<32x512xbf16>, vector<16x512xf32> -> vector<16x512xf32>
    %c0_4 = arith.constant 0 : index
    %c0_5 = arith.constant 0 : index
    %8 = vector.load %arg6[%c0_4, %c0_5] : memref<1x512xf32, #tpu.memory_space<vmem>>, vector<1x512xf32>
    %9 = vector.broadcast %8 : vector<1x512xf32> to vector<16x512xf32>
    %10 = arith.addf %7, %9 : vector<16x512xf32>
    %cst_6 = arith.constant 0.000000e+00 : f32
    %11 = vector.broadcast %cst_6 : f32 to vector<16x512xf32>
    %12 = arith.maximumf %10, %11 : vector<16x512xf32>
    %c0_7 = arith.constant 0 : index
    %c0_8 = arith.constant 0 : index
    %13 = vector.load %arg11[%c0_7, %c0_8] : memref<16x32xf32, #tpu.memory_space<vmem>>, vector<16x32xf32>
    %14 = arith.truncf %12 : vector<16x512xf32> to vector<16x512xbf16>
    %c0_9 = arith.constant 0 : index
    %c0_10 = arith.constant 0 : index
    %15 = vector.load %arg7[%c0_9, %c0_10] : memref<512x32xf32, #tpu.memory_space<vmem>>, vector<512x32xf32>
    %16 = arith.truncf %15 : vector<512x32xf32> to vector<512x32xbf16>
    %cst_11 = arith.constant dense<0.000000e+00> : vector<16x32xf32>
    %17 = tpu.matmul %14, %16, %cst_11 {dimension_numbers = #tpu.dot_dimension_numbers<[1], [0], [0], [1], [0, 0, 1, 1], [], []>} : vector<16x512xbf16>, vector<512x32xbf16>, vector<16x32xf32> -> vector<16x32xf32>
    %18 = arith.addf %13, %17 : vector<16x32xf32>
    %c0_12 = arith.constant 0 : index
    %c0_13 = arith.constant 0 : index
    %19 = vector.load %arg11[%c0_12, %c0_13] : memref<16x32xf32, #tpu.memory_space<vmem>>, vector<16x32xf32>
    tpu.vector_store %arg11[%c0_12, %c0_13], %18 {strides = array<i32>} : memref<16x32xf32, #tpu.memory_space<vmem>>, vector<16x32xf32>,
    %c3_i32 = arith.constant 3 : i32
    %20 = arith.cmpi eq, %arg1, %c3_i32 : i32
    %21 = arith.extui %20 : i1 to i32
    %c0_i32_14 = arith.constant 0 : i32
    %22 = arith.cmpi ne, %21, %c0_i32_14 : i32
    scf.if %22 {
      %c0_15 = arith.constant 0 : index
      %c0_16 = arith.constant 0 : index
      %23 = vector.load %arg2[%c0_15, %c0_16] : memref<16x32xf32, #tpu.memory_space<vmem>>, vector<16x32xf32>
      %c0_17 = arith.constant 0 : index
      %c0_18 = arith.constant 0 : index
      %24 = vector.load %arg11[%c0_17, %c0_18] : memref<16x32xf32, #tpu.memory_space<vmem>>, vector<16x32xf32>
      %25 = arith.addf %23, %24 : vector<16x32xf32>
      %c0_19 = arith.constant 0 : index
      %c0_20 = arith.constant 0 : index
      %26 = vector.load %arg8[%c0_19, %c0_20] : memref<1x32xf32, #tpu.memory_space<vmem>>, vector<1x32xf32>
      %27 = vector.broadcast %26 : vector<1x32xf32> to vector<16x32xf32>
      %28 = arith.addf %25, %27 : vector<16x32xf32>
      %c0_21 = arith.constant 0 : index
      %c0_22 = arith.constant 0 : index
      %29 = vector.load %arg9[%c0_21, %c0_22] : memref<16x32xf32, #tpu.memory_space<vmem>>, vector<16x32xf32>
      tpu.vector_store %arg9[%c0_21, %c0_22], %28 {strides = array<i32>} : memref<16x32xf32, #tpu.memory_space<vmem>>, vector<16x32xf32>,
    } else {
    }
    return
  }
  func.func @transform_0(%arg0: i32, %arg1: i32) -> (i32, i32) {
    %c0_i32 = arith.constant 0 : i32
    %c0_i32_0 = arith.constant 0 : i32
    return %arg0, %c0_i32 : i32, i32
  }
  func.func @transform_1(%arg0: i32, %arg1: i32) -> (i32, i32) {
    %c0_i32 = arith.constant 0 : i32
    %c0_i32_0 = arith.constant 0 : i32
    %c0_i32_1 = arith.constant 0 : i32
    return %c0_i32, %c0_i32_0 : i32, i32
  }
  func.func @transform_2(%arg0: i32, %arg1: i32) -> (i32, i32) {
    %c0_i32 = arith.constant 0 : i32
    %c0_i32_0 = arith.constant 0 : i32
    %c0_i32_1 = arith.constant 0 : i32
    return %c0_i32, %c0_i32_0 : i32, i32
  }
  func.func @transform_3(%arg0: i32, %arg1: i32) -> (i32, i32) {
    %c0_i32 = arith.constant 0 : i32
    %c0_i32_0 = arith.constant 0 : i32
    return %c0_i32, %arg1 : i32, i32
  }
  func.func @transform_4(%arg0: i32, %arg1: i32) -> (i32, i32) {
    %c0_i32 = arith.constant 0 : i32
    %c0_i32_0 = arith.constant 0 : i32
    return %c0_i32, %arg1 : i32, i32
  }
  func.func @transform_5(%arg0: i32, %arg1: i32) -> (i32, i32) {
    %c0_i32 = arith.constant 0 : i32
    %c0_i32_0 = arith.constant 0 : i32
    return %arg1, %c0_i32 : i32, i32
  }
  func.func @transform_6(%arg0: i32, %arg1: i32) -> (i32, i32) {
    %c0_i32 = arith.constant 0 : i32
    %c0_i32_0 = arith.constant 0 : i32
    %c0_i32_1 = arith.constant 0 : i32
    return %c0_i32, %c0_i32_0 : i32, i32
  }
  func.func @transform_7(%arg0: i32, %arg1: i32) -> (i32, i32) {
    %c0_i32 = arith.constant 0 : i32
    %c0_i32_0 = arith.constant 0 : i32
    return %arg0, %c0_i32 : i32, i32
  }
}

module attributes {stable_mosaic.version = 11 : i64} {
  func.func @norm_qkv_kernel(%arg0: i32, %arg1: i32, %arg2: memref<16x32xf32, #tpu.memory_space<vmem>>, %arg3: memref<1x32xf32, #tpu.memory_space<vmem>>, %arg4: memref<1x32xf32, #tpu.memory_space<vmem>>, %arg5: memref<32x96xf32, #tpu.memory_space<vmem>>, %arg6: memref<1x96xf32, #tpu.memory_space<vmem>>, %arg7: memref<16x96xf32, #tpu.memory_space<vmem>>) attributes {dimension_semantics = [#tpu.dimension_semantics<parallel>, #tpu.dimension_semantics<parallel>], iteration_bounds = array<i64: 1, 1>, scalar_prefetch = 0 : i64, scratch_operands = 0 : i64, tpu.core_type = #tpu.core_type<tc>, window_params = [{transform_indices = @transform_0, window_bounds = array<i64: 16, 32>}, {pipeline_mode = #tpu.pipeline_mode<synchronous>, transform_indices = @transform_1, window_bounds = array<i64: 1, 32>}, {pipeline_mode = #tpu.pipeline_mode<synchronous>, transform_indices = @transform_2, window_bounds = array<i64: 1, 32>}, {transform_indices = @transform_3, window_bounds = array<i64: 32, 96>}, {transform_indices = @transform_4, window_bounds = array<i64: 1, 96>}, {transform_indices = @transform_5, window_bounds = array<i64: 16, 96>}]} {
    %c0 = arith.constant 0 : index
    %c0_0 = arith.constant 0 : index
    %0 = vector.load %arg2[%c0, %c0_0] : memref<16x32xf32, #tpu.memory_space<vmem>>, vector<16x32xf32>
    %c0_1 = arith.constant 0 : index
    %c0_2 = arith.constant 0 : index
    %1 = vector.load %arg3[%c0_1, %c0_2] : memref<1x32xf32, #tpu.memory_space<vmem>>, vector<1x32xf32>
    %c0_3 = arith.constant 0 : index
    %c0_4 = arith.constant 0 : index
    %2 = vector.load %arg4[%c0_3, %c0_4] : memref<1x32xf32, #tpu.memory_space<vmem>>, vector<1x32xf32>
    %cst = arith.constant dense<0.000000e+00> : vector<16xf32>
    %3 = vector.multi_reduction <add>, %0, %cst [1] : vector<16x32xf32> to vector<16xf32>
    %4 = vector.shape_cast %3 : vector<16xf32> to vector<16x1xf32>
    %cst_5 = arith.constant 3.200000e+01 : f32
    %5 = vector.broadcast %cst_5 : f32 to vector<16x1xf32>
    %6 = arith.divf %4, %5 : vector<16x1xf32>
    %7 = vector.broadcast %6 : vector<16x1xf32> to vector<16x32xf32>
    %8 = arith.subf %0, %7 : vector<16x32xf32>
    %9 = arith.mulf %8, %8 : vector<16x32xf32>
    %cst_6 = arith.constant dense<0.000000e+00> : vector<16xf32>
    %10 = vector.multi_reduction <add>, %9, %cst_6 [1] : vector<16x32xf32> to vector<16xf32>
    %11 = vector.shape_cast %10 : vector<16xf32> to vector<16x1xf32>
    %cst_7 = arith.constant 3.100000e+01 : f32
    %12 = vector.broadcast %cst_7 : f32 to vector<16x1xf32>
    %13 = arith.divf %11, %12 : vector<16x1xf32>
    %14 = vector.broadcast %1 : vector<1x32xf32> to vector<16x32xf32>
    %15 = arith.mulf %14, %8 : vector<16x32xf32>
    %16 = math.sqrt %13 : vector<16x1xf32>
    %cst_8 = arith.constant 9.99999997E-7 : f32
    %17 = vector.broadcast %cst_8 : f32 to vector<16x1xf32>
    %18 = arith.addf %16, %17 : vector<16x1xf32>
    %19 = vector.broadcast %18 : vector<16x1xf32> to vector<16x32xf32>
    %20 = arith.divf %15, %19 : vector<16x32xf32>
    %21 = vector.broadcast %2 : vector<1x32xf32> to vector<16x32xf32>
    %22 = arith.addf %20, %21 : vector<16x32xf32>
    %23 = arith.truncf %22 : vector<16x32xf32> to vector<16x32xbf16>
    %c0_9 = arith.constant 0 : index
    %c0_10 = arith.constant 0 : index
    %24 = vector.load %arg5[%c0_9, %c0_10] : memref<32x96xf32, #tpu.memory_space<vmem>>, vector<32x96xf32>
    %25 = arith.truncf %24 : vector<32x96xf32> to vector<32x96xbf16>
    %cst_11 = arith.constant dense<0.000000e+00> : vector<16x96xf32>
    %26 = tpu.matmul %23, %25, %cst_11 {dimension_numbers = #tpu.dot_dimension_numbers<[1], [0], [0], [1], [0, 0, 1, 1], [], []>} : vector<16x32xbf16>, vector<32x96xbf16>, vector<16x96xf32> -> vector<16x96xf32>
    %c0_12 = arith.constant 0 : index
    %c0_13 = arith.constant 0 : index
    %27 = vector.load %arg6[%c0_12, %c0_13] : memref<1x96xf32, #tpu.memory_space<vmem>>, vector<1x96xf32>
    %28 = vector.broadcast %27 : vector<1x96xf32> to vector<16x96xf32>
    %29 = arith.addf %26, %28 : vector<16x96xf32>
    %c0_14 = arith.constant 0 : index
    %c0_15 = arith.constant 0 : index
    %30 = vector.load %arg7[%c0_14, %c0_15] : memref<16x96xf32, #tpu.memory_space<vmem>>, vector<16x96xf32>
    tpu.vector_store %arg7[%c0_14, %c0_15], %29 {strides = array<i32>} : memref<16x96xf32, #tpu.memory_space<vmem>>, vector<16x96xf32>,
    return
  }
  func.func @transform_0(%arg0: i32, %arg1: i32) -> (i32, i32) {
    %c0_i32 = arith.constant 0 : i32
    %c0_i32_0 = arith.constant 0 : i32
    return %arg0, %c0_i32 : i32, i32
  }
  func.func @transform_1(%arg0: i32, %arg1: i32) -> (i32, i32) {
    %c0_i32 = arith.constant 0 : i32
    %c0_i32_0 = arith.constant 0 : i32
    %c0_i32_1 = arith.constant 0 : i32
    return %c0_i32, %c0_i32_0 : i32, i32
  }
  func.func @transform_2(%arg0: i32, %arg1: i32) -> (i32, i32) {
    %c0_i32 = arith.constant 0 : i32
    %c0_i32_0 = arith.constant 0 : i32
    %c0_i32_1 = arith.constant 0 : i32
    return %c0_i32, %c0_i32_0 : i32, i32
  }
  func.func @transform_3(%arg0: i32, %arg1: i32) -> (i32, i32) {
    %c0_i32 = arith.constant 0 : i32
    %c0_i32_0 = arith.constant 0 : i32
    return %c0_i32, %arg1 : i32, i32
  }
  func.func @transform_4(%arg0: i32, %arg1: i32) -> (i32, i32) {
    %c0_i32 = arith.constant 0 : i32
    %c0_i32_0 = arith.constant 0 : i32
    return %c0_i32, %arg1 : i32, i32
  }
  func.func @transform_5(%arg0: i32, %arg1: i32) -> (i32, i32) {
    %c0_i32 = arith.constant 0 : i32
    return %arg0, %arg1 : i32, i32
  }
}

module attributes {stable_mosaic.version = 11 : i64} {
  func.func @proj_residual_kernel(%arg0: i32, %arg1: i32, %arg2: memref<16x32xf32, #tpu.memory_space<vmem>>, %arg3: memref<32x32xf32, #tpu.memory_space<vmem>>, %arg4: memref<1x32xf32, #tpu.memory_space<vmem>>, %arg5: memref<16x32xf32, #tpu.memory_space<vmem>>, %arg6: memref<16x32xf32, #tpu.memory_space<vmem>>) attributes {dimension_semantics = [#tpu.dimension_semantics<parallel>, #tpu.dimension_semantics<parallel>], iteration_bounds = array<i64: 1, 1>, scalar_prefetch = 0 : i64, scratch_operands = 0 : i64, tpu.core_type = #tpu.core_type<tc>, window_params = [{transform_indices = @transform_0, window_bounds = array<i64: 16, 32>}, {transform_indices = @transform_1, window_bounds = array<i64: 32, 32>}, {transform_indices = @transform_2, window_bounds = array<i64: 1, 32>}, {transform_indices = @transform_3, window_bounds = array<i64: 16, 32>}, {transform_indices = @transform_4, window_bounds = array<i64: 16, 32>}]} {
    %c0 = arith.constant 0 : index
    %c0_0 = arith.constant 0 : index
    %0 = vector.load %arg2[%c0, %c0_0] : memref<16x32xf32, #tpu.memory_space<vmem>>, vector<16x32xf32>
    %1 = arith.truncf %0 : vector<16x32xf32> to vector<16x32xbf16>
    %c0_1 = arith.constant 0 : index
    %c0_2 = arith.constant 0 : index
    %2 = vector.load %arg3[%c0_1, %c0_2] : memref<32x32xf32, #tpu.memory_space<vmem>>, vector<32x32xf32>
    %3 = arith.truncf %2 : vector<32x32xf32> to vector<32x32xbf16>
    %cst = arith.constant dense<0.000000e+00> : vector<16x32xf32>
    %4 = tpu.matmul %1, %3, %cst {dimension_numbers = #tpu.dot_dimension_numbers<[1], [0], [0], [1], [0, 0, 1, 1], [], []>} : vector<16x32xbf16>, vector<32x32xbf16>, vector<16x32xf32> -> vector<16x32xf32>
    %c0_3 = arith.constant 0 : index
    %c0_4 = arith.constant 0 : index
    %5 = vector.load %arg4[%c0_3, %c0_4] : memref<1x32xf32, #tpu.memory_space<vmem>>, vector<1x32xf32>
    %6 = vector.broadcast %5 : vector<1x32xf32> to vector<16x32xf32>
    %7 = arith.addf %4, %6 : vector<16x32xf32>
    %c0_5 = arith.constant 0 : index
    %c0_6 = arith.constant 0 : index
    %8 = vector.load %arg5[%c0_5, %c0_6] : memref<16x32xf32, #tpu.memory_space<vmem>>, vector<16x32xf32>
    %9 = arith.addf %7, %8 : vector<16x32xf32>
    %c0_7 = arith.constant 0 : index
    %c0_8 = arith.constant 0 : index
    %10 = vector.load %arg6[%c0_7, %c0_8] : memref<16x32xf32, #tpu.memory_space<vmem>>, vector<16x32xf32>
    tpu.vector_store %arg6[%c0_7, %c0_8], %9 {strides = array<i32>} : memref<16x32xf32, #tpu.memory_space<vmem>>, vector<16x32xf32>,
    return
  }
  func.func @transform_0(%arg0: i32, %arg1: i32) -> (i32, i32) {
    %c0_i32 = arith.constant 0 : i32
    %c0_i32_0 = arith.constant 0 : i32
    return %arg0, %c0_i32 : i32, i32
  }
  func.func @transform_1(%arg0: i32, %arg1: i32) -> (i32, i32) {
    %c0_i32 = arith.constant 0 : i32
    %c0_i32_0 = arith.constant 0 : i32
    return %c0_i32, %arg1 : i32, i32
  }
  func.func @transform_2(%arg0: i32, %arg1: i32) -> (i32, i32) {
    %c0_i32 = arith.constant 0 : i32
    %c0_i32_0 = arith.constant 0 : i32
    return %c0_i32, %arg1 : i32, i32
  }
  func.func @transform_3(%arg0: i32, %arg1: i32) -> (i32, i32) {
    %c0_i32 = arith.constant 0 : i32
    return %arg0, %arg1 : i32, i32
  }
  func.func @transform_4(%arg0: i32, %arg1: i32) -> (i32, i32) {
    %c0_i32 = arith.constant 0 : i32
    return %arg0, %arg1 : i32, i32
  }
}

module attributes {stable_mosaic.version = 11 : i64} {
  func.func @norm_kernel(%arg0: i32, %arg1: memref<16x32xf32, #tpu.memory_space<vmem>>, %arg2: memref<1x32xf32, #tpu.memory_space<vmem>>, %arg3: memref<1x32xf32, #tpu.memory_space<vmem>>, %arg4: memref<16x32xf32, #tpu.memory_space<vmem>>) attributes {dimension_semantics = [#tpu.dimension_semantics<parallel>], iteration_bounds = array<i64: 1>, scalar_prefetch = 0 : i64, scratch_operands = 0 : i64, tpu.core_type = #tpu.core_type<tc>, window_params = [{transform_indices = @transform_0, window_bounds = array<i64: 16, 32>}, {pipeline_mode = #tpu.pipeline_mode<synchronous>, transform_indices = @transform_1, window_bounds = array<i64: 1, 32>}, {pipeline_mode = #tpu.pipeline_mode<synchronous>, transform_indices = @transform_2, window_bounds = array<i64: 1, 32>}, {transform_indices = @transform_3, window_bounds = array<i64: 16, 32>}]} {
    %c0 = arith.constant 0 : index
    %c0_0 = arith.constant 0 : index
    %0 = vector.load %arg1[%c0, %c0_0] : memref<16x32xf32, #tpu.memory_space<vmem>>, vector<16x32xf32>
    %c0_1 = arith.constant 0 : index
    %c0_2 = arith.constant 0 : index
    %1 = vector.load %arg2[%c0_1, %c0_2] : memref<1x32xf32, #tpu.memory_space<vmem>>, vector<1x32xf32>
    %c0_3 = arith.constant 0 : index
    %c0_4 = arith.constant 0 : index
    %2 = vector.load %arg3[%c0_3, %c0_4] : memref<1x32xf32, #tpu.memory_space<vmem>>, vector<1x32xf32>
    %cst = arith.constant dense<0.000000e+00> : vector<16xf32>
    %3 = vector.multi_reduction <add>, %0, %cst [1] : vector<16x32xf32> to vector<16xf32>
    %4 = vector.shape_cast %3 : vector<16xf32> to vector<16x1xf32>
    %cst_5 = arith.constant 3.200000e+01 : f32
    %5 = vector.broadcast %cst_5 : f32 to vector<16x1xf32>
    %6 = arith.divf %4, %5 : vector<16x1xf32>
    %7 = vector.broadcast %6 : vector<16x1xf32> to vector<16x32xf32>
    %8 = arith.subf %0, %7 : vector<16x32xf32>
    %9 = arith.mulf %8, %8 : vector<16x32xf32>
    %cst_6 = arith.constant dense<0.000000e+00> : vector<16xf32>
    %10 = vector.multi_reduction <add>, %9, %cst_6 [1] : vector<16x32xf32> to vector<16xf32>
    %11 = vector.shape_cast %10 : vector<16xf32> to vector<16x1xf32>
    %cst_7 = arith.constant 3.100000e+01 : f32
    %12 = vector.broadcast %cst_7 : f32 to vector<16x1xf32>
    %13 = arith.divf %11, %12 : vector<16x1xf32>
    %14 = vector.broadcast %1 : vector<1x32xf32> to vector<16x32xf32>
    %15 = arith.mulf %14, %8 : vector<16x32xf32>
    %16 = math.sqrt %13 : vector<16x1xf32>
    %cst_8 = arith.constant 9.99999997E-7 : f32
    %17 = vector.broadcast %cst_8 : f32 to vector<16x1xf32>
    %18 = arith.addf %16, %17 : vector<16x1xf32>
    %19 = vector.broadcast %18 : vector<16x1xf32> to vector<16x32xf32>
    %20 = arith.divf %15, %19 : vector<16x32xf32>
    %21 = vector.broadcast %2 : vector<1x32xf32> to vector<16x32xf32>
    %22 = arith.addf %20, %21 : vector<16x32xf32>
    %c0_9 = arith.constant 0 : index
    %c0_10 = arith.constant 0 : index
    %23 = vector.load %arg4[%c0_9, %c0_10] : memref<16x32xf32, #tpu.memory_space<vmem>>, vector<16x32xf32>
    tpu.vector_store %arg4[%c0_9, %c0_10], %22 {strides = array<i32>} : memref<16x32xf32, #tpu.memory_space<vmem>>, vector<16x32xf32>,
    return
  }
  func.func @transform_0(%arg0: i32) -> (i32, i32) {
    %c0_i32 = arith.constant 0 : i32
    %c0_i32_0 = arith.constant 0 : i32
    return %arg0, %c0_i32 : i32, i32
  }
  func.func @transform_1(%arg0: i32) -> (i32, i32) {
    %c0_i32 = arith.constant 0 : i32
    %c0_i32_0 = arith.constant 0 : i32
    %c0_i32_1 = arith.constant 0 : i32
    return %c0_i32, %c0_i32_0 : i32, i32
  }
  func.func @transform_2(%arg0: i32) -> (i32, i32) {
    %c0_i32 = arith.constant 0 : i32
    %c0_i32_0 = arith.constant 0 : i32
    %c0_i32_1 = arith.constant 0 : i32
    return %c0_i32, %c0_i32_0 : i32, i32
  }
  func.func @transform_3(%arg0: i32) -> (i32, i32) {
    %c0_i32 = arith.constant 0 : i32
    %c0_i32_0 = arith.constant 0 : i32
    return %arg0, %c0_i32 : i32, i32
  }
}

</mosaic_0001>

<llo_original>
// kernel: encoder_forward.11
$region0: #{encoder_forward.11}
  #allocation0 [shape = 'u32[]', space=smem, size = 0x4, offset = 0x4, fixed_abs, tag = 'smem constant byte address 0x4 - core index']
  #allocation1 [shape = 'u32[144,128]{1,0:T(1,128)}', space=vmem, size = 0x12000, scoped, tag = 'internal scratch']
  %s0 = inlined_call_operand.vmem [shape: f32[16,32], index: 0, kind: input, shape index: {}]
  %s1 = inlined_call_operand.hbm [shape: f32[32,32], index: 1, kind: input, shape index: {}]
  %s2 = inlined_call_operand.hbm [shape: f32[1,32], index: 2, kind: input, shape index: {}]
  %s3 = inlined_call_operand.vmem [shape: f32[16,32], index: 3, kind: input, shape index: {}]
  %s4 = inlined_call_operand.vmem [shape: f32[16,32], index: 4, kind: output, shape index: {}]
  %s5 = sld [smem:[#allocation0]]
  $region34: #{encoder_forward.11} parent=0
    _
  %s7 = ssub.s32 1, %s5
  %s8 = scalar_select 0, %s7, %s5
  $region1: #{encoder_forward.11} parent=0
    #allocation2 [shape = 'u8[16384]{0}', space=vmem, size = 0x4000, scoped, tag = 'input window, operand 1, single buffered']
    #allocation3 [shape = 's32[1]{0}', space=sflag, size = 0x4, scoped, tag = 'scoped memory for encoder_forward.11']
    #allocation4 [shape = 'u8[512]{0}', space=vmem, size = 0x400, scoped, tag = 'input window, operand 2, single buffered']
    #allocation5 [shape = 's32[1]{0}', space=sflag, size = 0x4, scoped, tag = 'scoped memory for encoder_forward.11']
    %9 = vsyncpa [#allocation3], 0
    %10 = vsyncpa [#allocation5], 0
    // Predicated region
    $region2: #{encoder_forward.11} parent=1 // pred_check
      _
    $region3: #{encoder_forward.11} parent=1 // pred_check_branch
      %12 = sbr.rel (0) target = $region5
    $region4: #{encoder_forward.11} parent=1 // pred_region
      _
    $region5: #{encoder_forward.11} parent=1 // pred_fallthru
      _
    // Predicated region
    $region6: #{encoder_forward.11} parent=1 // pred_check
      _
    $region7: #{encoder_forward.11} parent=1 // pred_check_branch
      %14 = sbr.rel (0) target = $region9
    $region8: #{encoder_forward.11} parent=1 // pred_region
      %s16 = ssub.s32 512, 512
      %17 = vsyncadd [#allocation3], %s16
      %s18 = sshll.u32 [#allocation2], 4
      %s19 = int_to_ptr.vmem [resolvable:$true] %s18
      %24 = dma.hbm_to_vmem [thread:$0]  %s1, 512, %s19, [#allocation3], 128, 128, 8
    $region9: #{encoder_forward.11} parent=1 // pred_fallthru
      _
    // Predicated region
    $region10: #{encoder_forward.11} parent=1 // pred_check
      _
    $region11: #{encoder_forward.11} parent=1 // pred_check_branch
      %26 = sbr.rel (0) target = $region13
    $region12: #{encoder_forward.11} parent=1 // pred_region
      %s28 = ssub.s32 16, 16
      %29 = vsyncadd [#allocation5], %s28
      %s31 = sshll.u32 [#allocation4], 4
      %s32 = int_to_ptr.vmem [resolvable:$true] %s31
      %34 = dma.hbm_to_vmem [thread:$0]  %s2, 16, %s32, [#allocation5]
    $region13: #{encoder_forward.11} parent=1 // pred_fallthru
      _
    // Predicated region
    $region14: #{encoder_forward.11} parent=1 // pred_check
      _
    $region15: #{encoder_forward.11} parent=1 // pred_check_branch
      %36 = sbr.rel (0) target = $region17
    $region16: #{encoder_forward.11} parent=1 // pred_region
      _
    $region17: #{encoder_forward.11} parent=1 // pred_fallthru
      _
    // Predicated region
    $region18: #{encoder_forward.11} parent=1 // pred_check
      _
    $region19: #{encoder_forward.11} parent=1 // pred_check_branch
      %38 = sbr.rel (0) target = $region21
    $region20: #{encoder_forward.11} parent=1 // pred_region
      %39 = dma.done [#allocation3], 512
    $region21: #{encoder_forward.11} parent=1 // pred_fallthru
      _
    // Predicated region
    $region22: #{encoder_forward.11} parent=1 // pred_check
      _
    $region23: #{encoder_forward.11} parent=1 // pred_check_branch
      %41 = sbr.rel (0) target = $region25
    $region24: #{encoder_forward.11} parent=1 // pred_region
      %42 = dma.done [#allocation5], 16
    $region25: #{encoder_forward.11} parent=1 // pred_fallthru
      _
    %v44 = vld [vmem:[%s0] sm:$0xff]
    %v45 = vld [vmem:[%s0 + $0x8] sm:$0xff]
    %v46 = vpack.c.bf16 %v45, %v44
    %v47 = vld [vmem:[#allocation2] sm:$0xff]
    %v48 = vld [vmem:[#allocation2 + $0x8] sm:$0xff]
    %v49 = vld [vmem:[#allocation2 + $0x10] sm:$0xff]
    %v50 = vld [vmem:[#allocation2 + $0x18] sm:$0xff]
    %v51 = vpack.c.bf16 %v48, %v47
    %v52 = vpack.c.bf16 %v50, %v49
    %v53 = vld [vmem:[#allocation4] sm:$0x1]
    %v55 = vlaneseq
    %v56 = vshrl.u32 %v55, 7
    %v57 = vsub.s32 0, %v56
    %v58 = vrot.slane %v53, %v57
    %vm60 = vcmask 261120
    %v62 = vsel %vm60, %v46, 0
    %64 = vmatprep.subr.bf16.mxu0 0
    %65 = vmatpush1.bf16.msra.mxu0 %v51
    %66 = vmatprep.subr.bf16.mxu0 0
    %67 = vmatpush1.bf16.msra.mxu0 %v52
    %68 = vmatprep.subr.bf16.mxu0 0
    %69 = vmatpush1.bf16.msra.mxu0 0
    %70 = vmatprep.subr.bf16.mxu0 0
    %71 = vmatpush1.bf16.msra.mxu0 0
    %72 = vmatprep.subr.bf16.mxu0 0
    %73 = vmatpush1.bf16.msra.mxu0 0
    %74 = vmatprep.subr.bf16.mxu0 0
    %75 = vmatpush1.bf16.msra.mxu0 0
    %76 = vmatprep.subr.bf16.mxu0 0
    %77 = vmatpush1.bf16.msra.mxu0 0
    %78 = vmatprep.subr.bf16.mxu0 0
    %79 = vmatpush1.bf16.msra.mxu0 0
    %80 = vmatprep.subr.bf16.mxu0 0
    %81 = vmatpush1.bf16.msra.mxu0 0
    %82 = vmatprep.subr.bf16.mxu0 0
    %83 = vmatpush1.bf16.msra.mxu0 0
    %84 = vmatprep.subr.bf16.mxu0 0
    %85 = vmatpush1.bf16.msra.mxu0 0
    %86 = vmatprep.subr.bf16.mxu0 0
    %87 = vmatpush1.bf16.msra.mxu0 0
    %88 = vmatprep.subr.bf16.mxu0 0
    %89 = vmatpush1.bf16.msra.mxu0 0
    %90 = vmatprep.subr.bf16.mxu0 0
    %91 = vmatpush1.bf16.msra.mxu0 0
    %92 = vmatprep.subr.bf16.mxu0 0
    %93 = vmatpush1.bf16.msra.mxu0 0
    %94 = vmatprep.subr.bf16.mxu0 0
    %95 = vmatpush1.bf16.msra.mxu0 0
    %96 = vmatprep.mubr.bf16.mxu0 0
    %97 = vmatmul.mubr.bf16.gmra.mrb[0].mxu0 %v62
    %v98 = vpop.f32.mrb[0].mxu0
    %v99 = vadd.f32 %v58, %v98
    %v100 = vpop.f32.mrb[0].mxu0
    %v101 = vpop.f32.mrb[0].mxu0
    %v102 = vadd.f32 %v58, %v101
    %v103 = vpop.f32.mrb[0].mxu0
    %104 = vdwg.mxu0
    %v105 = vld [vmem:[%s3] sm:$0xff]
    %v106 = vld [vmem:[%s3 + $0x8] sm:$0xff]
    %v107 = vadd.f32 %v99, %v105
    %v108 = vadd.f32 %v102, %v106
    %109 = vst.msk [vmem:[%s4] sm:$0xff] %vm60, %v107
    %110 = vst.msk [vmem:[%s4 + $0x8] sm:$0xff] %vm60, %v108
    // Predicated region
    $region26: #{encoder_forward.11} parent=1 // pred_check
      _
    $region27: #{encoder_forward.11} parent=1 // pred_check_branch
      %112 = sbr.rel (0) target = $region29
    $region28: #{encoder_forward.11} parent=1 // pred_region
      _
    $region29: #{encoder_forward.11} parent=1 // pred_fallthru
      _
    // Predicated region
    $region30: #{encoder_forward.11} parent=1 // pred_check
      _
    $region31: #{encoder_forward.11} parent=1 // pred_check_branch
      %114 = sbr.rel (0) target = $region33
    $region32: #{encoder_forward.11} parent=1 // pred_region
      _
    $region33: #{encoder_forward.11} parent=1 // pred_fallthru
      _
    %115 = vsyncpa [#allocation3], 1
    %116 = vsyncpa [#allocation5], 1

// kernel: encoder_forward.9
$region0: #{encoder_forward.9}
  #allocation0 [shape = 'u32[]', space=smem, size = 0x4, offset = 0x4, fixed_abs, tag = 'smem constant byte address 0x4 - core index']
  #allocation1 [shape = 'u32[144,128]{1,0:T(1,128)}', space=vmem, size = 0x12000, scoped, tag = 'internal scratch']
  %s0 = inlined_call_operand.vmem [shape: f32[16,32], index: 0, kind: input, shape index: {}]
  %s1 = inlined_call_operand.hbm [shape: f32[1,32], index: 1, kind: input, shape index: {}]
  %s2 = inlined_call_operand.hbm [shape: f32[1,32], index: 2, kind: input, shape index: {}]
  %s3 = inlined_call_operand.hbm [shape: f32[32,96], index: 3, kind: input, shape index: {}]
  %s4 = inlined_call_operand.hbm [shape: f32[1,96], index: 4, kind: input, shape index: {}]
  %s5 = inlined_call_operand.vmem [shape: f32[16,96], index: 5, kind: output, shape index: {}]
  %s6 = sld [smem:[#allocation0]]
  $region46: #{encoder_forward.9} parent=0
    _
  %s8 = ssub.s32 1, %s6
  %s9 = scalar_select 0, %s8, %s6
  $region1: #{encoder_forward.9} parent=0
    #allocation2 [shape = 'u8[512]{0}', space=vmem, size = 0x400, scoped, tag = 'input window, operand 1, single buffered']
    #allocation3 [shape = 's32[1]{0}', space=sflag, size = 0x4, scoped, tag = 'scoped memory for encoder_forward.9']
    #allocation4 [shape = 'u8[512]{0}', space=vmem, size = 0x400, scoped, tag = 'input window, operand 2, single buffered']
    #allocation5 [shape = 's32[1]{0}', space=sflag, size = 0x4, scoped, tag = 'scoped memory for encoder_forward.9']
    #allocation6 [shape = 'u8[16384]{0}', space=vmem, size = 0x4000, scoped, tag = 'input window, operand 3, single buffered']
    #allocation7 [shape = 'u8[512]{0}', space=vmem, size = 0x400, scoped, tag = 'input window, operand 4, single buffered']
    #allocation8 [shape = 's32[1]{0}', space=sflag, size = 0x4, scoped, tag = 'scoped memory for encoder_forward.9']
    %10 = vsyncpa [#allocation3], 0
    %11 = vsyncpa [#allocation5], 0
    %12 = vsyncpa [#allocation8], 0
    // Predicated region
    $region2: #{encoder_forward.9} parent=1 // pred_check
      _
    $region3: #{encoder_forward.9} parent=1 // pred_check_branch
      %14 = sbr.rel (0) target = $region5
    $region4: #{encoder_forward.9} parent=1 // pred_region
      _
    $region5: #{encoder_forward.9} parent=1 // pred_fallthru
      _
    // Predicated region
    $region6: #{encoder_forward.9} parent=1 // pred_check
      _
    $region7: #{encoder_forward.9} parent=1 // pred_check_branch
      %16 = sbr.rel (0) target = $region9
    $region8: #{encoder_forward.9} parent=1 // pred_region
      %s18 = ssub.s32 16, 16
      %19 = vsyncadd [#allocation3], %s18
      %s21 = sshll.u32 [#allocation2], 4
      %s22 = int_to_ptr.vmem [resolvable:$true] %s21
      %24 = dma.hbm_to_vmem [thread:$0]  %s1, 16, %s22, [#allocation3]
    $region9: #{encoder_forward.9} parent=1 // pred_fallthru
      _
    // Predicated region
    $region10: #{encoder_forward.9} parent=1 // pred_check
      _
    $region11: #{encoder_forward.9} parent=1 // pred_check_branch
      %26 = sbr.rel (0) target = $region13
    $region12: #{encoder_forward.9} parent=1 // pred_region
      %s28 = ssub.s32 16, 16
      %29 = vsyncadd [#allocation5], %s28
      %s31 = sshll.u32 [#allocation4], 4
      %s32 = int_to_ptr.vmem [resolvable:$true] %s31
      %34 = dma.hbm_to_vmem [thread:$0]  %s2, 16, %s32, [#allocation5]
    $region13: #{encoder_forward.9} parent=1 // pred_fallthru
      _
    // Predicated region
    $region14: #{encoder_forward.9} parent=1 // pred_check
      _
    $region15: #{encoder_forward.9} parent=1 // pred_check_branch
      %36 = sbr.rel (0) target = $region17
    $region16: #{encoder_forward.9} parent=1 // pred_region
      %s38 = ssub.s32 512, 512
      %39 = vsyncadd [#allocation5], %s38
      %s40 = sshll.u32 [#allocation6], 4
      %s41 = int_to_ptr.vmem [resolvable:$true] %s40
      %46 = dma.hbm_to_vmem [thread:$0]  %s3, 512, %s41, [#allocation5], 128, 128, 8
    $region17: #{encoder_forward.9} parent=1 // pred_fallthru
      _
    // Predicated region
    $region18: #{encoder_forward.9} parent=1 // pred_check
      _
    $region19: #{encoder_forward.9} parent=1 // pred_check_branch
      %48 = sbr.rel (0) target = $region21
    $region20: #{encoder_forward.9} parent=1 // pred_region
      %s50 = ssub.s32 16, 16
      %51 = vsyncadd [#allocation8], %s50
      %s53 = sshll.u32 [#allocation7], 4
      %s54 = int_to_ptr.vmem [resolvable:$true] %s53
      %56 = dma.hbm_to_vmem [thread:$0]  %s4, 16, %s54, [#allocation8]
    $region21: #{encoder_forward.9} parent=1 // pred_fallthru
      _
    // Predicated region
    $region22: #{encoder_forward.9} parent=1 // pred_check
      _
    $region23: #{encoder_forward.9} parent=1 // pred_check_branch
      %58 = sbr.rel (0) target = $region25
    $region24: #{encoder_forward.9} parent=1 // pred_region
      %59 = dma.done [#allocation3], 16
    $region25: #{encoder_forward.9} parent=1 // pred_fallthru
      _
    // Predicated region
    $region26: #{encoder_forward.9} parent=1 // pred_check
      _
    $region27: #{encoder_forward.9} parent=1 // pred_check_branch
      %61 = sbr.rel (0) target = $region29
    $region28: #{encoder_forward.9} parent=1 // pred_region
      %62 = dma.done [#allocation5], 16
    $region29: #{encoder_forward.9} parent=1 // pred_fallthru
      _
    // Predicated region
    $region30: #{encoder_forward.9} parent=1 // pred_check
      _
    $region31: #{encoder_forward.9} parent=1 // pred_check_branch
      %64 = sbr.rel (0) target = $region33
    $region32: #{encoder_forward.9} parent=1 // pred_region
      %65 = dma.done [#allocation5], 512
    $region33: #{encoder_forward.9} parent=1 // pred_fallthru
      _
    // Predicated region
    $region34: #{encoder_forward.9} parent=1 // pred_check
      _
    $region35: #{encoder_forward.9} parent=1 // pred_check_branch
      %67 = sbr.rel (0) target = $region37
    $region36: #{encoder_forward.9} parent=1 // pred_region
      %68 = dma.done [#allocation8], 16
    $region37: #{encoder_forward.9} parent=1 // pred_fallthru
      _
    %v70 = vld [vmem:[%s0] sm:$0xff]
    %v71 = vld [vmem:[%s0 + $0x8] sm:$0xff]
    %v72 = vld [vmem:[#allocation2] sm:$0x1]
    %v73 = vld [vmem:[#allocation4] sm:$0x1]
    %vm74 = vcmask 261120
    %v75 = vsel %vm74, %v70, 0.0
    %76 = vadd.xlane.f32.xlu0 %v75
    %v77 = vpop.xlane.xlu0 %76
    %v78 = vsel %vm74, %v71, 0.0
    %79 = vadd.xlane.f32.xlu0 %v78
    %v80 = vpop.xlane.xlu0 %79
    %v81 = vrcp.pop 32.0
    %v82 = vmul.f32 %v77, %v81
    %v83 = vmul.f32 %v80, %v81
    %v84 = vsub.f32 %v70, %v82
    %v85 = vsub.f32 %v71, %v83
    %v86 = vmul.f32 %v84, %v84
    %v87 = vmul.f32 %v85, %v85
    %v88 = vsel %vm74, %v86, 0.0
    %89 = vadd.xlane.f32.xlu0 %v88
    %v90 = vpop.xlane.xlu0 %89
    %v91 = vsel %vm74, %v87, 0.0
    %92 = vadd.xlane.f32.xlu0 %v91
    %v93 = vpop.xlane.xlu0 %92
    %v94 = vrcp.pop 31.0
    %v95 = vmul.f32 %v90, %v94
    %v96 = vmul.f32 %v93, %v94
    %v98 = vlaneseq
    %v99 = vshrl.u32 %v98, 7
    %v100 = vsub.s32 0, %v99
    %v101 = vrot.slane %v72, %v100
    %v103 = vmul.f32 %v101, %v84
    %v104 = vmul.f32 %v101, %v85
    %v105 = vrsqrt.pop %v95
    %v106 = vmul.f32 %v95, %v105
    %vm107 = vcmp.eq.f32.partialorder %v95, inf
    %v108 = vsel %vm107, %v95, %v106
    %vm109 = vcmp.eq.f32.partialorder %v95, 0.0
    %v110 = vand.u32 %v95, 2147483648
    %v111 = vsel %vm109, %v110, %v108
    %v112 = vrsqrt.pop %v96
    %v113 = vmul.f32 %v96, %v112
    %vm114 = vcmp.eq.f32.partialorder %v96, inf
    %v115 = vsel %vm114, %v96, %v113
    %vm116 = vcmp.eq.f32.partialorder %v96, 0.0
    %v117 = vand.u32 %v96, 2147483648
    %v118 = vsel %vm116, %v117, %v115
    %v119 = vadd.f32 %v111, 1e-06
    %v120 = vadd.f32 %v118, 1e-06
    %v121 = vrcp.pop %v119
    %v122 = vmul.f32 %v103, %v121
    %v123 = vrcp.pop %v120
    %v124 = vmul.f32 %v104, %v123
    %v126 = vlaneseq
    %v127 = vshrl.u32 %v126, 7
    %v128 = vsub.s32 0, %v127
    %v129 = vrot.slane %v73, %v128
    %v131 = vadd.f32 %v122, %v129
    %v132 = vadd.f32 %v124, %v129
    %v133 = vpack.c.bf16 %v132, %v131
    %v134 = vld [vmem:[#allocation6] sm:$0xff]
    %v135 = vld [vmem:[#allocation6 + $0x8] sm:$0xff]
    %v136 = vld [vmem:[#allocation6 + $0x10] sm:$0xff]
    %v137 = vld [vmem:[#allocation6 + $0x18] sm:$0xff]
    %v138 = vpack.c.bf16 %v135, %v134
    %v139 = vpack.c.bf16 %v137, %v136
    %v140 = vld [vmem:[#allocation7] sm:$0x1]
    %v142 = vlaneseq
    %v143 = vshrl.u32 %v142, 7
    %v144 = vsub.s32 0, %v143
    %v145 = vrot.slane %v140, %v144
    %v148 = vsel %vm74, %v133, 0
    %150 = vmatprep.subr.bf16.mxu0 0
    %151 = vmatpush1.bf16.msra.mxu0 %v138
    %152 = vmatprep.subr.bf16.mxu0 0
    %153 = vmatpush1.bf16.msra.mxu0 %v139
    %154 = vmatprep.subr.bf16.mxu0 0
    %155 = vmatpush1.bf16.msra.mxu0 0
    %156 = vmatprep.subr.bf16.mxu0 0
    %157 = vmatpush1.bf16.msra.mxu0 0
    %158 = vmatprep.subr.bf16.mxu0 0
    %159 = vmatpush1.bf16.msra.mxu0 0
    %160 = vmatprep.subr.bf16.mxu0 0
    %161 = vmatpush1.bf16.msra.mxu0 0
    %162 = vmatprep.subr.bf16.mxu0 0
    %163 = vmatpush1.bf16.msra.mxu0 0
    %164 = vmatprep.subr.bf16.mxu0 0
    %165 = vmatpush1.bf16.msra.mxu0 0
    %166 = vmatprep.subr.bf16.mxu0 0
    %167 = vmatpush1.bf16.msra.mxu0 0
    %168 = vmatprep.subr.bf16.mxu0 0
    %169 = vmatpush1.bf16.msra.mxu0 0
    %170 = vmatprep.subr.bf16.mxu0 0
    %171 = vmatpush1.bf16.msra.mxu0 0
    %172 = vmatprep.subr.bf16.mxu0 0
    %173 = vmatpush1.bf16.msra.mxu0 0
    %174 = vmatprep.subr.bf16.mxu0 0
    %175 = vmatpush1.bf16.msra.mxu0 0
    %176 = vmatprep.subr.bf16.mxu0 0
    %177 = vmatpush1.bf16.msra.mxu0 0
    %178 = vmatprep.subr.bf16.mxu0 0
    %179 = vmatpush1.bf16.msra.mxu0 0
    %180 = vmatprep.subr.bf16.mxu0 0
    %181 = vmatpush1.bf16.msra.mxu0 0
    %182 = vmatprep.mubr.bf16.mxu0 0
    %183 = vmatmul.mubr.bf16.gmra.mrb[0].mxu0 %v148
    %v184 = vpop.f32.mrb[0].mxu0
    %v185 = vadd.f32 %v145, %v184
    %v186 = vpop.f32.mrb[0].mxu0
    %v187 = vpop.f32.mrb[0].mxu0
    %v188 = vadd.f32 %v145, %v187
    %v189 = vpop.f32.mrb[0].mxu0
    %190 = vdwg.mxu0
    %vm191 = vcmask 785408
    %192 = vst.msk [vmem:[%s5] sm:$0xff] %vm191, %v185
    %193 = vst.msk [vmem:[%s5 + $0x8] sm:$0xff] %vm191, %v188
    // Predicated region
    $region38: #{encoder_forward.9} parent=1 // pred_check
      _
    $region39: #{encoder_forward.9} parent=1 // pred_check_branch
      %195 = sbr.rel (0) target = $region41
    $region40: #{encoder_forward.9} parent=1 // pred_region
      _
    $region41: #{encoder_forward.9} parent=1 // pred_fallthru
      _
    // Predicated region
    $region42: #{encoder_forward.9} parent=1 // pred_check
      _
    $region43: #{encoder_forward.9} parent=1 // pred_check_branch
      %197 = sbr.rel (0) target = $region45
    $region44: #{encoder_forward.9} parent=1 // pred_region
      _
    $region45: #{encoder_forward.9} parent=1 // pred_fallthru
      _
    %198 = vsyncpa [#allocation3], 1
    %199 = vsyncpa [#allocation5], 1
    %200 = vsyncpa [#allocation8], 1

// kernel: encoder_forward.10
$region0: #{encoder_forward.10}
  #allocation0 [shape = 'u32[]', space=smem, size = 0x4, offset = 0x4, fixed_abs, tag = 'smem constant byte address 0x4 - core index']
  #allocation1 [shape = 'u32[144,128]{1,0:T(1,128)}', space=vmem, size = 0x12000, scoped, tag = 'internal scratch']
  %s0 = inlined_call_operand.vmem [shape: f32[2,8,96], index: 0, kind: input, shape index: {}]
  %s1 = inlined_call_operand.vmem [shape: s32[2,1,8], index: 1, kind: input, shape index: {}]
  %s2 = inlined_call_operand.vmem [shape: f32[2,8,32], index: 2, kind: output, shape index: {}]
  %s3 = sld [smem:[#allocation0]]
  $region41: #{encoder_forward.10} parent=0
    _
  %s5 = ssub.s32 1, %s3
  %s6 = scalar_select 0, %s5, %s3
  loop: start=0, step=1, limit=4
  $region2: #{encoder_forward.10} parent=0 // loop_pre_header
    _
  $region3: #{encoder_forward.10} parent=0 // loop_header
    %s8 = sphi 0, %s12
    %p9 = scmp.ge.s32.totalorder %s8, 4
    %s18 = sphi 0, %s20
    %s21 = sphi 0, %s18
    %s22 = sphi 0, %s21
    %s38 = sphi 0, %s22
    %s44 = sphi 0, %s46
    %s47 = sphi 0, %s44
    %s48 = sphi 0, %s47
    %s64 = sphi 0, %s48
    %s70 = sphi 0, %s72
    %s73 = sphi 0, %s70
    %s74 = sphi 0, %s73
    %s90 = sphi 0, %s74
  $region4: #{encoder_forward.10} parent=0 // loop_header_branch
    %11 = sbr.rel (%p9) target = $region8
  $region5: #{encoder_forward.10} parent=0 // loop_body
    %s13 = ssub.s32 %s8, 1
    %s14 = ssub.s32 %s8, 2
    %s15 = sadd.s32 %s8, 1
    %s16 = ssub.s32 %s8, %s15
    %p17 = scmp.eq.s32.totalorder %s16, 0
    %s19 = sadd.s32 %s18, 1
    %s20 = scalar_select %p17, %s18, %s19
    %p23 = pneg %p17
    %p24 = scmp.eq.s32.totalorder %s8, 1
    %p25 = por %p23, %p24
    %p26 = scmp.ne.s32.totalorder %s18, %s21
    %p27 = scmp.eq.s32.totalorder %s8, 0
    %p28 = por %p26, %p27
    %p29 = scmp.ne.s32.totalorder %s18, %s21
    %p30 = scmp.eq.s32.totalorder %s13, 1
    %p31 = por %p29, %p30
    %p32 = scmp.ne.s32.totalorder %s21, %s22
    %p33 = scmp.eq.s32.totalorder %s13, 0
    %p34 = por %p32, %p33
    %p35 = scmp.ne.s32.totalorder %s21, %s22
    %p36 = scmp.eq.s32.totalorder %s14, 1
    %p37 = por %p35, %p36
    %p39 = scmp.ne.s32.totalorder %s22, %s38
    %p40 = scmp.eq.s32.totalorder %s14, 0
    %p41 = por %p39, %p40
    %s42 = ssub.s32 %s8, %s15
    %p43 = scmp.eq.s32.totalorder %s42, 0
    %s45 = sadd.s32 %s44, 1
    %s46 = scalar_select %p43, %s44, %s45
    %p49 = pneg %p43
    %p50 = scmp.eq.s32.totalorder %s8, 1
    %p51 = por %p49, %p50
    %p52 = scmp.ne.s32.totalorder %s44, %s47
    %p53 = scmp.eq.s32.totalorder %s8, 0
    %p54 = por %p52, %p53
    %p55 = scmp.ne.s32.totalorder %s44, %s47
    %p56 = scmp.eq.s32.totalorder %s13, 1
    %p57 = por %p55, %p56
    %p58 = scmp.ne.s32.totalorder %s47, %s48
    %p59 = scmp.eq.s32.totalorder %s13, 0
    %p60 = por %p58, %p59
    %p61 = scmp.ne.s32.totalorder %s47, %s48
    %p62 = scmp.eq.s32.totalorder %s14, 1
    %p63 = por %p61, %p62
    %p65 = scmp.ne.s32.totalorder %s48, %s64
    %p66 = scmp.eq.s32.totalorder %s14, 0
    %p67 = por %p65, %p66
    %s68 = ssub.s32 %s8, %s15
    %p69 = scmp.eq.s32.totalorder %s68, 0
    %s71 = sadd.s32 %s70, 1
    %s72 = scalar_select %p69, %s70, %s71
    %p75 = pneg %p69
    %p76 = scmp.eq.s32.totalorder %s8, 1
    %p77 = por %p75, %p76
    %p78 = scmp.ne.s32.totalorder %s70, %s73
    %p79 = scmp.eq.s32.totalorder %s8, 0
    %p80 = por %p78, %p79
    %p81 = scmp.ne.s32.totalorder %s70, %s73
    %p82 = scmp.eq.s32.totalorder %s13, 1
    %p83 = por %p81, %p82
    %p84 = scmp.ne.s32.totalorder %s73, %s74
    %p85 = scmp.eq.s32.totalorder %s13, 0
    %p86 = por %p84, %p85
    %p87 = scmp.ne.s32.totalorder %s73, %s74
    %p88 = scmp.eq.s32.totalorder %s14, 1
    %p89 = por %p87, %p88
    %p91 = scmp.ne.s32.totalorder %s74, %s90
    %p92 = scmp.eq.s32.totalorder %s14, 0
    %p93 = por %p91, %p92
    %p94 = scmp.le.s32.totalorder 1, %s8
    %p95 = scmp.lt.s32.totalorder %s8, 3
    %p96 = pnand %p94, %p95
    %p97 = pneg %p96
    // Predicated region
    $region9: #{encoder_forward.10} parent=5 // pred_check
      _
    $region10: #{encoder_forward.10} parent=5 // pred_check_branch
      %99 = sbr.rel (%p96) target = $region12
    $region11: #{encoder_forward.10} parent=5 // pred_region
      %s100 = ssub.s32 %s8, 1
    $region12: #{encoder_forward.10} parent=5 // pred_fallthru
      _
    %p101 = scmp.lt.s32.totalorder %s8, 2
    // Predicated region
    $region13: #{encoder_forward.10} parent=5 // pred_check
      %p102 = pneg %p101
    $region14: #{encoder_forward.10} parent=5 // pred_check_branch
      %104 = sbr.rel (%p102) target = $region16
    $region15: #{encoder_forward.10} parent=5 // pred_region
      // Predicated region
      $region17: #{encoder_forward.10} parent=15 // pred_check
        %p105 = pneg %p28
      $region18: #{encoder_forward.10} parent=15 // pred_check_branch
        %107 = sbr.rel (%p105) target = $region20
      $region19: #{encoder_forward.10} parent=15 // pred_region
        %p108 = scmp.lt.s32.totalorder %s8, 1
        %s109 = scalar_select %p108, %s8, 1
        %s110 = smul.addr %s109, 8
        %s111 = scalar_lea.vmem %s0, %s110
      $region20: #{encoder_forward.10} parent=15 // pred_fallthru
        _
      // Predicated region
      $region21: #{encoder_forward.10} parent=15 // pred_check
        %p112 = pneg %p54
      $region22: #{encoder_forward.10} parent=15 // pred_check_branch
        %114 = sbr.rel (%p112) target = $region24
      $region23: #{encoder_forward.10} parent=15 // pred_region
        %p115 = scmp.lt.s32.totalorder %s8, 1
        %s116 = scalar_select %p115, %s8, 1
        %s117 = scalar_lea.vmem %s1, %s116
      $region24: #{encoder_forward.10} parent=15 // pred_fallthru
        _
    $region16: #{encoder_forward.10} parent=5 // pred_fallthru
      _
    %p118 = scmp.le.s32.totalorder 1, %s8
    %p119 = scmp.lt.s32.totalorder %s8, 3
    %p120 = pnand %p118, %p119
    %p121 = pneg %p120
    // Predicated region
    $region25: #{encoder_forward.10} parent=5 // pred_check
      _
    $region26: #{encoder_forward.10} parent=5 // pred_check_branch
      %123 = sbr.rel (%p120) target = $region28
    $region27: #{encoder_forward.10} parent=5 // pred_region
      %s124 = ssub.s32 %s8, 1
      %p125 = scmp.lt.s32.totalorder %s13, 1
      %s126 = scalar_select %p125, %s13, 1
      %s127 = smul.addr %s126, 8
      %s128 = scalar_lea.vmem %s0, %s127
      %p129 = pneg %p34
      %p130 = pneg %p31
      %p131 = scmp.lt.s32.totalorder %s13, 1
      %s132 = scalar_select %p131, %s13, 1
      %s133 = scalar_lea.vmem %s1, %s132
      %p134 = pneg %p60
      %p135 = pneg %p57
      %p136 = pneg %p86
      %p137 = pneg %p83
      %p138 = scmp.lt.s32.totalorder %s13, 1
      %s139 = scalar_select %p138, %s13, 1
      %s140 = smul.addr %s139, 8
      %s141 = scalar_lea.vmem %s2, %s140
      %p142 = scmp.lt.s32.totalorder %s13, 1
      %s143 = scalar_select %p142, %s13, 1
      %s144 = smul.addr %s143, 8
      %s145 = scalar_lea.vmem %s0, %s144
      %p146 = scmp.lt.s32.totalorder %s13, 1
      %s147 = scalar_select %p146, %s13, 1
      %s148 = scalar_lea.vmem %s1, %s147
      %p149 = scmp.lt.s32.totalorder %s13, 1
      %s150 = scalar_select %p149, %s13, 1
      %s151 = smul.addr %s150, 8
      %s152 = scalar_lea.vmem %s2, %s151
      %v154 = vld [vmem:[%s145] sm:$0xff]
      %v155 = vmul.f32 %v154, 0.35355338
      %v156 = vld [vmem:[%s148] sm:$0x1]
      %v157 = vpack.c.bf16 %v155, %v155
      %v158 = vpack.c.bf16 %v154, %v154
      %160 = vrot.lane.b32.xlu0 %v158, 96
      %v161 = vpop.permute.xlu0 %160
      %vm162 = vcmask 64512
      %v164 = vsel %vm162, %v157, 0
      %v167 = vsel %vm162, %v161, 0
      %169 = vmatprep.subr.bf16.mxu0 0
      %170 = vmatpush1.bf16.xpose.msra.mxu0 %v167
      %171 = vmatprep.subr.bf16.mxu0 0
      %172 = vmatpush1.bf16.xpose.msra.mxu0 0
      %173 = vmatprep.subr.bf16.mxu0 0
      %174 = vmatpush1.bf16.xpose.msra.mxu0 0
      %175 = vmatprep.subr.bf16.mxu0 0
      %176 = vmatpush1.bf16.xpose.msra.mxu0 0
      %177 = vmatprep.subr.bf16.mxu0 0
      %178 = vmatpush1.bf16.xpose.msra.mxu0 0
      %179 = vmatprep.subr.bf16.mxu0 0
      %180 = vmatpush1.bf16.xpose.msra.mxu0 0
      %181 = vmatprep.subr.bf16.mxu0 0
      %182 = vmatpush1.bf16.xpose.msra.mxu0 0
      %183 = vmatprep.subr.bf16.mxu0 0
      %184 = vmatpush1.bf16.xpose.msra.mxu0 0
      %185 = vmatprep.subr.bf16.mxu0 0
      %186 = vmatpush1.bf16.xpose.msra.mxu0 0
      %187 = vmatprep.subr.bf16.mxu0 0
      %188 = vmatpush1.bf16.xpose.msra.mxu0 0
      %189 = vmatprep.subr.bf16.mxu0 0
      %190 = vmatpush1.bf16.xpose.msra.mxu0 0
      %191 = vmatprep.subr.bf16.mxu0 0
      %192 = vmatpush1.bf16.xpose.msra.mxu0 0
      %193 = vmatprep.subr.bf16.mxu0 0
      %194 = vmatpush1.bf16.xpose.msra.mxu0 0
      %195 = vmatprep.subr.bf16.mxu0 0
      %196 = vmatpush1.bf16.xpose.msra.mxu0 0
      %197 = vmatprep.subr.bf16.mxu0 0
      %198 = vmatpush1.bf16.xpose.msra.mxu0 0
      %199 = vmatprep.subr.bf16.mxu0 0
      %200 = vmatpush1.bf16.xpose.msra.mxu0 0
      %201 = vmatprep.mubr.bf16.mxu0 0
      %202 = vmatmul.mubr.bf16.gmra.mrb[0].mxu0 %v164
      %v203 = vpop.f32.mrb[0].mxu0
      %v204 = vadd.f32 0.0, %v203
      %v205 = vpop.f32.mrb[0].mxu0
      %v206 = vpop.f32.mrb[0].mxu0
      %v207 = vpop.f32.mrb[0].mxu0
      %208 = vdwg.mxu0
      %vm209 = vcmp.eq.s32.totalorder %v156, 0
      %v210 = vsel %vm209, 1, 0
      %v211 = vlaneseq
      %v212 = vshrl.u32 %v211, 7
      %v213 = vsub.s32 0, %v212
      %v214 = vrot.slane %v210, %v213
      %vm215 = vcmp.eq.s32.totalorder %v214, 1
      %v216 = vsel %vm215, -1e+09, %v204
      %v217 = vsel %vm162, %v216, -inf
      %218 = vmax.xlane.f32.xlu0 %v217
      %v219 = vpop.xlane.xlu0 %218
      %v220 = vsub.f32 %v216, %v219
      %v221 = vmul.f32 %v220, 1.442695
      %v222 = vpow.pop %v221
      %v223 = vsel %vm162, %v222, 0.0
      %224 = vadd.xlane.f32.xlu0 %v223
      %v225 = vpop.xlane.xlu0 %224
      %v226 = vrcp.pop %v225
      %v227 = vmul.f32 %v222, %v226
      %v228 = vpack.c.bf16 %v227, %v227
      %229 = vrot.lane.b32.xlu0 %v158, 64
      %v230 = vpop.permute.xlu0 %229
      %v232 = vsel %vm162, %v228, 0
      %vm234 = vcmask 1043456
      %v236 = vsel %vm234, %v230, 0
      %238 = vmatprep.subr.bf16.mxu0 0
      %239 = vmatpush1.bf16.msra.mxu0 %v236
      %240 = vmatprep.subr.bf16.mxu0 0
      %241 = vmatpush1.bf16.msra.mxu0 0
      %242 = vmatprep.subr.bf16.mxu0 0
      %243 = vmatpush1.bf16.msra.mxu0 0
      %244 = vmatprep.subr.bf16.mxu0 0
      %245 = vmatpush1.bf16.msra.mxu0 0
      %246 = vmatprep.subr.bf16.mxu0 0
      %247 = vmatpush1.bf16.msra.mxu0 0
      %248 = vmatprep.subr.bf16.mxu0 0
      %249 = vmatpush1.bf16.msra.mxu0 0
      %250 = vmatprep.subr.bf16.mxu0 0
      %251 = vmatpush1.bf16.msra.mxu0 0
      %252 = vmatprep.subr.bf16.mxu0 0
      %253 = vmatpush1.bf16.msra.mxu0 0
      %254 = vmatprep.subr.bf16.mxu0 0
      %255 = vmatpush1.bf16.msra.mxu0 0
      %256 = vmatprep.subr.bf16.mxu0 0
      %257 = vmatpush1.bf16.msra.mxu0 0
      %258 = vmatprep.subr.bf16.mxu0 0
      %259 = vmatpush1.bf16.msra.mxu0 0
      %260 = vmatprep.subr.bf16.mxu0 0
      %261 = vmatpush1.bf16.msra.mxu0 0
      %262 = vmatprep.subr.bf16.mxu0 0
      %263 = vmatpush1.bf16.msra.mxu0 0
      %264 = vmatprep.subr.bf16.mxu0 0
      %265 = vmatpush1.bf16.msra.mxu0 0
      %266 = vmatprep.subr.bf16.mxu0 0
      %267 = vmatpush1.bf16.msra.mxu0 0
      %268 = vmatprep.subr.bf16.mxu0 0
      %269 = vmatpush1.bf16.msra.mxu0 0
      %270 = vmatprep.mubr.bf16.mxu0 0
      %271 = vmatmul.mubr.bf16.gmra.mrb[0].mxu0 %v232
      %v272 = vpop.f32.mrb[0].mxu0
      %v273 = vadd.f32 0.0, %v272
      %v274 = vpop.f32.mrb[0].mxu0
      %v275 = vpop.f32.mrb[0].mxu0
      %v276 = vpop.f32.mrb[0].mxu0
      %277 = vdwg.mxu0
      %279 = vrot.lane.b32.xlu0 %v157, 120
      %v280 = vpop.permute.xlu0 %279
      %281 = vrot.lane.b32.xlu0 %v158, 88
      %v282 = vpop.permute.xlu0 %281
      %v284 = vsel %vm162, %v280, 0
      %v287 = vsel %vm162, %v282, 0
      %289 = vmatprep.subr.bf16.mxu0 0
      %290 = vmatpush1.bf16.xpose.msra.mxu0 %v287
      %291 = vmatprep.subr.bf16.mxu0 0
      %292 = vmatpush1.bf16.xpose.msra.mxu0 0
      %293 = vmatprep.subr.bf16.mxu0 0
      %294 = vmatpush1.bf16.xpose.msra.mxu0 0
      %295 = vmatprep.subr.bf16.mxu0 0
      %296 = vmatpush1.bf16.xpose.msra.mxu0 0
      %297 = vmatprep.subr.bf16.mxu0 0
      %298 = vmatpush1.bf16.xpose.msra.mxu0 0
      %299 = vmatprep.subr.bf16.mxu0 0
      %300 = vmatpush1.bf16.xpose.msra.mxu0 0
      %301 = vmatprep.subr.bf16.mxu0 0
      %302 = vmatpush1.bf16.xpose.msra.mxu0 0
      %303 = vmatprep.subr.bf16.mxu0 0
      %304 = vmatpush1.bf16.xpose.msra.mxu0 0
      %305 = vmatprep.subr.bf16.mxu0 0
      %306 = vmatpush1.bf16.xpose.msra.mxu0 0
      %307 = vmatprep.subr.bf16.mxu0 0
      %308 = vmatpush1.bf16.xpose.msra.mxu0 0
      %309 = vmatprep.subr.bf16.mxu0 0
      %310 = vmatpush1.bf16.xpose.msra.mxu0 0
      %311 = vmatprep.subr.bf16.mxu0 0
      %312 = vmatpush1.bf16.xpose.msra.mxu0 0
      %313 = vmatprep.subr.bf16.mxu0 0
      %314 = vmatpush1.bf16.xpose.msra.mxu0 0
      %315 = vmatprep.subr.bf16.mxu0 0
      %316 = vmatpush1.bf16.xpose.msra.mxu0 0
      %317 = vmatprep.subr.bf16.mxu0 0
      %318 = vmatpush1.bf16.xpose.msra.mxu0 0
      %319 = vmatprep.subr.bf16.mxu0 0
      %320 = vmatpush1.bf16.xpose.msra.mxu0 0
      %321 = vmatprep.mubr.bf16.mxu0 0
      %322 = vmatmul.mubr.bf16.gmra.mrb[0].mxu0 %v284
      %v323 = vpop.f32.mrb[0].mxu0
      %v324 = vadd.f32 0.0, %v323
      %v325 = vpop.f32.mrb[0].mxu0
      %v326 = vpop.f32.mrb[0].mxu0
      %v327 = vpop.f32.mrb[0].mxu0
      %328 = vdwg.mxu0
      %v329 = vsel %vm215, -1e+09, %v324
      %v330 = vsel %vm162, %v329, -inf
      %331 = vmax.xlane.f32.xlu0 %v330
      %v332 = vpop.xlane.xlu0 %331
      %v333 = vsub.f32 %v329, %v332
      %v334 = vmul.f32 %v333, 1.442695
      %v335 = vpow.pop %v334
      %v336 = vsel %vm162, %v335, 0.0
      %337 = vadd.xlane.f32.xlu0 %v336
      %v338 = vpop.xlane.xlu0 %337
      %v339 = vrcp.pop %v338
      %v340 = vmul.f32 %v335, %v339
      %v341 = vpack.c.bf16 %v340, %v340
      %342 = vrot.lane.b32.xlu0 %v158, 56
      %v343 = vpop.permute.xlu0 %342
      %v345 = vsel %vm162, %v341, 0
      %v348 = vsel %vm234, %v343, 0
      %350 = vmatprep.subr.bf16.mxu0 0
      %351 = vmatpush1.bf16.msra.mxu0 %v348
      %352 = vmatprep.subr.bf16.mxu0 0
      %353 = vmatpush1.bf16.msra.mxu0 0
      %354 = vmatprep.subr.bf16.mxu0 0
      %355 = vmatpush1.bf16.msra.mxu0 0
      %356 = vmatprep.subr.bf16.mxu0 0
      %357 = vmatpush1.bf16.msra.mxu0 0
      %358 = vmatprep.subr.bf16.mxu0 0
      %359 = vmatpush1.bf16.msra.mxu0 0
      %360 = vmatprep.subr.bf16.mxu0 0
      %361 = vmatpush1.bf16.msra.mxu0 0
      %362 = vmatprep.subr.bf16.mxu0 0
      %363 = vmatpush1.bf16.msra.mxu0 0
      %364 = vmatprep.subr.bf16.mxu0 0
      %365 = vmatpush1.bf16.msra.mxu0 0
      %366 = vmatprep.subr.bf16.mxu0 0
      %367 = vmatpush1.bf16.msra.mxu0 0
      %368 = vmatprep.subr.bf16.mxu0 0
      %369 = vmatpush1.bf16.msra.mxu0 0
      %370 = vmatprep.subr.bf16.mxu0 0
      %371 = vmatpush1.bf16.msra.mxu0 0
      %372 = vmatprep.subr.bf16.mxu0 0
      %373 = vmatpush1.bf16.msra.mxu0 0
      %374 = vmatprep.subr.bf16.mxu0 0
      %375 = vmatpush1.bf16.msra.mxu0 0
      %376 = vmatprep.subr.bf16.mxu0 0
      %377 = vmatpush1.bf16.msra.mxu0 0
      %378 = vmatprep.subr.bf16.mxu0 0
      %379 = vmatpush1.bf16.msra.mxu0 0
      %380 = vmatprep.subr.bf16.mxu0 0
      %381 = vmatpush1.bf16.msra.mxu0 0
      %382 = vmatprep.mubr.bf16.mxu0 0
      %383 = vmatmul.mubr.bf16.gmra.mrb[0].mxu0 %v345
      %v384 = vpop.f32.mrb[0].mxu0
      %v385 = vadd.f32 0.0, %v384
      %v386 = vpop.f32.mrb[0].mxu0
      %v387 = vpop.f32.mrb[0].mxu0
      %v388 = vpop.f32.mrb[0].mxu0
      %389 = vdwg.mxu0
      %390 = vrot.lane.b32.xlu0 %v157, 112
      %v391 = vpop.permute.xlu0 %390
      %392 = vrot.lane.b32.xlu0 %v158, 80
      %v393 = vpop.permute.xlu0 %392
      %v395 = vsel %vm162, %v391, 0
      %v398 = vsel %vm162, %v393, 0
      %400 = vmatprep.subr.bf16.mxu0 0
      %401 = vmatpush1.bf16.xpose.msra.mxu0 %v398
      %402 = vmatprep.subr.bf16.mxu0 0
      %403 = vmatpush1.bf16.xpose.msra.mxu0 0
      %404 = vmatprep.subr.bf16.mxu0 0
      %405 = vmatpush1.bf16.xpose.msra.mxu0 0
      %406 = vmatprep.subr.bf16.mxu0 0
      %407 = vmatpush1.bf16.xpose.msra.mxu0 0
      %408 = vmatprep.subr.bf16.mxu0 0
      %409 = vmatpush1.bf16.xpose.msra.mxu0 0
      %410 = vmatprep.subr.bf16.mxu0 0
      %411 = vmatpush1.bf16.xpose.msra.mxu0 0
      %412 = vmatprep.subr.bf16.mxu0 0
      %413 = vmatpush1.bf16.xpose.msra.mxu0 0
      %414 = vmatprep.subr.bf16.mxu0 0
      %415 = vmatpush1.bf16.xpose.msra.mxu0 0
      %416 = vmatprep.subr.bf16.mxu0 0
      %417 = vmatpush1.bf16.xpose.msra.mxu0 0
      %418 = vmatprep.subr.bf16.mxu0 0
      %419 = vmatpush1.bf16.xpose.msra.mxu0 0
      %420 = vmatprep.subr.bf16.mxu0 0
      %421 = vmatpush1.bf16.xpose.msra.mxu0 0
      %422 = vmatprep.subr.bf16.mxu0 0
      %423 = vmatpush1.bf16.xpose.msra.mxu0 0
      %424 = vmatprep.subr.bf16.mxu0 0
      %425 = vmatpush1.bf16.xpose.msra.mxu0 0
      %426 = vmatprep.subr.bf16.mxu0 0
      %427 = vmatpush1.bf16.xpose.msra.mxu0 0
      %428 = vmatprep.subr.bf16.mxu0 0
      %429 = vmatpush1.bf16.xpose.msra.mxu0 0
      %430 = vmatprep.subr.bf16.mxu0 0
      %431 = vmatpush1.bf16.xpose.msra.mxu0 0
      %432 = vmatprep.mubr.bf16.mxu0 0
      %433 = vmatmul.mubr.bf16.gmra.mrb[0].mxu0 %v395
      %v434 = vpop.f32.mrb[0].mxu0
      %v435 = vadd.f32 0.0, %v434
      %v436 = vpop.f32.mrb[0].mxu0
      %v437 = vpop.f32.mrb[0].mxu0
      %v438 = vpop.f32.mrb[0].mxu0
      %439 = vdwg.mxu0
      %v440 = vsel %vm215, -1e+09, %v435
      %v441 = vsel %vm162, %v440, -inf
      %442 = vmax.xlane.f32.xlu0 %v441
      %v443 = vpop.xlane.xlu0 %442
      %v444 = vsub.f32 %v440, %v443
      %v445 = vmul.f32 %v444, 1.442695
      %v446 = vpow.pop %v445
      %v447 = vsel %vm162, %v446, 0.0
      %448 = vadd.xlane.f32.xlu0 %v447
      %v449 = vpop.xlane.xlu0 %448
      %v450 = vrcp.pop %v449
      %v451 = vmul.f32 %v446, %v450
      %v452 = vpack.c.bf16 %v451, %v451
      %453 = vrot.lane.b32.xlu0 %v158, 48
      %v454 = vpop.permute.xlu0 %453
      %v456 = vsel %vm162, %v452, 0
      %v459 = vsel %vm234, %v454, 0
      %461 = vmatprep.subr.bf16.mxu0 0
      %462 = vmatpush1.bf16.msra.mxu0 %v459
      %463 = vmatprep.subr.bf16.mxu0 0
      %464 = vmatpush1.bf16.msra.mxu0 0
      %465 = vmatprep.subr.bf16.mxu0 0
      %466 = vmatpush1.bf16.msra.mxu0 0
      %467 = vmatprep.subr.bf16.mxu0 0
      %468 = vmatpush1.bf16.msra.mxu0 0
      %469 = vmatprep.subr.bf16.mxu0 0
      %470 = vmatpush1.bf16.msra.mxu0 0
      %471 = vmatprep.subr.bf16.mxu0 0
      %472 = vmatpush1.bf16.msra.mxu0 0
      %473 = vmatprep.subr.bf16.mxu0 0
      %474 = vmatpush1.bf16.msra.mxu0 0
      %475 = vmatprep.subr.bf16.mxu0 0
      %476 = vmatpush1.bf16.msra.mxu0 0
      %477 = vmatprep.subr.bf16.mxu0 0
      %478 = vmatpush1.bf16.msra.mxu0 0
      %479 = vmatprep.subr.bf16.mxu0 0
      %480 = vmatpush1.bf16.msra.mxu0 0
      %481 = vmatprep.subr.bf16.mxu0 0
      %482 = vmatpush1.bf16.msra.mxu0 0
      %483 = vmatprep.subr.bf16.mxu0 0
      %484 = vmatpush1.bf16.msra.mxu0 0
      %485 = vmatprep.subr.bf16.mxu0 0
      %486 = vmatpush1.bf16.msra.mxu0 0
      %487 = vmatprep.subr.bf16.mxu0 0
      %488 = vmatpush1.bf16.msra.mxu0 0
      %489 = vmatprep.subr.bf16.mxu0 0
      %490 = vmatpush1.bf16.msra.mxu0 0
      %491 = vmatprep.subr.bf16.mxu0 0
      %492 = vmatpush1.bf16.msra.mxu0 0
      %493 = vmatprep.mubr.bf16.mxu0 0
      %494 = vmatmul.mubr.bf16.gmra.mrb[0].mxu0 %v456
      %v495 = vpop.f32.mrb[0].mxu0
      %v496 = vadd.f32 0.0, %v495
      %v497 = vpop.f32.mrb[0].mxu0
      %v498 = vpop.f32.mrb[0].mxu0
      %v499 = vpop.f32.mrb[0].mxu0
      %500 = vdwg.mxu0
      %501 = vrot.lane.b32.xlu0 %v157, 104
      %v502 = vpop.permute.xlu0 %501
      %503 = vrot.lane.b32.xlu0 %v158, 72
      %v504 = vpop.permute.xlu0 %503
      %v506 = vsel %vm162, %v502, 0
      %v509 = vsel %vm162, %v504, 0
      %511 = vmatprep.subr.bf16.mxu0 0
      %512 = vmatpush1.bf16.xpose.msra.mxu0 %v509
      %513 = vmatprep.subr.bf16.mxu0 0
      %514 = vmatpush1.bf16.xpose.msra.mxu0 0
      %515 = vmatprep.subr.bf16.mxu0 0
      %516 = vmatpush1.bf16.xpose.msra.mxu0 0
      %517 = vmatprep.subr.bf16.mxu0 0
      %518 = vmatpush1.bf16.xpose.msra.mxu0 0
      %519 = vmatprep.subr.bf16.mxu0 0
      %520 = vmatpush1.bf16.xpose.msra.mxu0 0
      %521 = vmatprep.subr.bf16.mxu0 0
      %522 = vmatpush1.bf16.xpose.msra.mxu0 0
      %523 = vmatprep.subr.bf16.mxu0 0
      %524 = vmatpush1.bf16.xpose.msra.mxu0 0
      %525 = vmatprep.subr.bf16.mxu0 0
      %526 = vmatpush1.bf16.xpose.msra.mxu0 0
      %527 = vmatprep.subr.bf16.mxu0 0
      %528 = vmatpush1.bf16.xpose.msra.mxu0 0
      %529 = vmatprep.subr.bf16.mxu0 0
      %530 = vmatpush1.bf16.xpose.msra.mxu0 0
      %531 = vmatprep.subr.bf16.mxu0 0
      %532 = vmatpush1.bf16.xpose.msra.mxu0 0
      %533 = vmatprep.subr.bf16.mxu0 0
      %534 = vmatpush1.bf16.xpose.msra.mxu0 0
      %535 = vmatprep.subr.bf16.mxu0 0
      %536 = vmatpush1.bf16.xpose.msra.mxu0 0
      %537 = vmatprep.subr.bf16.mxu0 0
      %538 = vmatpush1.bf16.xpose.msra.mxu0 0
      %539 = vmatprep.subr.bf16.mxu0 0
      %540 = vmatpush1.bf16.xpose.msra.mxu0 0
      %541 = vmatprep.subr.bf16.mxu0 0
      %542 = vmatpush1.bf16.xpose.msra.mxu0 0
      %543 = vmatprep.mubr.bf16.mxu0 0
      %544 = vmatmul.mubr.bf16.gmra.mrb[0].mxu0 %v506
      %v545 = vpop.f32.mrb[0].mxu0
      %v546 = vadd.f32 0.0, %v545
      %v547 = vpop.f32.mrb[0].mxu0
      %v548 = vpop.f32.mrb[0].mxu0
      %v549 = vpop.f32.mrb[0].mxu0
      %550 = vdwg.mxu0
      %v551 = vsel %vm215, -1e+09, %v546
      %v552 = vsel %vm162, %v551, -inf
      %553 = vmax.xlane.f32.xlu0 %v552
      %v554 = vpop.xlane.xlu0 %553
      %v555 = vsub.f32 %v551, %v554
      %v556 = vmul.f32 %v555, 1.442695
      %v557 = vpow.pop %v556
      %v558 = vsel %vm162, %v557, 0.0
      %559 = vadd.xlane.f32.xlu0 %v558
      %v560 = vpop.xlane.xlu0 %559
      %v561 = vrcp.pop %v560
      %v562 = vmul.f32 %v557, %v561
      %v563 = vpack.c.bf16 %v562, %v562
      %564 = vrot.lane.b32.xlu0 %v158, 40
      %v565 = vpop.permute.xlu0 %564
      %v567 = vsel %vm162, %v563, 0
      %v570 = vsel %vm234, %v565, 0
      %572 = vmatprep.subr.bf16.mxu0 0
      %573 = vmatpush1.bf16.msra.mxu0 %v570
      %574 = vmatprep.subr.bf16.mxu0 0
      %575 = vmatpush1.bf16.msra.mxu0 0
      %576 = vmatprep.subr.bf16.mxu0 0
      %577 = vmatpush1.bf16.msra.mxu0 0
      %578 = vmatprep.subr.bf16.mxu0 0
      %579 = vmatpush1.bf16.msra.mxu0 0
      %580 = vmatprep.subr.bf16.mxu0 0
      %581 = vmatpush1.bf16.msra.mxu0 0
      %582 = vmatprep.subr.bf16.mxu0 0
      %583 = vmatpush1.bf16.msra.mxu0 0
      %584 = vmatprep.subr.bf16.mxu0 0
      %585 = vmatpush1.bf16.msra.mxu0 0
      %586 = vmatprep.subr.bf16.mxu0 0
      %587 = vmatpush1.bf16.msra.mxu0 0
      %588 = vmatprep.subr.bf16.mxu0 0
      %589 = vmatpush1.bf16.msra.mxu0 0
      %590 = vmatprep.subr.bf16.mxu0 0
      %591 = vmatpush1.bf16.msra.mxu0 0
      %592 = vmatprep.subr.bf16.mxu0 0
      %593 = vmatpush1.bf16.msra.mxu0 0
      %594 = vmatprep.subr.bf16.mxu0 0
      %595 = vmatpush1.bf16.msra.mxu0 0
      %596 = vmatprep.subr.bf16.mxu0 0
      %597 = vmatpush1.bf16.msra.mxu0 0
      %598 = vmatprep.subr.bf16.mxu0 0
      %599 = vmatpush1.bf16.msra.mxu0 0
      %600 = vmatprep.subr.bf16.mxu0 0
      %601 = vmatpush1.bf16.msra.mxu0 0
      %602 = vmatprep.subr.bf16.mxu0 0
      %603 = vmatpush1.bf16.msra.mxu0 0
      %604 = vmatprep.mubr.bf16.mxu0 0
      %605 = vmatmul.mubr.bf16.gmra.mrb[0].mxu0 %v567
      %v606 = vpop.f32.mrb[0].mxu0
      %v607 = vadd.f32 0.0, %v606
      %v608 = vpop.f32.mrb[0].mxu0
      %v609 = vpop.f32.mrb[0].mxu0
      %v610 = vpop.f32.mrb[0].mxu0
      %611 = vdwg.mxu0
      %613 = vrot.lane.b32.xlu0 %v385, 8
      %v614 = vpop.permute.xlu0 %613
      %617 = vrot.lane.b32.xlu0 %v496, 16
      %v618 = vpop.permute.xlu0 %617
      %621 = vrot.lane.b32.xlu0 %v607, 24
      %v622 = vpop.permute.xlu0 %621
      %v624 = vsel %vm162, %v273, %v614
      %vm625 = vcmask 130048
      %v626 = vsel %vm625, %v624, %v618
      %vm627 = vcmask 195584
      %v628 = vsel %vm627, %v626, %v622
      %vm629 = vcmask 261120
      %630 = vst.msk [vmem:[%s152] sm:$0xff] %vm629, %v628
      %p631 = scmp.lt.s32.totalorder %s13, 1
      %s632 = scalar_select %p631, %s13, 1
      %s633 = smul.addr %s632, 8
      %s634 = scalar_lea.vmem %s2, %s633
      // Predicated region
      $region29: #{encoder_forward.10} parent=27 // pred_check
        %p635 = pneg %p83
      $region30: #{encoder_forward.10} parent=27 // pred_check_branch
        %637 = sbr.rel (%p635) target = $region32
      $region31: #{encoder_forward.10} parent=27 // pred_region
        _
      $region32: #{encoder_forward.10} parent=27 // pred_fallthru
        _
    $region28: #{encoder_forward.10} parent=5 // pred_fallthru
      _
    %p638 = scmp.le.s32.totalorder 2, %s8
    // Predicated region
    $region33: #{encoder_forward.10} parent=5 // pred_check
      %p639 = pneg %p638
    $region34: #{encoder_forward.10} parent=5 // pred_check_branch
      %641 = sbr.rel (%p639) target = $region36
    $region35: #{encoder_forward.10} parent=5 // pred_region
      %s642 = ssub.s32 %s8, 2
      // Predicated region
      $region37: #{encoder_forward.10} parent=35 // pred_check
        %p643 = pneg %p89
      $region38: #{encoder_forward.10} parent=35 // pred_check_branch
        %645 = sbr.rel (%p643) target = $region40
      $region39: #{encoder_forward.10} parent=35 // pred_region
        %p646 = scmp.lt.s32.totalorder %s14, 1
        %s647 = scalar_select %p646, %s14, 1
        %s648 = smul.addr %s647, 8
        %s649 = scalar_lea.vmem %s2, %s648
      $region40: #{encoder_forward.10} parent=35 // pred_fallthru
        _
    $region36: #{encoder_forward.10} parent=5 // pred_fallthru
      _
  $region6: #{encoder_forward.10} parent=0 // loop_footer
    %s12 = sadd.s32 1, %s8
  $region7: #{encoder_forward.10} parent=0 // loop_footer_branch
    %7 = sbr.rel target = $region3
  $region8: #{encoder_forward.10} parent=0 // loop_exit
    _

// kernel: encoder_forward.15
$region0: #{encoder_forward.15}
  #allocation0 [shape = 'u32[]', space=smem, size = 0x4, offset = 0x4, fixed_abs, tag = 'smem constant byte address 0x4 - core index']
  #allocation1 [shape = 'u32[144,128]{1,0:T(1,128)}', space=vmem, size = 0x12000, scoped, tag = 'internal scratch']
  %s0 = inlined_call_operand.vmem [shape: f32[16,32], index: 0, kind: input, shape index: {}]
  %s1 = inlined_call_operand.vmem [shape: f32[32,32], index: 1, kind: input, shape index: {}]
  %s2 = inlined_call_operand.vmem [shape: f32[1,32], index: 2, kind: input, shape index: {}]
  %s3 = inlined_call_operand.vmem [shape: f32[16,32], index: 3, kind: input, shape index: {}]
  %s4 = inlined_call_operand.vmem [shape: f32[16,32], index: 4, kind: output, shape index: {}]
  %s5 = sld [smem:[#allocation0]]
  $region26: #{encoder_forward.15} parent=0
    _
  %s7 = ssub.s32 1, %s5
  %s8 = scalar_select 0, %s7, %s5
  // Predicated region
  $region2: #{encoder_forward.15} parent=0 // pred_check
    _
  $region3: #{encoder_forward.15} parent=0 // pred_check_branch
    %10 = sbr.rel (0) target = $region5
  $region4: #{encoder_forward.15} parent=0 // pred_region
    _
  $region5: #{encoder_forward.15} parent=0 // pred_fallthru
    _
  // Predicated region
  $region6: #{encoder_forward.15} parent=0 // pred_check
    _
  $region7: #{encoder_forward.15} parent=0 // pred_check_branch
    %12 = sbr.rel (0) target = $region9
  $region8: #{encoder_forward.15} parent=0 // pred_region
    _
  $region9: #{encoder_forward.15} parent=0 // pred_fallthru
    _
  // Predicated region
  $region10: #{encoder_forward.15} parent=0 // pred_check
    _
  $region11: #{encoder_forward.15} parent=0 // pred_check_branch
    %14 = sbr.rel (0) target = $region13
  $region12: #{encoder_forward.15} parent=0 // pred_region
    _
  $region13: #{encoder_forward.15} parent=0 // pred_fallthru
    _
  // Predicated region
  $region14: #{encoder_forward.15} parent=0 // pred_check
    _
  $region15: #{encoder_forward.15} parent=0 // pred_check_branch
    %16 = sbr.rel (0) target = $region17
  $region16: #{encoder_forward.15} parent=0 // pred_region
    _
  $region17: #{encoder_forward.15} parent=0 // pred_fallthru
    _
  %v18 = vld [vmem:[%s0] sm:$0xff]
  %v19 = vld [vmem:[%s0 + $0x8] sm:$0xff]
  %v20 = vpack.c.bf16 %v19, %v18
  %v21 = vld [vmem:[%s1] sm:$0xff]
  %v22 = vld [vmem:[%s1 + $0x8] sm:$0xff]
  %v23 = vld [vmem:[%s1 + $0x10] sm:$0xff]
  %v24 = vld [vmem:[%s1 + $0x18] sm:$0xff]
  %v25 = vpack.c.bf16 %v22, %v21
  %v26 = vpack.c.bf16 %v24, %v23
  %v27 = vld [vmem:[%s2] sm:$0x1]
  %v29 = vlaneseq
  %v30 = vshrl.u32 %v29, 7
  %v31 = vsub.s32 0, %v30
  %v32 = vrot.slane %v27, %v31
  %vm34 = vcmask 261120
  %v36 = vsel %vm34, %v20, 0
  %38 = vmatprep.subr.bf16.mxu0 0
  %39 = vmatpush1.bf16.msra.mxu0 %v25
  %40 = vmatprep.subr.bf16.mxu0 0
  %41 = vmatpush1.bf16.msra.mxu0 %v26
  %42 = vmatprep.subr.bf16.mxu0 0
  %43 = vmatpush1.bf16.msra.mxu0 0
  %44 = vmatprep.subr.bf16.mxu0 0
  %45 = vmatpush1.bf16.msra.mxu0 0
  %46 = vmatprep.subr.bf16.mxu0 0
  %47 = vmatpush1.bf16.msra.mxu0 0
  %48 = vmatprep.subr.bf16.mxu0 0
  %49 = vmatpush1.bf16.msra.mxu0 0
  %50 = vmatprep.subr.bf16.mxu0 0
  %51 = vmatpush1.bf16.msra.mxu0 0
  %52 = vmatprep.subr.bf16.mxu0 0
  %53 = vmatpush1.bf16.msra.mxu0 0
  %54 = vmatprep.subr.bf16.mxu0 0
  %55 = vmatpush1.bf16.msra.mxu0 0
  %56 = vmatprep.subr.bf16.mxu0 0
  %57 = vmatpush1.bf16.msra.mxu0 0
  %58 = vmatprep.subr.bf16.mxu0 0
  %59 = vmatpush1.bf16.msra.mxu0 0
  %60 = vmatprep.subr.bf16.mxu0 0
  %61 = vmatpush1.bf16.msra.mxu0 0
  %62 = vmatprep.subr.bf16.mxu0 0
  %63 = vmatpush1.bf16.msra.mxu0 0
  %64 = vmatprep.subr.bf16.mxu0 0
  %65 = vmatpush1.bf16.msra.mxu0 0
  %66 = vmatprep.subr.bf16.mxu0 0
  %67 = vmatpush1.bf16.msra.mxu0 0
  %68 = vmatprep.subr.bf16.mxu0 0
  %69 = vmatpush1.bf16.msra.mxu0 0
  %70 = vmatprep.mubr.bf16.mxu0 0
  %71 = vmatmul.mubr.bf16.gmra.mrb[0].mxu0 %v36
  %v72 = vpop.f32.mrb[0].mxu0
  %v73 = vadd.f32 %v32, %v72
  %v74 = vpop.f32.mrb[0].mxu0
  %v75 = vpop.f32.mrb[0].mxu0
  %v76 = vadd.f32 %v32, %v75
  %v77 = vpop.f32.mrb[0].mxu0
  %78 = vdwg.mxu0
  %v79 = vld [vmem:[%s3] sm:$0xff]
  %v80 = vld [vmem:[%s3 + $0x8] sm:$0xff]
  %v81 = vadd.f32 %v73, %v79
  %v82 = vadd.f32 %v76, %v80
  %83 = vst.msk [vmem:[%s4] sm:$0xff] %vm34, %v81
  %84 = vst.msk [vmem:[%s4 + $0x8] sm:$0xff] %vm34, %v82
  // Predicated region
  $region18: #{encoder_forward.15} parent=0 // pred_check
    _
  $region19: #{encoder_forward.15} parent=0 // pred_check_branch
    %86 = sbr.rel (0) target = $region21
  $region20: #{encoder_forward.15} parent=0 // pred_region
    _
  $region21: #{encoder_forward.15} parent=0 // pred_fallthru
    _
  // Predicated region
  $region22: #{encoder_forward.15} parent=0 // pred_check
    _
  $region23: #{encoder_forward.15} parent=0 // pred_check_branch
    %88 = sbr.rel (0) target = $region25
  $region24: #{encoder_forward.15} parent=0 // pred_region
    _
  $region25: #{encoder_forward.15} parent=0 // pred_fallthru
    _

// kernel: encoder_forward.12
$region0: #{encoder_forward.12}
  #allocation0 [shape = 'u32[]', space=smem, size = 0x4, offset = 0x4, fixed_abs, tag = 'smem constant byte address 0x4 - core index']
  #allocation1 [shape = 'u32[144,128]{1,0:T(1,128)}', space=vmem, size = 0x12000, scoped, tag = 'internal scratch']
  #allocation2 [shape = 'f32[16,32]{1,0:T(8,128)}', space=vmem, size = 0x2000, scoped, tag = 'scratch operand']
  #allocation3 [shape = 'f32[16,32]{1,0:T(8,128)}', space=vmem, size = 0x2000, scoped, tag = 'scratch operand']
  %s0 = inlined_call_operand.vmem [shape: f32[16,32], index: 0, kind: input, shape index: {}]
  %s1 = inlined_call_operand.vmem [shape: f32[1,32], index: 1, kind: input, shape index: {}]
  %s2 = inlined_call_operand.vmem [shape: f32[1,32], index: 2, kind: input, shape index: {}]
  %s3 = inlined_call_operand.vmem [shape: f32[32,2048], index: 3, kind: input, shape index: {}]
  %s4 = inlined_call_operand.vmem [shape: f32[1,2048], index: 4, kind: input, shape index: {}]
  %s5 = inlined_call_operand.vmem [shape: f32[2048,32], index: 5, kind: input, shape index: {}]
  %s6 = inlined_call_operand.vmem [shape: f32[1,32], index: 6, kind: input, shape index: {}]
  %s7 = inlined_call_operand.vmem [shape: f32[16,32], index: 7, kind: output, shape index: {}]
  %s8 = sld [smem:[#allocation0]]
  $region92: #{encoder_forward.12} parent=0
    _
  %s10 = ssub.s32 1, %s8
  %s11 = scalar_select 0, %s10, %s8
  $region1: #{encoder_forward.12} parent=0
    #allocation4 [shape = 'u8[131072]{0}', space=vmem, size = 0x20000, scoped, tag = 'input window, operand 3']
    loop: start=0, step=1, limit=6
    $region2: #{encoder_forward.12} parent=1 // loop_pre_header
      _
    $region3: #{encoder_forward.12} parent=1 // loop_header
      %s13 = sphi 0, %s17
      %p14 = scmp.ge.s32.totalorder %s13, 6
      %s20 = sphi 0, %s32
      %s21 = sphi 0, %s28
      %s22 = sphi 0, %s20
      %s23 = sphi 0, %s21
      %s24 = sphi 0, %s22
      %s25 = sphi 0, %s23
      %s35 = sphi 0, %s37
      %s38 = sphi 0, %s35
      %s39 = sphi 0, %s38
      %s55 = sphi 0, %s39
      %s59 = sphi 0, %s59
      %s61 = sphi 0, %s59
      %s62 = sphi 0, %s61
      %s76 = sphi 0, %s62
      %s80 = sphi 0, %s80
      %s82 = sphi 0, %s80
      %s83 = sphi 0, %s82
      %s97 = sphi 0, %s83
      %s103 = sphi 0, %s105
      %s106 = sphi 0, %s103
      %s107 = sphi 0, %s106
      %s123 = sphi 0, %s107
      %s129 = sphi 0, %s131
      %s132 = sphi 0, %s129
      %s133 = sphi 0, %s132
      %s149 = sphi 0, %s133
      %s155 = sphi 0, %s157
      %s158 = sphi 0, %s155
      %s159 = sphi 0, %s158
      %s175 = sphi 0, %s159
      %s179 = sphi 0, %s179
      %s181 = sphi 0, %s179
      %s182 = sphi 0, %s181
      %s196 = sphi 0, %s182
      %s202 = sphi 0, %s204
      %s205 = sphi 0, %s202
      %s206 = sphi 0, %s205
      %s222 = sphi 0, %s206
    $region4: #{encoder_forward.12} parent=1 // loop_header_branch
      %16 = sbr.rel (%p14) target = $region8
    $region5: #{encoder_forward.12} parent=1 // loop_body
      %s18 = ssub.s32 %s13, 1
      %s19 = ssub.s32 %s13, 2
      %s26 = sadd.s32 1, %s21
      %p27 = scmp.ge.s32.totalorder %s26, 4
      %s28 = scalar_select %p27, 0, %s26
      %s29 = sadd.s32 1, %s20
      %s30 = scalar_select %p27, %s29, %s20
      %p31 = scmp.ge.s32.totalorder %s30, 1
      %s32 = scalar_select %p31, 0, %s30
      %s33 = ssub.s32 %s20, %s32
      %p34 = scmp.eq.s32.totalorder %s33, 0
      %s36 = sadd.s32 %s35, 1
      %s37 = scalar_select %p34, %s35, %s36
      %p40 = pneg %p34
      %p41 = scmp.eq.s32.totalorder %s13, 3
      %p42 = por %p40, %p41
      %p43 = scmp.ne.s32.totalorder %s35, %s38
      %p44 = scmp.eq.s32.totalorder %s13, 0
      %p45 = por %p43, %p44
      %p46 = scmp.ne.s32.totalorder %s35, %s38
      %p47 = scmp.eq.s32.totalorder %s18, 3
      %p48 = por %p46, %p47
      %p49 = scmp.ne.s32.totalorder %s38, %s39
      %p50 = scmp.eq.s32.totalorder %s18, 0
      %p51 = por %p49, %p50
      %p52 = scmp.ne.s32.totalorder %s38, %s39
      %p53 = scmp.eq.s32.totalorder %s19, 3
      %p54 = por %p52, %p53
      %p56 = scmp.ne.s32.totalorder %s39, %s55
      %p57 = scmp.eq.s32.totalorder %s19, 0
      %p58 = por %p56, %p57
      %s60 = sadd.s32 %s59, 1
      %p63 = scmp.eq.s32.totalorder %s13, 3
      %p64 = scmp.ne.s32.totalorder %s59, %s61
      %p65 = scmp.eq.s32.totalorder %s13, 0
      %p66 = por %p64, %p65
      %p67 = scmp.ne.s32.totalorder %s59, %s61
      %p68 = scmp.eq.s32.totalorder %s18, 3
      %p69 = por %p67, %p68
      %p70 = scmp.ne.s32.totalorder %s61, %s62
      %p71 = scmp.eq.s32.totalorder %s18, 0
      %p72 = por %p70, %p71
      %p73 = scmp.ne.s32.totalorder %s61, %s62
      %p74 = scmp.eq.s32.totalorder %s19, 3
      %p75 = por %p73, %p74
      %p77 = scmp.ne.s32.totalorder %s62, %s76
      %p78 = scmp.eq.s32.totalorder %s19, 0
      %p79 = por %p77, %p78
      %s81 = sadd.s32 %s80, 1
      %p84 = scmp.eq.s32.totalorder %s13, 3
      %p85 = scmp.ne.s32.totalorder %s80, %s82
      %p86 = scmp.eq.s32.totalorder %s13, 0
      %p87 = por %p85, %p86
      %p88 = scmp.ne.s32.totalorder %s80, %s82
      %p89 = scmp.eq.s32.totalorder %s18, 3
      %p90 = por %p88, %p89
      %p91 = scmp.ne.s32.totalorder %s82, %s83
      %p92 = scmp.eq.s32.totalorder %s18, 0
      %p93 = por %p91, %p92
      %p94 = scmp.ne.s32.totalorder %s82, %s83
      %p95 = scmp.eq.s32.totalorder %s19, 3
      %p96 = por %p94, %p95
      %p98 = scmp.ne.s32.totalorder %s83, %s97
      %p99 = scmp.eq.s32.totalorder %s19, 0
      %p100 = por %p98, %p99
      %s101 = ssub.s32 %s21, %s28
      %p102 = scmp.eq.s32.totalorder %s101, 0
      %s104 = sadd.s32 %s103, 1
      %s105 = scalar_select %p102, %s103, %s104
      %p108 = pneg %p102
      %p109 = scmp.eq.s32.totalorder %s13, 3
      %p110 = por %p108, %p109
      %p111 = scmp.ne.s32.totalorder %s103, %s106
      %p112 = scmp.eq.s32.totalorder %s13, 0
      %p113 = por %p111, %p112
      %p114 = scmp.ne.s32.totalorder %s103, %s106
      %p115 = scmp.eq.s32.totalorder %s18, 3
      %p116 = por %p114, %p115
      %p117 = scmp.ne.s32.totalorder %s106, %s107
      %p118 = scmp.eq.s32.totalorder %s18, 0
      %p119 = por %p117, %p118
      %p120 = scmp.ne.s32.totalorder %s106, %s107
      %p121 = scmp.eq.s32.totalorder %s19, 3
      %p122 = por %p120, %p121
      %p124 = scmp.ne.s32.totalorder %s107, %s123
      %p125 = scmp.eq.s32.totalorder %s19, 0
      %p126 = por %p124, %p125
      %s127 = ssub.s32 %s21, %s28
      %p128 = scmp.eq.s32.totalorder %s127, 0
      %s130 = sadd.s32 %s129, 1
      %s131 = scalar_select %p128, %s129, %s130
      %p134 = pneg %p128
      %p135 = scmp.eq.s32.totalorder %s13, 3
      %p136 = por %p134, %p135
      %p137 = scmp.ne.s32.totalorder %s129, %s132
      %p138 = scmp.eq.s32.totalorder %s13, 0
      %p139 = por %p137, %p138
      %p140 = scmp.ne.s32.totalorder %s129, %s132
      %p141 = scmp.eq.s32.totalorder %s18, 3
      %p142 = por %p140, %p141
      %p143 = scmp.ne.s32.totalorder %s132, %s133
      %p144 = scmp.eq.s32.totalorder %s18, 0
      %p145 = por %p143, %p144
      %p146 = scmp.ne.s32.totalorder %s132, %s133
      %p147 = scmp.eq.s32.totalorder %s19, 3
      %p148 = por %p146, %p147
      %p150 = scmp.ne.s32.totalorder %s133, %s149
      %p151 = scmp.eq.s32.totalorder %s19, 0
      %p152 = por %p150, %p151
      %s153 = ssub.s32 %s21, %s28
      %p154 = scmp.eq.s32.totalorder %s153, 0
      %s156 = sadd.s32 %s155, 1
      %s157 = scalar_select %p154, %s155, %s156
      %p160 = pneg %p154
      %p161 = scmp.eq.s32.totalorder %s13, 3
      %p162 = por %p160, %p161
      %p163 = scmp.ne.s32.totalorder %s155, %s158
      %p164 = scmp.eq.s32.totalorder %s13, 0
      %p165 = por %p163, %p164
      %p166 = scmp.ne.s32.totalorder %s155, %s158
      %p167 = scmp.eq.s32.totalorder %s18, 3
      %p168 = por %p166, %p167
      %p169 = scmp.ne.s32.totalorder %s158, %s159
      %p170 = scmp.eq.s32.totalorder %s18, 0
      %p171 = por %p169, %p170
      %p172 = scmp.ne.s32.totalorder %s158, %s159
      %p173 = scmp.eq.s32.totalorder %s19, 3
      %p174 = por %p172, %p173
      %p176 = scmp.ne.s32.totalorder %s159, %s175
      %p177 = scmp.eq.s32.totalorder %s19, 0
      %p178 = por %p176, %p177
      %s180 = sadd.s32 %s179, 1
      %p183 = scmp.eq.s32.totalorder %s13, 3
      %p184 = scmp.ne.s32.totalorder %s179, %s181
      %p185 = scmp.eq.s32.totalorder %s13, 0
      %p186 = por %p184, %p185
      %p187 = scmp.ne.s32.totalorder %s179, %s181
      %p188 = scmp.eq.s32.totalorder %s18, 3
      %p189 = por %p187, %p188
      %p190 = scmp.ne.s32.totalorder %s181, %s182
      %p191 = scmp.eq.s32.totalorder %s18, 0
      %p192 = por %p190, %p191
      %p193 = scmp.ne.s32.totalorder %s181, %s182
      %p194 = scmp.eq.s32.totalorder %s19, 3
      %p195 = por %p193, %p194
      %p197 = scmp.ne.s32.totalorder %s182, %s196
      %p198 = scmp.eq.s32.totalorder %s19, 0
      %p199 = por %p197, %p198
      %s200 = ssub.s32 %s20, %s32
      %p201 = scmp.eq.s32.totalorder %s200, 0
      %s203 = sadd.s32 %s202, 1
      %s204 = scalar_select %p201, %s202, %s203
      %p207 = pneg %p201
      %p208 = scmp.eq.s32.totalorder %s13, 3
      %p209 = por %p207, %p208
      %p210 = scmp.ne.s32.totalorder %s202, %s205
      %p211 = scmp.eq.s32.totalorder %s13, 0
      %p212 = por %p210, %p211
      %p213 = scmp.ne.s32.totalorder %s202, %s205
      %p214 = scmp.eq.s32.totalorder %s18, 3
      %p215 = por %p213, %p214
      %p216 = scmp.ne.s32.totalorder %s205, %s206
      %p217 = scmp.eq.s32.totalorder %s18, 0
      %p218 = por %p216, %p217
      %p219 = scmp.ne.s32.totalorder %s205, %s206
      %p220 = scmp.eq.s32.totalorder %s19, 3
      %p221 = por %p219, %p220
      %p223 = scmp.ne.s32.totalorder %s206, %s222
      %p224 = scmp.eq.s32.totalorder %s19, 0
      %p225 = por %p223, %p224
      %p226 = scmp.le.s32.totalorder 1, %s13
      %p227 = scmp.lt.s32.totalorder %s13, 5
      %p228 = pnand %p226, %p227
      %p229 = pneg %p228
      // Predicated region
      $region9: #{encoder_forward.12} parent=5 // pred_check
        _
      $region10: #{encoder_forward.12} parent=5 // pred_check_branch
        %231 = sbr.rel (%p228) target = $region12
      $region11: #{encoder_forward.12} parent=5 // pred_region
        %s232 = ssub.s32 %s13, 1
        // Predicated region
        $region13: #{encoder_forward.12} parent=11 // pred_check
          %p233 = pneg %p51
        $region14: #{encoder_forward.12} parent=11 // pred_check_branch
          %235 = sbr.rel (%p233) target = $region16
        $region15: #{encoder_forward.12} parent=11 // pred_region
          %s236 = smul.u32 2, %s22
          %p237 = scmp.lt.s32.totalorder %s236, 1
          %s238 = scalar_select %p237, %s236, 1
          %s239 = smul.addr %s238, 8
          %s240 = scalar_lea.vmem %s0, %s239
          %s241 = smul.u32 2, %s22
        $region16: #{encoder_forward.12} parent=11 // pred_fallthru
          _
        // Predicated region
        $region17: #{encoder_forward.12} parent=11 // pred_check
          %p242 = pneg %p72
        $region18: #{encoder_forward.12} parent=11 // pred_check_branch
          %244 = sbr.rel (%p242) target = $region20
        $region19: #{encoder_forward.12} parent=11 // pred_region
          _
        $region20: #{encoder_forward.12} parent=11 // pred_fallthru
          _
        // Predicated region
        $region21: #{encoder_forward.12} parent=11 // pred_check
          %p245 = pneg %p93
        $region22: #{encoder_forward.12} parent=11 // pred_check_branch
          %247 = sbr.rel (%p245) target = $region24
        $region23: #{encoder_forward.12} parent=11 // pred_region
          _
        $region24: #{encoder_forward.12} parent=11 // pred_fallthru
          _
        // Predicated region
        $region25: #{encoder_forward.12} parent=11 // pred_check
          %p248 = pneg %p192
        $region26: #{encoder_forward.12} parent=11 // pred_check_branch
          %250 = sbr.rel (%p248) target = $region28
        $region27: #{encoder_forward.12} parent=11 // pred_region
          _
        $region28: #{encoder_forward.12} parent=11 // pred_fallthru
          _
      $region12: #{encoder_forward.12} parent=5 // pred_fallthru
        _
      %p251 = scmp.lt.s32.totalorder %s13, 4
      // Predicated region
      $region29: #{encoder_forward.12} parent=5 // pred_check
        %p252 = pneg %p251
      $region30: #{encoder_forward.12} parent=5 // pred_check_branch
        %254 = sbr.rel (%p252) target = $region32
      $region31: #{encoder_forward.12} parent=5 // pred_region
        // Predicated region
        $region33: #{encoder_forward.12} parent=31 // pred_check
          %p255 = pneg %p113
        $region34: #{encoder_forward.12} parent=31 // pred_check_branch
          %257 = sbr.rel (%p255) target = $region36
        $region35: #{encoder_forward.12} parent=31 // pred_region
          %s258 = sand.u32 %s103, 1
          %s259 = sand.u32 %s103, 1
          %s260 = smul.addr %s259, 128
          %s261 = scalar_lea.vmem [#allocation4], %s260
          %s262 = smul.u32 4, %s21
          %s263 = smul.addr %s262, 8
          %s264 = scalar_lea.vmem %s3, %s263
          // Predicated region
          $region37: #{encoder_forward.12} parent=35 // pred_check
            _
          $region38: #{encoder_forward.12} parent=35 // pred_check_branch
            %266 = sbr.rel (0) target = $region40
          $region39: #{encoder_forward.12} parent=35 // pred_region
            // Predicated region
            $region41: #{encoder_forward.12} parent=39 // pred_check
              _
            $region42: #{encoder_forward.12} parent=39 // pred_check_branch
              %268 = sbr.rel (0) target = $region44
            $region43: #{encoder_forward.12} parent=39 // pred_region
              loop: start=0, step=1, limit=1
              $region45: #{encoder_forward.12} parent=43 // loop_pre_header
                _
              $region46: #{encoder_forward.12} parent=43 // loop_header
                %s270 = sphi 0, %s274
                %p271 = scmp.ge.s32.totalorder %s270, 1
                %s275 = sphi %s264, %s264
                %s276 = sphi %s261, %s261
              $region47: #{encoder_forward.12} parent=43 // loop_header_branch
                %273 = sbr.rel (%p271) target = $region51
              $region48: #{encoder_forward.12} parent=43 // loop_body
                %v277 = vld [vmem:[%s275] sm:$0xff]
                %278 = vst [vmem:[%s276] sm:$0xff] %v277
                %v279 = vld [vmem:[%s275 + $0x8] sm:$0xff]
                %280 = vst [vmem:[%s276 + $0x8] sm:$0xff] %v279
                %v281 = vld [vmem:[%s275 + $0x10] sm:$0xff]
                %282 = vst [vmem:[%s276 + $0x10] sm:$0xff] %v281
                %v283 = vld [vmem:[%s275 + $0x18] sm:$0xff]
                %284 = vst [vmem:[%s276 + $0x18] sm:$0xff] %v283
                %v285 = vld [vmem:[%s275 + $0x80] sm:$0xff]
                %286 = vst [vmem:[%s276 + $0x20] sm:$0xff] %v285
                %v287 = vld [vmem:[%s275 + $0x88] sm:$0xff]
                %288 = vst [vmem:[%s276 + $0x28] sm:$0xff] %v287
                %v289 = vld [vmem:[%s275 + $0x90] sm:$0xff]
                %290 = vst [vmem:[%s276 + $0x30] sm:$0xff] %v289
                %v291 = vld [vmem:[%s275 + $0x98] sm:$0xff]
                %292 = vst [vmem:[%s276 + $0x38] sm:$0xff] %v291
                %v293 = vld [vmem:[%s275 + $0x100] sm:$0xff]
                %294 = vst [vmem:[%s276 + $0x40] sm:$0xff] %v293
                %v295 = vld [vmem:[%s275 + $0x108] sm:$0xff]
                %296 = vst [vmem:[%s276 + $0x48] sm:$0xff] %v295
                %v297 = vld [vmem:[%s275 + $0x110] sm:$0xff]
                %298 = vst [vmem:[%s276 + $0x50] sm:$0xff] %v297
                %v299 = vld [vmem:[%s275 + $0x118] sm:$0xff]
                %300 = vst [vmem:[%s276 + $0x58] sm:$0xff] %v299
                %v301 = vld [vmem:[%s275 + $0x180] sm:$0xff]
                %302 = vst [vmem:[%s276 + $0x60] sm:$0xff] %v301
                %v303 = vld [vmem:[%s275 + $0x188] sm:$0xff]
                %304 = vst [vmem:[%s276 + $0x68] sm:$0xff] %v303
                %v305 = vld [vmem:[%s275 + $0x190] sm:$0xff]
                %306 = vst [vmem:[%s276 + $0x70] sm:$0xff] %v305
                %v307 = vld [vmem:[%s275 + $0x198] sm:$0xff]
                %308 = vst [vmem:[%s276 + $0x78] sm:$0xff] %v307
              $region49: #{encoder_forward.12} parent=43 // loop_footer
                %s274 = sadd.s32 1, %s270
              $region50: #{encoder_forward.12} parent=43 // loop_footer_branch
                %269 = sbr.rel target = $region46
              $region51: #{encoder_forward.12} parent=43 // loop_exit
                _
            $region44: #{encoder_forward.12} parent=39 // pred_fallthru
              _
            // Predicated region
            $region52: #{encoder_forward.12} parent=39 // pred_check
              _
            $region53: #{encoder_forward.12} parent=39 // pred_check_branch
              %310 = sbr.rel target = $region55
            $region54: #{encoder_forward.12} parent=39 // pred_region
              _
            $region55: #{encoder_forward.12} parent=39 // pred_fallthru
              _
          $region40: #{encoder_forward.12} parent=35 // pred_fallthru
            _
          %311 = vnop
        $region36: #{encoder_forward.12} parent=31 // pred_fallthru
          _
        // Predicated region
        $region56: #{encoder_forward.12} parent=31 // pred_check
          %p312 = pneg %p139
        $region57: #{encoder_forward.12} parent=31 // pred_check_branch
          %314 = sbr.rel (%p312) target = $region59
        $region58: #{encoder_forward.12} parent=31 // pred_region
          %s315 = smul.u32 4, %s21
          %p316 = scmp.lt.s32.totalorder %s315, 15
          %s317 = scalar_select %p316, %s315, 15
          %s318 = scalar_lea.vmem %s4, %s317
          %s319 = smul.u32 4, %s21
        $region59: #{encoder_forward.12} parent=31 // pred_fallthru
          _
        // Predicated region
        $region60: #{encoder_forward.12} parent=31 // pred_check
          %p320 = pneg %p165
        $region61: #{encoder_forward.12} parent=31 // pred_check_branch
          %322 = sbr.rel (%p320) target = $region63
        $region62: #{encoder_forward.12} parent=31 // pred_region
          %s323 = smul.u32 64, %s21
          %p324 = scmp.lt.s32.totalorder %s323, 255
          %s325 = scalar_select %p324, %s323, 255
          %s326 = smul.addr %s325, 8
          %s327 = scalar_lea.vmem %s5, %s326
          %s328 = smul.u32 64, %s21
        $region63: #{encoder_forward.12} parent=31 // pred_fallthru
          _
      $region32: #{encoder_forward.12} parent=5 // pred_fallthru
        _
      %p329 = scmp.le.s32.totalorder 1, %s13
      %p330 = scmp.lt.s32.totalorder %s13, 5
      %p331 = pnand %p329, %p330
      %p332 = pneg %p331
      // Predicated region
      $region64: #{encoder_forward.12} parent=5 // pred_check
        _
      $region65: #{encoder_forward.12} parent=5 // pred_check_branch
        %334 = sbr.rel (%p331) target = $region67
      $region66: #{encoder_forward.12} parent=5 // pred_region
        %s335 = ssub.s32 %s13, 1
        %s336 = sand.u32 %s106, 1
        %s337 = sand.u32 %s106, 1
        %s338 = smul.addr %s337, 128
        %s339 = scalar_lea.vmem [#allocation4], %s338
        // Predicated region
        $region68: #{encoder_forward.12} parent=66 // pred_check
          %p340 = pneg %p119
        $region69: #{encoder_forward.12} parent=66 // pred_check_branch
          %342 = sbr.rel (%p340) target = $region71
        $region70: #{encoder_forward.12} parent=66 // pred_region
          _
        $region71: #{encoder_forward.12} parent=66 // pred_fallthru
          _
        %s343 = smul.u32 2, %s22
        %p344 = scmp.lt.s32.totalorder %s343, 1
        %s345 = scalar_select %p344, %s343, 1
        %s346 = smul.addr %s345, 8
        %s347 = scalar_lea.vmem %s0, %s346
        %p348 = pneg %p51
        %p349 = pneg %p48
        %p350 = pneg %p72
        %p351 = pneg %p69
        %p352 = pneg %p93
        %p353 = pneg %p90
        %s354 = sand.u32 %s106, 1
        %s355 = sand.u32 %s106, 1
        %s356 = smul.addr %s355, 128
        %s357 = scalar_lea.vmem [#allocation4], %s356
        %p358 = pneg %p119
        %p359 = pneg %p116
        %s360 = smul.u32 4, %s23
        %p361 = scmp.lt.s32.totalorder %s360, 15
        %s362 = scalar_select %p361, %s360, 15
        %s363 = scalar_lea.vmem %s4, %s362
        %p364 = pneg %p145
        %p365 = pneg %p142
        %s366 = smul.u32 64, %s23
        %p367 = scmp.lt.s32.totalorder %s366, 255
        %s368 = scalar_select %p367, %s366, 255
        %s369 = smul.addr %s368, 8
        %s370 = scalar_lea.vmem %s5, %s369
        %p371 = pneg %p171
        %p372 = pneg %p168
        %p373 = pneg %p192
        %p374 = pneg %p189
        %p375 = pneg %p218
        %p376 = pneg %p215
        %s377 = smul.u32 2, %s22
        %p378 = scmp.lt.s32.totalorder %s377, 1
        %s379 = scalar_select %p378, %s377, 1
        %s380 = smul.addr %s379, 8
        %s381 = scalar_lea.vmem %s7, %s380
        %s382 = smul.u32 2, %s22
        %p383 = scmp.lt.s32.totalorder %s382, 1
        %s384 = scalar_select %p383, %s382, 1
        %s385 = smul.addr %s384, 8
        %s386 = scalar_lea.vmem %s0, %s385
        %s387 = smul.u32 2, %s22
        %s388 = smul.u32 4, %s23
        %s389 = smul.u32 4, %s23
        %p390 = scmp.lt.s32.totalorder %s389, 15
        %s391 = scalar_select %p390, %s389, 15
        %s392 = scalar_lea.vmem %s4, %s391
        %s393 = smul.u32 4, %s23
        %s394 = smul.u32 64, %s23
        %p395 = scmp.lt.s32.totalorder %s394, 255
        %s396 = scalar_select %p395, %s394, 255
        %s397 = smul.addr %s396, 8
        %s398 = scalar_lea.vmem %s5, %s397
        %s399 = smul.u32 64, %s23
        %s400 = smul.u32 2, %s22
        %p401 = scmp.lt.s32.totalorder %s400, 1
        %s402 = scalar_select %p401, %s400, 1
        %s403 = smul.addr %s402, 8
        %s404 = scalar_lea.vmem %s7, %s403
        %s405 = smul.u32 2, %s22
        %p407 = scmp.eq.s32.totalorder %s23, 0
        // Predicated region
        $region72: #{encoder_forward.12} parent=66 // pred_check
          %p408 = pneg %p407
        $region73: #{encoder_forward.12} parent=66 // pred_check_branch
          %410 = sbr.rel (%p408) target = $region75
        $region74: #{encoder_forward.12} parent=66 // pred_region
          %v411 = vld [vmem:[%s386] sm:$0xff]
          %v412 = vld [vmem:[%s386 + $0x8] sm:$0xff]
          %v413 = vld [vmem:[%s1] sm:$0x1]
          %v414 = vld [vmem:[%s2] sm:$0x1]
          %vm415 = vcmask 261120
          %v416 = vsel %vm415, %v411, 0.0
          %417 = vadd.xlane.f32.xlu0 %v416
          %v418 = vpop.xlane.xlu0 %417
          %v419 = vsel %vm415, %v412, 0.0
          %420 = vadd.xlane.f32.xlu0 %v419
          %v421 = vpop.xlane.xlu0 %420
          %v422 = vrcp.pop 32.0
          %v423 = vmul.f32 %v418, %v422
          %v424 = vmul.f32 %v421, %v422
          %v425 = vsub.f32 %v411, %v423
          %v426 = vsub.f32 %v412, %v424
          %v427 = vmul.f32 %v425, %v425
          %v428 = vmul.f32 %v426, %v426
          %v429 = vsel %vm415, %v427, 0.0
          %430 = vadd.xlane.f32.xlu0 %v429
          %v431 = vpop.xlane.xlu0 %430
          %v432 = vsel %vm415, %v428, 0.0
          %433 = vadd.xlane.f32.xlu0 %v432
          %v434 = vpop.xlane.xlu0 %433
          %v435 = vrcp.pop 31.0
          %v436 = vmul.f32 %v431, %v435
          %v437 = vmul.f32 %v434, %v435
          %v439 = vlaneseq
          %v440 = vshrl.u32 %v439, 7
          %v441 = vsub.s32 0, %v440
          %v442 = vrot.slane %v413, %v441
          %v444 = vmul.f32 %v442, %v425
          %v445 = vmul.f32 %v442, %v426
          %v446 = vrsqrt.pop %v436
          %v447 = vmul.f32 %v436, %v446
          %vm448 = vcmp.eq.f32.partialorder %v436, inf
          %v449 = vsel %vm448, %v436, %v447
          %vm450 = vcmp.eq.f32.partialorder %v436, 0.0
          %v451 = vand.u32 %v436, 2147483648
          %v452 = vsel %vm450, %v451, %v449
          %v453 = vrsqrt.pop %v437
          %v454 = vmul.f32 %v437, %v453
          %vm455 = vcmp.eq.f32.partialorder %v437, inf
          %v456 = vsel %vm455, %v437, %v454
          %vm457 = vcmp.eq.f32.partialorder %v437, 0.0
          %v458 = vand.u32 %v437, 2147483648
          %v459 = vsel %vm457, %v458, %v456
          %v460 = vadd.f32 %v452, 1e-06
          %v461 = vadd.f32 %v459, 1e-06
          %v462 = vrcp.pop %v460
          %v463 = vmul.f32 %v444, %v462
          %v464 = vrcp.pop %v461
          %v465 = vmul.f32 %v445, %v464
          %v467 = vlaneseq
          %v468 = vshrl.u32 %v467, 7
          %v469 = vsub.s32 0, %v468
          %v470 = vrot.slane %v414, %v469
          %v472 = vadd.f32 %v463, %v470
          %v473 = vadd.f32 %v465, %v470
          %474 = vst.msk [vmem:[#allocation2] sm:$0xff] %vm415, %v472
          %475 = vst.msk [vmem:[#allocation2 + $0x8] sm:$0xff] %vm415, %v473
          %476 = vst.msk [vmem:[#allocation3] sm:$0xff] %vm415, 0.0
          %477 = vst.msk [vmem:[#allocation3 + $0x8] sm:$0xff] %vm415, 0.0
        $region75: #{encoder_forward.12} parent=66 // pred_fallthru
          _
        %v478 = vld [vmem:[#allocation2] sm:$0xff]
        %v479 = vld [vmem:[#allocation2 + $0x8] sm:$0xff]
        %v480 = vpack.c.bf16 %v479, %v478
        %v481 = vld [vmem:[%s339] sm:$0xff]
        %v482 = vld [vmem:[%s339 + $0x8] sm:$0xff]
        %v483 = vld [vmem:[%s339 + $0x10] sm:$0xff]
        %v484 = vld [vmem:[%s339 + $0x18] sm:$0xff]
        %v485 = vld [vmem:[%s339 + $0x20] sm:$0xff]
        %v486 = vld [vmem:[%s339 + $0x28] sm:$0xff]
        %v487 = vld [vmem:[%s339 + $0x30] sm:$0xff]
        %v488 = vld [vmem:[%s339 + $0x38] sm:$0xff]
        %v489 = vld [vmem:[%s339 + $0x40] sm:$0xff]
        %v490 = vld [vmem:[%s339 + $0x48] sm:$0xff]
        %v491 = vld [vmem:[%s339 + $0x50] sm:$0xff]
        %v492 = vld [vmem:[%s339 + $0x58] sm:$0xff]
        %v493 = vld [vmem:[%s339 + $0x60] sm:$0xff]
        %v494 = vld [vmem:[%s339 + $0x68] sm:$0xff]
        %v495 = vld [vmem:[%s339 + $0x70] sm:$0xff]
        %v496 = vld [vmem:[%s339 + $0x78] sm:$0xff]
        %v497 = vpack.c.bf16 %v485, %v481
        %v498 = vpack.c.bf16 %v486, %v482
        %v499 = vpack.c.bf16 %v487, %v483
        %v500 = vpack.c.bf16 %v488, %v484
        %v501 = vpack.c.bf16 %v493, %v489
        %v502 = vpack.c.bf16 %v494, %v490
        %v503 = vpack.c.bf16 %v495, %v491
        %v504 = vpack.c.bf16 %v496, %v492
        %v505 = vld [vmem:[%s392] sm:$0xf]
        %v507 = vlaneseq
        %v508 = vshrl.u32 %v507, 7
        %v509 = vsub.s32 0, %v508
        %v510 = vrot.slane %v505, %v509
        %v511 = vlaneseq
        %v512 = vshrl.u32 %v511, 7
        %v513 = vsub.s32 1, %v512
        %v514 = vrot.slane %v505, %v513
        %v515 = vlaneseq
        %v516 = vshrl.u32 %v515, 7
        %v517 = vsub.s32 2, %v516
        %v518 = vrot.slane %v505, %v517
        %v519 = vlaneseq
        %v520 = vshrl.u32 %v519, 7
        %v521 = vsub.s32 3, %v520
        %v522 = vrot.slane %v505, %v521
        %vm527 = vcmask 261120
        %v529 = vsel %vm527, %v480, 0
        %531 = vmatprep.subr.bf16.mxu0 %v498
        %532 = vmatpush1.bf16.msra.mxu0 %v497
        %533 = vmatprep.subr.bf16.mxu0 %v502
        %534 = vmatpush1.bf16.msra.mxu0 %v501
        %535 = vmatprep.subr.bf16.mxu0 0
        %536 = vmatpush1.bf16.msra.mxu0 0
        %537 = vmatprep.subr.bf16.mxu0 0
        %538 = vmatpush1.bf16.msra.mxu0 0
        %539 = vmatprep.subr.bf16.mxu0 0
        %540 = vmatpush1.bf16.msra.mxu0 0
        %541 = vmatprep.subr.bf16.mxu0 0
        %542 = vmatpush1.bf16.msra.mxu0 0
        %543 = vmatprep.subr.bf16.mxu0 0
        %544 = vmatpush1.bf16.msra.mxu0 0
        %545 = vmatprep.subr.bf16.mxu0 0
        %546 = vmatpush1.bf16.msra.mxu0 0
        %547 = vmatprep.subr.bf16.mxu0 0
        %548 = vmatpush1.bf16.msra.mxu0 0
        %549 = vmatprep.subr.bf16.mxu0 0
        %550 = vmatpush1.bf16.msra.mxu0 0
        %551 = vmatprep.subr.bf16.mxu0 0
        %552 = vmatpush1.bf16.msra.mxu0 0
        %553 = vmatprep.subr.bf16.mxu0 0
        %554 = vmatpush1.bf16.msra.mxu0 0
        %555 = vmatprep.subr.bf16.mxu0 0
        %556 = vmatpush1.bf16.msra.mxu0 0
        %557 = vmatprep.subr.bf16.mxu0 0
        %558 = vmatpush1.bf16.msra.mxu0 0
        %559 = vmatprep.subr.bf16.mxu0 0
        %560 = vmatpush1.bf16.msra.mxu0 0
        %561 = vmatprep.subr.bf16.mxu0 0
        %562 = vmatpush1.bf16.msra.mxu0 0
        %563 = vmatprep.mubr.bf16.mxu0 0
        %564 = vmatmul.mubr.bf16.gmra.mrb[0].mxu0 %v529
        %v565 = vpop.f32.mrb[0].mxu0
        %v566 = vadd.f32 %v510, %v565
        %v567 = vpop.f32.mrb[0].mxu0
        %v568 = vadd.f32 %v514, %v567
        %v569 = vpop.f32.mrb[0].mxu0
        %v570 = vadd.f32 %v510, %v569
        %v571 = vpop.f32.mrb[0].mxu0
        %v572 = vadd.f32 %v514, %v571
        %573 = vdwg.mxu0
        %574 = vmatprep.subr.bf16.mxu0 %v500
        %575 = vmatpush1.bf16.msra.mxu0 %v499
        %576 = vmatprep.subr.bf16.mxu0 %v504
        %577 = vmatpush1.bf16.msra.mxu0 %v503
        %578 = vmatprep.subr.bf16.mxu0 0
        %579 = vmatpush1.bf16.msra.mxu0 0
        %580 = vmatprep.subr.bf16.mxu0 0
        %581 = vmatpush1.bf16.msra.mxu0 0
        %582 = vmatprep.subr.bf16.mxu0 0
        %583 = vmatpush1.bf16.msra.mxu0 0
        %584 = vmatprep.subr.bf16.mxu0 0
        %585 = vmatpush1.bf16.msra.mxu0 0
        %586 = vmatprep.subr.bf16.mxu0 0
        %587 = vmatpush1.bf16.msra.mxu0 0
        %588 = vmatprep.subr.bf16.mxu0 0
        %589 = vmatpush1.bf16.msra.mxu0 0
        %590 = vmatprep.subr.bf16.mxu0 0
        %591 = vmatpush1.bf16.msra.mxu0 0
        %592 = vmatprep.subr.bf16.mxu0 0
        %593 = vmatpush1.bf16.msra.mxu0 0
        %594 = vmatprep.subr.bf16.mxu0 0
        %595 = vmatpush1.bf16.msra.mxu0 0
        %596 = vmatprep.subr.bf16.mxu0 0
        %597 = vmatpush1.bf16.msra.mxu0 0
        %598 = vmatprep.subr.bf16.mxu0 0
        %599 = vmatpush1.bf16.msra.mxu0 0
        %600 = vmatprep.subr.bf16.mxu0 0
        %601 = vmatpush1.bf16.msra.mxu0 0
        %602 = vmatprep.subr.bf16.mxu0 0
        %603 = vmatpush1.bf16.msra.mxu0 0
        %604 = vmatprep.subr.bf16.mxu0 0
        %605 = vmatpush1.bf16.msra.mxu0 0
        %606 = vmatprep.mubr.bf16.mxu0 0
        %607 = vmatmul.mubr.bf16.gmra.mrb[0].mxu0 %v529
        %v608 = vpop.f32.mrb[0].mxu0
        %v609 = vadd.f32 %v518, %v608
        %v610 = vpop.f32.mrb[0].mxu0
        %v611 = vadd.f32 %v522, %v610
        %v612 = vpop.f32.mrb[0].mxu0
        %v613 = vadd.f32 %v518, %v612
        %v614 = vpop.f32.mrb[0].mxu0
        %v615 = vadd.f32 %v522, %v614
        %616 = vdwg.mxu0
        %v617 = vmax.f32 %v566, 0.0
        %v618 = vmax.f32 %v568, 0.0
        %v619 = vmax.f32 %v609, 0.0
        %v620 = vmax.f32 %v611, 0.0
        %v621 = vmax.f32 %v570, 0.0
        %v622 = vmax.f32 %v572, 0.0
        %v623 = vmax.f32 %v613, 0.0
        %v624 = vmax.f32 %v615, 0.0
        %v625 = vld [vmem:[#allocation3] sm:$0xff]
        %v626 = vld [vmem:[#allocation3 + $0x8] sm:$0xff]
        %v627 = vpack.c.bf16 %v621, %v617
        %v628 = vpack.c.bf16 %v622, %v618
        %v629 = vpack.c.bf16 %v623, %v619
        %v630 = vpack.c.bf16 %v624, %v620
        %v631 = vld [vmem:[%s398] sm:$0xff]
        %v632 = vld [vmem:[%s398 + $0x8] sm:$0xff]
        %v633 = vld [vmem:[%s398 + $0x10] sm:$0xff]
        %v634 = vld [vmem:[%s398 + $0x18] sm:$0xff]
        %v635 = vld [vmem:[%s398 + $0x20] sm:$0xff]
        %v636 = vld [vmem:[%s398 + $0x28] sm:$0xff]
        %v637 = vld [vmem:[%s398 + $0x30] sm:$0xff]
        %v638 = vld [vmem:[%s398 + $0x38] sm:$0xff]
        %v639 = vld [vmem:[%s398 + $0x40] sm:$0xff]
        %v640 = vld [vmem:[%s398 + $0x48] sm:$0xff]
        %v641 = vld [vmem:[%s398 + $0x50] sm:$0xff]
        %v642 = vld [vmem:[%s398 + $0x58] sm:$0xff]
        %v643 = vld [vmem:[%s398 + $0x60] sm:$0xff]
        %v644 = vld [vmem:[%s398 + $0x68] sm:$0xff]
        %v645 = vld [vmem:[%s398 + $0x70] sm:$0xff]
        %v646 = vld [vmem:[%s398 + $0x78] sm:$0xff]
        %v647 = vld [vmem:[%s398 + $0x80] sm:$0xff]
        %v648 = vld [vmem:[%s398 + $0x88] sm:$0xff]
        %v649 = vld [vmem:[%s398 + $0x90] sm:$0xff]
        %v650 = vld [vmem:[%s398 + $0x98] sm:$0xff]
        %v651 = vld [vmem:[%s398 + $0xa0] sm:$0xff]
        %v652 = vld [vmem:[%s398 + $0xa8] sm:$0xff]
        %v653 = vld [vmem:[%s398 + $0xb0] sm:$0xff]
        %v654 = vld [vmem:[%s398 + $0xb8] sm:$0xff]
        %v655 = vld [vmem:[%s398 + $0xc0] sm:$0xff]
        %v656 = vld [vmem:[%s398 + $0xc8] sm:$0xff]
        %v657 = vld [vmem:[%s398 + $0xd0] sm:$0xff]
        %v658 = vld [vmem:[%s398 + $0xd8] sm:$0xff]
        %v659 = vld [vmem:[%s398 + $0xe0] sm:$0xff]
        %v660 = vld [vmem:[%s398 + $0xe8] sm:$0xff]
        %v661 = vld [vmem:[%s398 + $0xf0] sm:$0xff]
        %v662 = vld [vmem:[%s398 + $0xf8] sm:$0xff]
        %v663 = vld [vmem:[%s398 + $0x100] sm:$0xff]
        %v664 = vld [vmem:[%s398 + $0x108] sm:$0xff]
        %v665 = vld [vmem:[%s398 + $0x110] sm:$0xff]
        %v666 = vld [vmem:[%s398 + $0x118] sm:$0xff]
        %v667 = vld [vmem:[%s398 + $0x120] sm:$0xff]
        %v668 = vld [vmem:[%s398 + $0x128] sm:$0xff]
        %v669 = vld [vmem:[%s398 + $0x130] sm:$0xff]
        %v670 = vld [vmem:[%s398 + $0x138] sm:$0xff]
        %v671 = vld [vmem:[%s398 + $0x140] sm:$0xff]
        %v672 = vld [vmem:[%s398 + $0x148] sm:$0xff]
        %v673 = vld [vmem:[%s398 + $0x150] sm:$0xff]
        %v674 = vld [vmem:[%s398 + $0x158] sm:$0xff]
        %v675 = vld [vmem:[%s398 + $0x160] sm:$0xff]
        %v676 = vld [vmem:[%s398 + $0x168] sm:$0xff]
        %v677 = vld [vmem:[%s398 + $0x170] sm:$0xff]
        %v678 = vld [vmem:[%s398 + $0x178] sm:$0xff]
        %v679 = vld [vmem:[%s398 + $0x180] sm:$0xff]
        %v680 = vld [vmem:[%s398 + $0x188] sm:$0xff]
        %v681 = vld [vmem:[%s398 + $0x190] sm:$0xff]
        %v682 = vld [vmem:[%s398 + $0x198] sm:$0xff]
        %v683 = vld [vmem:[%s398 + $0x1a0] sm:$0xff]
        %v684 = vld [vmem:[%s398 + $0x1a8] sm:$0xff]
        %v685 = vld [vmem:[%s398 + $0x1b0] sm:$0xff]
        %v686 = vld [vmem:[%s398 + $0x1b8] sm:$0xff]
        %v687 = vld [vmem:[%s398 + $0x1c0] sm:$0xff]
        %v688 = vld [vmem:[%s398 + $0x1c8] sm:$0xff]
        %v689 = vld [vmem:[%s398 + $0x1d0] sm:$0xff]
        %v690 = vld [vmem:[%s398 + $0x1d8] sm:$0xff]
        %v691 = vld [vmem:[%s398 + $0x1e0] sm:$0xff]
        %v692 = vld [vmem:[%s398 + $0x1e8] sm:$0xff]
        %v693 = vld [vmem:[%s398 + $0x1f0] sm:$0xff]
        %v694 = vld [vmem:[%s398 + $0x1f8] sm:$0xff]
        %v695 = vpack.c.bf16 %v632, %v631
        %v696 = vpack.c.bf16 %v634, %v633
        %v697 = vpack.c.bf16 %v636, %v635
        %v698 = vpack.c.bf16 %v638, %v637
        %v699 = vpack.c.bf16 %v640, %v639
        %v700 = vpack.c.bf16 %v642, %v641
        %v701 = vpack.c.bf16 %v644, %v643
        %v702 = vpack.c.bf16 %v646, %v645
        %v703 = vpack.c.bf16 %v648, %v647
        %v704 = vpack.c.bf16 %v650, %v649
        %v705 = vpack.c.bf16 %v652, %v651
        %v706 = vpack.c.bf16 %v654, %v653
        %v707 = vpack.c.bf16 %v656, %v655
        %v708 = vpack.c.bf16 %v658, %v657
        %v709 = vpack.c.bf16 %v660, %v659
        %v710 = vpack.c.bf16 %v662, %v661
        %v711 = vpack.c.bf16 %v664, %v663
        %v712 = vpack.c.bf16 %v666, %v665
        %v713 = vpack.c.bf16 %v668, %v667
        %v714 = vpack.c.bf16 %v670, %v669
        %v715 = vpack.c.bf16 %v672, %v671
        %v716 = vpack.c.bf16 %v674, %v673
        %v717 = vpack.c.bf16 %v676, %v675
        %v718 = vpack.c.bf16 %v678, %v677
        %v719 = vpack.c.bf16 %v680, %v679
        %v720 = vpack.c.bf16 %v682, %v681
        %v721 = vpack.c.bf16 %v684, %v683
        %v722 = vpack.c.bf16 %v686, %v685
        %v723 = vpack.c.bf16 %v688, %v687
        %v724 = vpack.c.bf16 %v690, %v689
        %v725 = vpack.c.bf16 %v692, %v691
        %v726 = vpack.c.bf16 %v694, %v693
        %727 = vmatprep.subr.bf16.mxu0 0
        %728 = vmatpush1.bf16.msra.mxu0 %v695
        %729 = vmatprep.subr.bf16.mxu0 0
        %730 = vmatpush1.bf16.msra.mxu0 %v696
        %731 = vmatprep.subr.bf16.mxu0 0
        %732 = vmatpush1.bf16.msra.mxu0 %v697
        %733 = vmatprep.subr.bf16.mxu0 0
        %734 = vmatpush1.bf16.msra.mxu0 %v698
        %735 = vmatprep.subr.bf16.mxu0 0
        %736 = vmatpush1.bf16.msra.mxu0 %v699
        %737 = vmatprep.subr.bf16.mxu0 0
        %738 = vmatpush1.bf16.msra.mxu0 %v700
        %739 = vmatprep.subr.bf16.mxu0 0
        %740 = vmatpush1.bf16.msra.mxu0 %v701
        %741 = vmatprep.subr.bf16.mxu0 0
        %742 = vmatpush1.bf16.msra.mxu0 %v702
        %743 = vmatprep.subr.bf16.mxu0 0
        %744 = vmatpush1.bf16.msra.mxu0 %v703
        %745 = vmatprep.subr.bf16.mxu0 0
        %746 = vmatpush1.bf16.msra.mxu0 %v704
        %747 = vmatprep.subr.bf16.mxu0 0
        %748 = vmatpush1.bf16.msra.mxu0 %v705
        %749 = vmatprep.subr.bf16.mxu0 0
        %750 = vmatpush1.bf16.msra.mxu0 %v706
        %751 = vmatprep.subr.bf16.mxu0 0
        %752 = vmatpush1.bf16.msra.mxu0 %v707
        %753 = vmatprep.subr.bf16.mxu0 0
        %754 = vmatpush1.bf16.msra.mxu0 %v708
        %755 = vmatprep.subr.bf16.mxu0 0
        %756 = vmatpush1.bf16.msra.mxu0 %v709
        %757 = vmatprep.subr.bf16.mxu0 0
        %758 = vmatpush1.bf16.msra.mxu0 %v710
        %759 = vmatprep.mubr.bf16.mxu0 %v628
        %760 = vmatmul.mubr.bf16.gmra.mrb[0].mxu0 %v627
        %v761 = vpop.f32.mrb[0].mxu0
        %v762 = vadd.f32 0.0, %v761
        %v763 = vpop.f32.mrb[0].mxu0
        %v764 = vpop.f32.mrb[0].mxu0
        %v765 = vadd.f32 0.0, %v764
        %v766 = vpop.f32.mrb[0].mxu0
        %767 = vdwg.mxu0
        %768 = vmatprep.subr.bf16.mxu0 0
        %769 = vmatpush1.bf16.msra.mxu0 %v711
        %770 = vmatprep.subr.bf16.mxu0 0
        %771 = vmatpush1.bf16.msra.mxu0 %v712
        %772 = vmatprep.subr.bf16.mxu0 0
        %773 = vmatpush1.bf16.msra.mxu0 %v713
        %774 = vmatprep.subr.bf16.mxu0 0
        %775 = vmatpush1.bf16.msra.mxu0 %v714
        %776 = vmatprep.subr.bf16.mxu0 0
        %777 = vmatpush1.bf16.msra.mxu0 %v715
        %778 = vmatprep.subr.bf16.mxu0 0
        %779 = vmatpush1.bf16.msra.mxu0 %v716
        %780 = vmatprep.subr.bf16.mxu0 0
        %781 = vmatpush1.bf16.msra.mxu0 %v717
        %782 = vmatprep.subr.bf16.mxu0 0
        %783 = vmatpush1.bf16.msra.mxu0 %v718
        %784 = vmatprep.subr.bf16.mxu0 0
        %785 = vmatpush1.bf16.msra.mxu0 %v719
        %786 = vmatprep.subr.bf16.mxu0 0
        %787 = vmatpush1.bf16.msra.mxu0 %v720
        %788 = vmatprep.subr.bf16.mxu0 0
        %789 = vmatpush1.bf16.msra.mxu0 %v721
        %790 = vmatprep.subr.bf16.mxu0 0
        %791 = vmatpush1.bf16.msra.mxu0 %v722
        %792 = vmatprep.subr.bf16.mxu0 0
        %793 = vmatpush1.bf16.msra.mxu0 %v723
        %794 = vmatprep.subr.bf16.mxu0 0
        %795 = vmatpush1.bf16.msra.mxu0 %v724
        %796 = vmatprep.subr.bf16.mxu0 0
        %797 = vmatpush1.bf16.msra.mxu0 %v725
        %798 = vmatprep.subr.bf16.mxu0 0
        %799 = vmatpush1.bf16.msra.mxu0 %v726
        %800 = vmatprep.mubr.bf16.mxu0 %v630
        %801 = vmatmul.mubr.bf16.gmra.mrb[0].mxu0 %v629
        %v802 = vpop.f32.mrb[0].mxu0
        %v803 = vadd.f32 %v762, %v802
        %v804 = vpop.f32.mrb[0].mxu0
        %v805 = vpop.f32.mrb[0].mxu0
        %v806 = vadd.f32 %v765, %v805
        %v807 = vpop.f32.mrb[0].mxu0
        %808 = vdwg.mxu0
        %v809 = vadd.f32 %v625, %v803
        %v810 = vadd.f32 %v626, %v806
        %811 = vst.msk [vmem:[#allocation3] sm:$0xff] %vm527, %v809
        %812 = vst.msk [vmem:[#allocation3 + $0x8] sm:$0xff] %vm527, %v810
        %p813 = scmp.eq.s32.totalorder %s23, 3
        // Predicated region
        $region76: #{encoder_forward.12} parent=66 // pred_check
          %p814 = pneg %p813
        $region77: #{encoder_forward.12} parent=66 // pred_check_branch
          %816 = sbr.rel (%p814) target = $region79
        $region78: #{encoder_forward.12} parent=66 // pred_region
          %v817 = vld [vmem:[%s386] sm:$0xff]
          %v818 = vld [vmem:[%s386 + $0x8] sm:$0xff]
          %v819 = vld [vmem:[#allocation3] sm:$0xff]
          %v820 = vld [vmem:[#allocation3 + $0x8] sm:$0xff]
          %v821 = vadd.f32 %v817, %v819
          %v822 = vadd.f32 %v818, %v820
          %v823 = vld [vmem:[%s6] sm:$0x1]
          %v825 = vlaneseq
          %v826 = vshrl.u32 %v825, 7
          %v827 = vsub.s32 0, %v826
          %v828 = vrot.slane %v823, %v827
          %v830 = vadd.f32 %v821, %v828
          %v831 = vadd.f32 %v822, %v828
          %832 = vst.msk [vmem:[%s404] sm:$0xff] %vm527, %v830
          %833 = vst.msk [vmem:[%s404 + $0x8] sm:$0xff] %vm527, %v831
        $region79: #{encoder_forward.12} parent=66 // pred_fallthru
          _
        %s834 = smul.u32 2, %s22
        %p835 = scmp.lt.s32.totalorder %s834, 1
        %s836 = scalar_select %p835, %s834, 1
        %s837 = smul.addr %s836, 8
        %s838 = scalar_lea.vmem %s7, %s837
        // Predicated region
        $region80: #{encoder_forward.12} parent=66 // pred_check
          %p839 = pneg %p215
        $region81: #{encoder_forward.12} parent=66 // pred_check_branch
          %841 = sbr.rel (%p839) target = $region83
        $region82: #{encoder_forward.12} parent=66 // pred_region
          %s842 = smul.u32 2, %s22
        $region83: #{encoder_forward.12} parent=66 // pred_fallthru
          _
        // Predicated region
        $region84: #{encoder_forward.12} parent=66 // pred_check
          %p843 = pneg %p215
        $region85: #{encoder_forward.12} parent=66 // pred_check_branch
          %845 = sbr.rel (%p843) target = $region87
        $region86: #{encoder_forward.12} parent=66 // pred_region
          %s846 = smul.u32 2, %s22
          %p847 = scmp.lt.s32.totalorder %s846, 1
          %s848 = scalar_select %p847, %s846, 1
          %s849 = smul.addr %s848, 8
          %s850 = scalar_lea.vmem %s7, %s849
        $region87: #{encoder_forward.12} parent=66 // pred_fallthru
          _
      $region67: #{encoder_forward.12} parent=5 // pred_fallthru
        _
      %p851 = scmp.le.s32.totalorder 2, %s13
      // Predicated region
      $region88: #{encoder_forward.12} parent=5 // pred_check
        %p852 = pneg %p851
      $region89: #{encoder_forward.12} parent=5 // pred_check_branch
        %854 = sbr.rel (%p852) target = $region91
      $region90: #{encoder_forward.12} parent=5 // pred_region
        %s855 = ssub.s32 %s13, 2
      $region91: #{encoder_forward.12} parent=5 // pred_fallthru
        _
    $region6: #{encoder_forward.12} parent=1 // loop_footer
      %s17 = sadd.s32 1, %s13
    $region7: #{encoder_forward.12} parent=1 // loop_footer_branch
      %12 = sbr.rel target = $region3
    $region8: #{encoder_forward.12} parent=1 // loop_exit
      _

// kernel: encoder_forward.17
$region0: #{encoder_forward.17}
  #allocation0 [shape = 'u32[]', space=smem, size = 0x4, offset = 0x4, fixed_abs, tag = 'smem constant byte address 0x4 - core index']
  #allocation1 [shape = 'u32[144,128]{1,0:T(1,128)}', space=vmem, size = 0x12000, scoped, tag = 'internal scratch']
  %s0 = inlined_call_operand.vmem [shape: f32[16,32], index: 0, kind: input, shape index: {}]
  %s1 = inlined_call_operand.vmem [shape: f32[1,32], index: 1, kind: input, shape index: {}]
  %s2 = inlined_call_operand.vmem [shape: f32[1,32], index: 2, kind: input, shape index: {}]
  %s3 = inlined_call_operand.hbm [shape: f32[16,32], index: 3, kind: output, shape index: {}]
  %s4 = sld [smem:[#allocation0]]
  $region22: #{encoder_forward.17} parent=0
    _
  %s6 = ssub.s32 1, %s4
  %s7 = scalar_select 0, %s6, %s4
  $region1: #{encoder_forward.17} parent=0
    #allocation2 [shape = 'u8[8192]{0}', space=vmem, size = 0x2000, scoped, tag = 'output window, operand 0, single buffered']
    #allocation3 [shape = 's32[1]{0}', space=sflag, size = 0x4, scoped, tag = 'scoped memory for encoder_forward.17']
    %8 = vsyncpa [#allocation3], 0
    // Predicated region
    $region2: #{encoder_forward.17} parent=1 // pred_check
      _
    $region3: #{encoder_forward.17} parent=1 // pred_check_branch
      %10 = sbr.rel (0) target = $region5
    $region4: #{encoder_forward.17} parent=1 // pred_region
      _
    $region5: #{encoder_forward.17} parent=1 // pred_fallthru
      _
    // Predicated region
    $region6: #{encoder_forward.17} parent=1 // pred_check
      _
    $region7: #{encoder_forward.17} parent=1 // pred_check_branch
      %12 = sbr.rel (0) target = $region9
    $region8: #{encoder_forward.17} parent=1 // pred_region
      _
    $region9: #{encoder_forward.17} parent=1 // pred_fallthru
      _
    // Predicated region
    $region10: #{encoder_forward.17} parent=1 // pred_check
      _
    $region11: #{encoder_forward.17} parent=1 // pred_check_branch
      %14 = sbr.rel (0) target = $region13
    $region12: #{encoder_forward.17} parent=1 // pred_region
      _
    $region13: #{encoder_forward.17} parent=1 // pred_fallthru
      _
    %v15 = vld [vmem:[%s0] sm:$0xff]
    %v16 = vld [vmem:[%s0 + $0x8] sm:$0xff]
    %v17 = vld [vmem:[%s1] sm:$0x1]
    %v18 = vld [vmem:[%s2] sm:$0x1]
    %vm19 = vcmask 261120
    %v20 = vsel %vm19, %v15, 0.0
    %21 = vadd.xlane.f32.xlu0 %v20
    %v22 = vpop.xlane.xlu0 %21
    %v23 = vsel %vm19, %v16, 0.0
    %24 = vadd.xlane.f32.xlu0 %v23
    %v25 = vpop.xlane.xlu0 %24
    %v26 = vrcp.pop 32.0
    %v27 = vmul.f32 %v22, %v26
    %v28 = vmul.f32 %v25, %v26
    %v29 = vsub.f32 %v15, %v27
    %v30 = vsub.f32 %v16, %v28
    %v31 = vmul.f32 %v29, %v29
    %v32 = vmul.f32 %v30, %v30
    %v33 = vsel %vm19, %v31, 0.0
    %34 = vadd.xlane.f32.xlu0 %v33
    %v35 = vpop.xlane.xlu0 %34
    %v36 = vsel %vm19, %v32, 0.0
    %37 = vadd.xlane.f32.xlu0 %v36
    %v38 = vpop.xlane.xlu0 %37
    %v39 = vrcp.pop 31.0
    %v40 = vmul.f32 %v35, %v39
    %v41 = vmul.f32 %v38, %v39
    %v43 = vlaneseq
    %v44 = vshrl.u32 %v43, 7
    %v45 = vsub.s32 0, %v44
    %v46 = vrot.slane %v17, %v45
    %v48 = vmul.f32 %v46, %v29
    %v49 = vmul.f32 %v46, %v30
    %v50 = vrsqrt.pop %v40
    %v51 = vmul.f32 %v40, %v50
    %vm52 = vcmp.eq.f32.partialorder %v40, inf
    %v53 = vsel %vm52, %v40, %v51
    %vm54 = vcmp.eq.f32.partialorder %v40, 0.0
    %v55 = vand.u32 %v40, 2147483648
    %v56 = vsel %vm54, %v55, %v53
    %v57 = vrsqrt.pop %v41
    %v58 = vmul.f32 %v41, %v57
    %vm59 = vcmp.eq.f32.partialorder %v41, inf
    %v60 = vsel %vm59, %v41, %v58
    %vm61 = vcmp.eq.f32.partialorder %v41, 0.0
    %v62 = vand.u32 %v41, 2147483648
    %v63 = vsel %vm61, %v62, %v60
    %v64 = vadd.f32 %v56, 1e-06
    %v65 = vadd.f32 %v63, 1e-06
    %v66 = vrcp.pop %v64
    %v67 = vmul.f32 %v48, %v66
    %v68 = vrcp.pop %v65
    %v69 = vmul.f32 %v49, %v68
    %v71 = vlaneseq
    %v72 = vshrl.u32 %v71, 7
    %v73 = vsub.s32 0, %v72
    %v74 = vrot.slane %v18, %v73
    %v76 = vadd.f32 %v67, %v74
    %v77 = vadd.f32 %v69, %v74
    %78 = vst.msk [vmem:[#allocation2] sm:$0xff] %vm19, %v76
    %79 = vst.msk [vmem:[#allocation2 + $0x8] sm:$0xff] %vm19, %v77
    // Predicated region
    $region14: #{encoder_forward.17} parent=1 // pred_check
      _
    $region15: #{encoder_forward.17} parent=1 // pred_check_branch
      %81 = sbr.rel (0) target = $region17
    $region16: #{encoder_forward.17} parent=1 // pred_region
      %s83 = ssub.s32 256, 256
      %84 = vsyncadd [#allocation3], %s83
      %s85 = sshll.u32 [#allocation2], 4
      %s86 = int_to_ptr.vmem [resolvable:$true] %s85
      %91 = dma.vmem_to_hbm [thread:$0]  %s86, 256, %s3, [#allocation3], 128, 128, 8
    $region17: #{encoder_forward.17} parent=1 // pred_fallthru
      _
    // Predicated region
    $region18: #{encoder_forward.17} parent=1 // pred_check
      _
    $region19: #{encoder_forward.17} parent=1 // pred_check_branch
      %93 = sbr.rel (0) target = $region21
    $region20: #{encoder_forward.17} parent=1 // pred_region
      %94 = dma.done [#allocation3], 256
    $region21: #{encoder_forward.17} parent=1 // pred_fallthru
      _
    %95 = vsyncpa [#allocation3], 1

// kernel: encoder_forward.13
$region0: #{encoder_forward.13}
  #allocation0 [shape = 'u32[]', space=smem, size = 0x4, offset = 0x4, fixed_abs, tag = 'smem constant byte address 0x4 - core index']
  #allocation1 [shape = 'u32[144,128]{1,0:T(1,128)}', space=vmem, size = 0x12000, scoped, tag = 'internal scratch']
  %s0 = inlined_call_operand.vmem [shape: f32[16,32], index: 0, kind: input, shape index: {}]
  %s1 = inlined_call_operand.vmem [shape: f32[1,32], index: 1, kind: input, shape index: {}]
  %s2 = inlined_call_operand.vmem [shape: f32[1,32], index: 2, kind: input, shape index: {}]
  %s3 = inlined_call_operand.vmem [shape: f32[32,96], index: 3, kind: input, shape index: {}]
  %s4 = inlined_call_operand.vmem [shape: f32[1,96], index: 4, kind: input, shape index: {}]
  %s5 = inlined_call_operand.vmem [shape: f32[16,96], index: 5, kind: output, shape index: {}]
  %s6 = sld [smem:[#allocation0]]
  $region30: #{encoder_forward.13} parent=0
    _
  %s8 = ssub.s32 1, %s6
  %s9 = scalar_select 0, %s8, %s6
  // Predicated region
  $region2: #{encoder_forward.13} parent=0 // pred_check
    _
  $region3: #{encoder_forward.13} parent=0 // pred_check_branch
    %11 = sbr.rel (0) target = $region5
  $region4: #{encoder_forward.13} parent=0 // pred_region
    _
  $region5: #{encoder_forward.13} parent=0 // pred_fallthru
    _
  // Predicated region
  $region6: #{encoder_forward.13} parent=0 // pred_check
    _
  $region7: #{encoder_forward.13} parent=0 // pred_check_branch
    %13 = sbr.rel (0) target = $region9
  $region8: #{encoder_forward.13} parent=0 // pred_region
    _
  $region9: #{encoder_forward.13} parent=0 // pred_fallthru
    _
  // Predicated region
  $region10: #{encoder_forward.13} parent=0 // pred_check
    _
  $region11: #{encoder_forward.13} parent=0 // pred_check_branch
    %15 = sbr.rel (0) target = $region13
  $region12: #{encoder_forward.13} parent=0 // pred_region
    _
  $region13: #{encoder_forward.13} parent=0 // pred_fallthru
    _
  // Predicated region
  $region14: #{encoder_forward.13} parent=0 // pred_check
    _
  $region15: #{encoder_forward.13} parent=0 // pred_check_branch
    %17 = sbr.rel (0) target = $region17
  $region16: #{encoder_forward.13} parent=0 // pred_region
    _
  $region17: #{encoder_forward.13} parent=0 // pred_fallthru
    _
  // Predicated region
  $region18: #{encoder_forward.13} parent=0 // pred_check
    _
  $region19: #{encoder_forward.13} parent=0 // pred_check_branch
    %19 = sbr.rel (0) target = $region21
  $region20: #{encoder_forward.13} parent=0 // pred_region
    _
  $region21: #{encoder_forward.13} parent=0 // pred_fallthru
    _
  %v21 = vld [vmem:[%s0] sm:$0xff]
  %v22 = vld [vmem:[%s0 + $0x8] sm:$0xff]
  %v23 = vld [vmem:[%s1] sm:$0x1]
  %v24 = vld [vmem:[%s2] sm:$0x1]
  %vm25 = vcmask 261120
  %v26 = vsel %vm25, %v21, 0.0
  %27 = vadd.xlane.f32.xlu0 %v26
  %v28 = vpop.xlane.xlu0 %27
  %v29 = vsel %vm25, %v22, 0.0
  %30 = vadd.xlane.f32.xlu0 %v29
  %v31 = vpop.xlane.xlu0 %30
  %v32 = vrcp.pop 32.0
  %v33 = vmul.f32 %v28, %v32
  %v34 = vmul.f32 %v31, %v32
  %v35 = vsub.f32 %v21, %v33
  %v36 = vsub.f32 %v22, %v34
  %v37 = vmul.f32 %v35, %v35
  %v38 = vmul.f32 %v36, %v36
  %v39 = vsel %vm25, %v37, 0.0
  %40 = vadd.xlane.f32.xlu0 %v39
  %v41 = vpop.xlane.xlu0 %40
  %v42 = vsel %vm25, %v38, 0.0
  %43 = vadd.xlane.f32.xlu0 %v42
  %v44 = vpop.xlane.xlu0 %43
  %v45 = vrcp.pop 31.0
  %v46 = vmul.f32 %v41, %v45
  %v47 = vmul.f32 %v44, %v45
  %v49 = vlaneseq
  %v50 = vshrl.u32 %v49, 7
  %v51 = vsub.s32 0, %v50
  %v52 = vrot.slane %v23, %v51
  %v54 = vmul.f32 %v52, %v35
  %v55 = vmul.f32 %v52, %v36
  %v56 = vrsqrt.pop %v46
  %v57 = vmul.f32 %v46, %v56
  %vm58 = vcmp.eq.f32.partialorder %v46, inf
  %v59 = vsel %vm58, %v46, %v57
  %vm60 = vcmp.eq.f32.partialorder %v46, 0.0
  %v61 = vand.u32 %v46, 2147483648
  %v62 = vsel %vm60, %v61, %v59
  %v63 = vrsqrt.pop %v47
  %v64 = vmul.f32 %v47, %v63
  %vm65 = vcmp.eq.f32.partialorder %v47, inf
  %v66 = vsel %vm65, %v47, %v64
  %vm67 = vcmp.eq.f32.partialorder %v47, 0.0
  %v68 = vand.u32 %v47, 2147483648
  %v69 = vsel %vm67, %v68, %v66
  %v70 = vadd.f32 %v62, 1e-06
  %v71 = vadd.f32 %v69, 1e-06
  %v72 = vrcp.pop %v70
  %v73 = vmul.f32 %v54, %v72
  %v74 = vrcp.pop %v71
  %v75 = vmul.f32 %v55, %v74
  %v77 = vlaneseq
  %v78 = vshrl.u32 %v77, 7
  %v79 = vsub.s32 0, %v78
  %v80 = vrot.slane %v24, %v79
  %v82 = vadd.f32 %v73, %v80
  %v83 = vadd.f32 %v75, %v80
  %v84 = vpack.c.bf16 %v83, %v82
  %v85 = vld [vmem:[%s3] sm:$0xff]
  %v86 = vld [vmem:[%s3 + $0x8] sm:$0xff]
  %v87 = vld [vmem:[%s3 + $0x10] sm:$0xff]
  %v88 = vld [vmem:[%s3 + $0x18] sm:$0xff]
  %v89 = vpack.c.bf16 %v86, %v85
  %v90 = vpack.c.bf16 %v88, %v87
  %v91 = vld [vmem:[%s4] sm:$0x1]
  %v93 = vlaneseq
  %v94 = vshrl.u32 %v93, 7
  %v95 = vsub.s32 0, %v94
  %v96 = vrot.slane %v91, %v95
  %v99 = vsel %vm25, %v84, 0
  %101 = vmatprep.subr.bf16.mxu0 0
  %102 = vmatpush1.bf16.msra.mxu0 %v89
  %103 = vmatprep.subr.bf16.mxu0 0
  %104 = vmatpush1.bf16.msra.mxu0 %v90
  %105 = vmatprep.subr.bf16.mxu0 0
  %106 = vmatpush1.bf16.msra.mxu0 0
  %107 = vmatprep.subr.bf16.mxu0 0
  %108 = vmatpush1.bf16.msra.mxu0 0
  %109 = vmatprep.subr.bf16.mxu0 0
  %110 = vmatpush1.bf16.msra.mxu0 0
  %111 = vmatprep.subr.bf16.mxu0 0
  %112 = vmatpush1.bf16.msra.mxu0 0
  %113 = vmatprep.subr.bf16.mxu0 0
  %114 = vmatpush1.bf16.msra.mxu0 0
  %115 = vmatprep.subr.bf16.mxu0 0
  %116 = vmatpush1.bf16.msra.mxu0 0
  %117 = vmatprep.subr.bf16.mxu0 0
  %118 = vmatpush1.bf16.msra.mxu0 0
  %119 = vmatprep.subr.bf16.mxu0 0
  %120 = vmatpush1.bf16.msra.mxu0 0
  %121 = vmatprep.subr.bf16.mxu0 0
  %122 = vmatpush1.bf16.msra.mxu0 0
  %123 = vmatprep.subr.bf16.mxu0 0
  %124 = vmatpush1.bf16.msra.mxu0 0
  %125 = vmatprep.subr.bf16.mxu0 0
  %126 = vmatpush1.bf16.msra.mxu0 0
  %127 = vmatprep.subr.bf16.mxu0 0
  %128 = vmatpush1.bf16.msra.mxu0 0
  %129 = vmatprep.subr.bf16.mxu0 0
  %130 = vmatpush1.bf16.msra.mxu0 0
  %131 = vmatprep.subr.bf16.mxu0 0
  %132 = vmatpush1.bf16.msra.mxu0 0
  %133 = vmatprep.mubr.bf16.mxu0 0
  %134 = vmatmul.mubr.bf16.gmra.mrb[0].mxu0 %v99
  %v135 = vpop.f32.mrb[0].mxu0
  %v136 = vadd.f32 %v96, %v135
  %v137 = vpop.f32.mrb[0].mxu0
  %v138 = vpop.f32.mrb[0].mxu0
  %v139 = vadd.f32 %v96, %v138
  %v140 = vpop.f32.mrb[0].mxu0
  %141 = vdwg.mxu0
  %vm142 = vcmask 785408
  %143 = vst.msk [vmem:[%s5] sm:$0xff] %vm142, %v136
  %144 = vst.msk [vmem:[%s5 + $0x8] sm:$0xff] %vm142, %v139
  // Predicated region
  $region22: #{encoder_forward.13} parent=0 // pred_check
    _
  $region23: #{encoder_forward.13} parent=0 // pred_check_branch
    %146 = sbr.rel (0) target = $region25
  $region24: #{encoder_forward.13} parent=0 // pred_region
    _
  $region25: #{encoder_forward.13} parent=0 // pred_fallthru
    _
  // Predicated region
  $region26: #{encoder_forward.13} parent=0 // pred_check
    _
  $region27: #{encoder_forward.13} parent=0 // pred_check_branch
    %148 = sbr.rel (0) target = $region29
  $region28: #{encoder_forward.13} parent=0 // pred_region
    _
  $region29: #{encoder_forward.13} parent=0 // pred_fallthru
    _

</llo_original>
